<compile_context>
chip_gen: v7x
topology: tpu7x:2x2x1
jax: 0.10.0
libtpu: 0.0.40
codegen_flags: <defaults>
</compile_context>

<pallas_src>
import functools

import jax
import jax.numpy as jnp
from jax.experimental import pallas as pl
from jax.experimental.pallas import tpu as pltpu

VMEM_LIMIT_BYTES = 32 * 1024 * 1024   # explicit scoped-VMEM budget (fits all gens)
MAX_TILE_M = 512                      # pixels per grid step (review recommendation)


def _pick_tile_m(n):
    """Row tile: multiple of 16 (bf16 sublane packing), >=2 grid steps when
    possible (v7x has 2 TensorCores), capped for VMEM."""
    if n <= 32:
        return n                                  # full-extent block is always legal
    half = (n + 1) // 2
    t = ((half + 15) // 16) * 16
    return min(MAX_TILE_M, t, n)


def _compiler_params():
    return pltpu.CompilerParams(
        dimension_semantics=("parallel",),
        vmem_limit_bytes=VMEM_LIMIT_BYTES)


# ------------------------- kernel 1: 1x1 conv (conv0) ----------------------- #
def _conv1x1_kernel(x_ref, w_ref, b_ref, o_ref):
    x = x_ref[...].astype(jnp.bfloat16)
    acc = jnp.dot(x, w_ref[...], preferred_element_type=jnp.float32)
    o_ref[...] = jnp.maximum(acc + b_ref[...], 0.0).astype(o_ref.dtype)


def conv1x1(x2d, w, b, out_dtype=jnp.bfloat16):
    """Fused 1x1-conv (matmul) + bias + ReLU over row tiles of (N, K)."""
    n, k = x2d.shape
    c = w.shape[1]
    tm = _pick_tile_m(n)
    cost = pl.CostEstimate(
        flops=2 * n * k * c, transcendentals=0,
        bytes_accessed=n * k * x2d.dtype.itemsize + k * c * 2 + n * c * 2)
    return pl.pallas_call(
        _conv1x1_kernel,
        out_shape=jax.ShapeDtypeStruct((n, c), out_dtype),
        grid=(pl.cdiv(n, tm),),
        in_specs=[
            pl.BlockSpec((tm, k), lambda i: (i, 0)),
            pl.BlockSpec((k, c), lambda i: (0, 0)),
            pl.BlockSpec((1, c), lambda i: (0, 0)),
        ],
        out_specs=pl.BlockSpec((tm, c), lambda i: (i, 0)),
        compiler_params=_compiler_params(),
        cost_estimate=cost,
    )(x2d, w, b)


# -------------- kernel 2: fused bottleneck (1x1 -> 3x3 -> +res) ------------- #
def _bottleneck_kernel(y_ref, mask_ref, w1_ref, b1_ref, w2_ref, b2_ref,
                       o_ref, hp_ref, *, width, pad_top, shortcut):
    hw = y_ref.shape[1]
    ch = w1_ref.shape[1]
    cm = w2_ref.shape[2]
    total = hp_ref.shape[0]

    y = y_ref[0]                                       # (HW, Cm) bf16
    m = mask_ref[...]                                  # (HW, 2)  f32

    # ---- 1x1 conv + bias + ReLU: hidden activation stays in VMEM ----
    h = jnp.dot(y, w1_ref[...], preferred_element_type=jnp.float32)
    h = jnp.maximum(h + b1_ref[...], 0.0)              # (HW, Ch) f32

    # ---- zero-padded, row-flattened copy of h (pad covers one image row +/-1) ----
    hp_ref[0:pad_top, :] = jnp.zeros((pad_top, ch), jnp.float32)
    hp_ref[pad_top + hw:total, :] = jnp.zeros((total - pad_top - hw, ch),
                                              jnp.float32)
    hp_ref[pad_top:pad_top + hw, :] = h

    # ---- 3x3 conv (stride 1, zero pad 1) as 9 accumulated shifted matmuls ----
    acc = jnp.zeros((hw, cm), jnp.float32) + b2_ref[...]
    tap = 0
    for dy in (-1, 0, 1):
        for dx in (-1, 0, 1):
            start = pad_top + dy * width + dx
            xs = hp_ref[start:start + hw, :].astype(jnp.bfloat16)
            contrib = jnp.dot(xs, w2_ref[tap],
                              preferred_element_type=jnp.float32)
            if dx == -1:                               # kill wrapped left-edge reads
                contrib = contrib * m[:, 0:1]
            elif dx == 1:                              # kill wrapped right-edge reads
                contrib = contrib * m[:, 1:2]
            acc = acc + contrib
            tap += 1

    out = jnp.maximum(acc, 0.0)
    if shortcut:
        out = out + y.astype(jnp.float32)
    o_ref[0] = out.astype(o_ref.dtype)


def bottleneck(y, masks, w1, b1, w2taps, b2, *, width, shortcut):
    bsz, hw, cm = y.shape
    ch = w1.shape[1]
    pad_top = ((width + 1 + 7) // 8) * 8               # aligned top pad (>= W+1)
    total = pad_top + hw + width + 1
    kernel = functools.partial(_bottleneck_kernel, width=width,
                               pad_top=pad_top, shortcut=shortcut)
    cost = pl.CostEstimate(
        flops=2 * bsz * hw * cm * ch * 10, transcendentals=0,
        bytes_accessed=2 * bsz * hw * cm * 2 + hw * 2 * 4
        + (w1.size + w2taps.size) * 2)
    return pl.pallas_call(
        kernel,
        out_shape=jax.ShapeDtypeStruct((bsz, hw, cm), jnp.bfloat16),
        grid=(bsz,),
        in_specs=[
            pl.BlockSpec((1, hw, cm), lambda b: (b, 0, 0)),   # y image
            pl.BlockSpec((hw, 2), lambda b: (0, 0)),          # dx edge masks
            pl.BlockSpec((cm, ch), lambda b: (0, 0)),         # 1x1 weights
            pl.BlockSpec((1, ch), lambda b: (0, 0)),          # 1x1 bias
            pl.BlockSpec((9, ch, cm), lambda b: (0, 0, 0)),   # 3x3 per-tap weights
            pl.BlockSpec((1, cm), lambda b: (0, 0)),          # 3x3 bias
        ],
        out_specs=pl.BlockSpec((1, hw, cm), lambda b: (b, 0, 0)),
        scratch_shapes=[pltpu.VMEM((total, ch), jnp.float32)],
        compiler_params=_compiler_params(),
        cost_estimate=cost,
    )(y, masks, w1, b1, w2taps, b2)


# ------------- kernel 3: fused conv_1 + channel-concat + cat-conv ----------- #
def _tail_kernel(y_ref, x0_ref, w1_ref, b1_ref, wca_ref, wcb_ref, bc_ref, o_ref):
    # y2 = relu(x0 @ w1 + b1)   (conv_1 — never written to HBM)
    y2 = jnp.dot(x0_ref[...], w1_ref[...], preferred_element_type=jnp.float32)
    y2 = jnp.maximum(y2 + b1_ref[...], 0.0)
    # out = relu([y | y2] @ Wcat + bc) via split-weight matmuls (no concat in HBM)
    acc = jnp.dot(y_ref[...], wca_ref[...], preferred_element_type=jnp.float32)
    acc = acc + jnp.dot(y2.astype(jnp.bfloat16), wcb_ref[...],
                        preferred_element_type=jnp.float32)
    o_ref[...] = jnp.maximum(acc + bc_ref[...], 0.0).astype(o_ref.dtype)


def tail_concat_conv(y2d, x02d, w1, b1, wca, wcb, bc, out_dtype=jnp.float32):
    n, cm = y2d.shape
    tm = _pick_tile_m(n)
    cost = pl.CostEstimate(
        flops=2 * n * cm * cm * 3, transcendentals=0,
        bytes_accessed=2 * n * cm * 2 + n * cm * 4 + 3 * cm * cm * 2)
    return pl.pallas_call(
        _tail_kernel,
        out_shape=jax.ShapeDtypeStruct((n, cm), out_dtype),
        grid=(pl.cdiv(n, tm),),
        in_specs=[
            pl.BlockSpec((tm, cm), lambda i: (i, 0)),   # y  (bottleneck chain out)
            pl.BlockSpec((tm, cm), lambda i: (i, 0)),   # x0
            pl.BlockSpec((cm, cm), lambda i: (0, 0)),   # conv_1 weights
            pl.BlockSpec((1, cm), lambda i: (0, 0)),    # conv_1 bias
            pl.BlockSpec((cm, cm), lambda i: (0, 0)),   # cat weights (rows for y)
            pl.BlockSpec((cm, cm), lambda i: (0, 0)),   # cat weights (rows for y2)
            pl.BlockSpec((1, cm), lambda i: (0, 0)),    # cat bias
        ],
        out_specs=pl.BlockSpec((tm, cm), lambda i: (i, 0)),
        compiler_params=_compiler_params(),
        cost_estimate=cost,
    )(y2d, x02d, w1, b1, wca, wcb, bc)


# ------------------------------- parameters --------------------------------- #
def init_bottleneck_cspb_params(key, in_channels, out_channels, num=1,
                                expansion=0.5):
    """Deterministic synthetic parameters with PyTorch-style (O,I,kH,kW) shapes."""
    keys = iter(jax.random.split(key, 8 + 4 * num))

    def conv_p(cin, cout, k):
        w = 0.1 * jax.random.normal(next(keys), (cout, cin, k, k), jnp.float32)
        b = 0.1 * jax.random.normal(next(keys), (cout,), jnp.float32)
        return w, b

    hidden = max(1, int(out_channels * expansion))   # Darknet bottleneck hidden width
    return {
        "conv0": conv_p(in_channels, out_channels, 1),
        "bottlenecks": [
            (conv_p(out_channels, hidden, 1), conv_p(hidden, out_channels, 3))
            for _ in range(num)
        ],
        "conv1": conv_p(out_channels, out_channels, 1),
        "cat": conv_p(2 * out_channels, out_channels, 1),
    }


# --------------------------------- forward ---------------------------------- #
def _edge_masks(h, w):
    # column masks killing wrapped neighbours: col 0 -> dx=-1, col 1 -> dx=+1
    xcol = jnp.arange(h * w, dtype=jnp.int32) % w
    left = (xcol != 0).astype(jnp.float32)
    right = (xcol != w - 1).astype(jnp.float32)
    return jnp.stack([left, right], axis=1)          # (H*W, 2)


@functools.partial(jax.jit, static_argnames=("shortcut",))
def bottleneck_cspb_forward(x_nchw, params, shortcut=False):
    b, cin, h, w = x_nchw.shape
    hw = h * w
    n = b * hw

    # layout: external NCHW (PyTorch); internal NHWC flattened to (pixels, C)
    # TODO(synk): fold the boundary NCHW<->NHWC transposes into the first/last
    # kernels' index_maps instead of two XLA transpose passes.
    x = jnp.transpose(x_nchw, (0, 2, 3, 1)).reshape(n, cin)

    w0, b0 = params["conv0"]
    cm = w0.shape[0]
    x0 = conv1x1(x, w0.reshape(cm, cin).T.astype(jnp.bfloat16),
                 b0.reshape(1, cm))                               # (N, Cm) bf16

    masks = _edge_masks(h, w)
    y = x0.reshape(b, hw, cm)
    for (w1, b1), (w2, b2) in params["bottlenecks"]:              # _bottlenecks
        ch = w1.shape[0]
        w1m = w1.reshape(ch, cm).T.astype(jnp.bfloat16)           # (Cm, Ch)
        w2t = jnp.transpose(w2, (2, 3, 1, 0)).reshape(9, ch, cm)  # (9, Ch, Cm)
        y = bottleneck(y, masks, w1m, b1.reshape(1, ch),
                       w2t.astype(jnp.bfloat16), b2.reshape(1, cm),
                       width=w, shortcut=shortcut)

    wc1, bc1 = params["conv1"]
    wc, bc = params["cat"]
    wcm = wc.reshape(cm, 2 * cm).T.astype(jnp.bfloat16)           # (2Cm, Cm)
    out = tail_concat_conv(
        y.reshape(n, cm), x0,
        wc1.reshape(cm, cm).T.astype(jnp.bfloat16), bc1.reshape(1, cm),
        wcm[:cm], wcm[cm:], bc.reshape(1, cm))                    # (N, Cm) f32

    return jnp.transpose(out.reshape(b, h, w, cm), (0, 3, 1, 2))  # back to NCHW


# --------------------------- pure-JAX reference ------------------------------ #
def _ref_conv_block(x, w, b, pad):
    y = jax.lax.conv_general_dilated(
        x, w, window_strides=(1, 1), padding=pad,
        dimension_numbers=("NCHW", "OIHW", "NCHW"))
    return jnp.maximum(y + b.reshape(1, -1, 1, 1), 0.0)


def reference_forward(x, params, shortcut=False):
    x0 = _ref_conv_block(x, *params["conv0"], pad=[(0, 0), (0, 0)])
    y = x0
    for (w1, b1), (w2, b2) in params["bottlenecks"]:
        hh = _ref_conv_block(y, w1, b1, pad=[(0, 0), (0, 0)])
        hh = _ref_conv_block(hh, w2, b2, pad=[(1, 1), (1, 1)])
        y = y + hh if shortcut else hh
    y2 = _ref_conv_block(x0, *params["conv1"], pad=[(0, 0), (0, 0)])
    cat = jnp.concatenate([y, y2], axis=1)
    return _ref_conv_block(cat, *params["cat"], pad=[(0, 0), (0, 0)])


# ----------------------------------- main ------------------------------------ #
if __name__ == "__main__":
    key = jax.random.PRNGKey(0)
    k_x, k_p = jax.random.split(key)

    B, Cin, H, W = 2, 4, 16, 16
    Cout, num = 4, 1

    x = jax.random.normal(k_x, (B, Cin, H, W), jnp.float32)
    params = init_bottleneck_cspb_params(k_p, Cin, Cout, num=num)

    out = bottleneck_cspb_forward(x, params, shortcut=False)
    out = jax.block_until_ready(out)

    assert out.shape == (B, Cout, H, W), out.shape
    assert bool(jnp.all(jnp.isfinite(out)))

    # cross-check against a pure-JAX f32 reference (bf16 MXU path -> loose tol)
    ref = reference_forward(x, params, shortcut=False)
    assert jnp.allclose(out, ref, rtol=5e-2, atol=5e-2), (
        float(jnp.max(jnp.abs(out - ref))))

    print("KERNEL_OK")
</pallas_src>

<mosaic_0001>
module attributes {stable_mosaic.version = 11 : i64} {
  func.func @_conv1x1_kernel(%arg0: i32, %arg1: memref<256x4xf32, #tpu.memory_space<vmem>>, %arg2: memref<4x4xbf16, #tpu.memory_space<vmem>>, %arg3: memref<1x4xf32, #tpu.memory_space<vmem>>, %arg4: memref<256x4xbf16, #tpu.memory_space<vmem>>) attributes {dimension_semantics = [#tpu.dimension_semantics<parallel>], iteration_bounds = array<i64: 2>, scalar_prefetch = 0 : i64, scratch_operands = 0 : i64, tpu.core_type = #tpu.core_type<tc>, window_params = [{transform_indices = @transform_0, window_bounds = array<i64: 256, 4>}, {pipeline_mode = #tpu.pipeline_mode<synchronous>, transform_indices = @transform_1, window_bounds = array<i64: 4, 4>}, {pipeline_mode = #tpu.pipeline_mode<synchronous>, transform_indices = @transform_2, window_bounds = array<i64: 1, 4>}, {transform_indices = @transform_3, window_bounds = array<i64: 256, 4>}]} {
    %c0 = arith.constant 0 : index
    %c0_0 = arith.constant 0 : index
    %0 = vector.load %arg1[%c0, %c0_0] : memref<256x4xf32, #tpu.memory_space<vmem>>, vector<256x4xf32>
    %1 = arith.truncf %0 : vector<256x4xf32> to vector<256x4xbf16>
    %c0_1 = arith.constant 0 : index
    %c0_2 = arith.constant 0 : index
    %2 = vector.load %arg2[%c0_1, %c0_2] : memref<4x4xbf16, #tpu.memory_space<vmem>>, vector<4x4xbf16>
    %cst = arith.constant dense<0.000000e+00> : vector<256x4xf32>
    %3 = tpu.matmul %1, %2, %cst {dimension_numbers = #tpu.dot_dimension_numbers<[1], [0], [0], [1], [0, 0, 1, 1], [], []>} : vector<256x4xbf16>, vector<4x4xbf16>, vector<256x4xf32> -> vector<256x4xf32>
    %c0_3 = arith.constant 0 : index
    %c0_4 = arith.constant 0 : index
    %4 = vector.load %arg3[%c0_3, %c0_4] : memref<1x4xf32, #tpu.memory_space<vmem>>, vector<1x4xf32>
    %5 = vector.broadcast %4 : vector<1x4xf32> to vector<256x4xf32>
    %6 = arith.addf %3, %5 : vector<256x4xf32>
    %cst_5 = arith.constant 0.000000e+00 : f32
    %7 = vector.broadcast %cst_5 : f32 to vector<256x4xf32>
    %8 = arith.maximumf %6, %7 : vector<256x4xf32>
    %9 = arith.truncf %8 : vector<256x4xf32> to vector<256x4xbf16>
    %c0_6 = arith.constant 0 : index
    %c0_7 = arith.constant 0 : index
    %10 = vector.load %arg4[%c0_6, %c0_7] : memref<256x4xbf16, #tpu.memory_space<vmem>>, vector<256x4xbf16>
    tpu.vector_store %arg4[%c0_6, %c0_7], %9 {strides = array<i32>} : memref<256x4xbf16, #tpu.memory_space<vmem>>, vector<256x4xbf16>,
    return
  }
  func.func @transform_0(%arg0: i32) -> (i32, i32) {
    %c0_i32 = arith.constant 0 : i32
    %c0_i32_0 = arith.constant 0 : i32
    return %arg0, %c0_i32 : i32, i32
  }
  func.func @transform_1(%arg0: i32) -> (i32, i32) {
    %c0_i32 = arith.constant 0 : i32
    %c0_i32_0 = arith.constant 0 : i32
    %c0_i32_1 = arith.constant 0 : i32
    return %c0_i32, %c0_i32_0 : i32, i32
  }
  func.func @transform_2(%arg0: i32) -> (i32, i32) {
    %c0_i32 = arith.constant 0 : i32
    %c0_i32_0 = arith.constant 0 : i32
    %c0_i32_1 = arith.constant 0 : i32
    return %c0_i32, %c0_i32_0 : i32, i32
  }
  func.func @transform_3(%arg0: i32) -> (i32, i32) {
    %c0_i32 = arith.constant 0 : i32
    %c0_i32_0 = arith.constant 0 : i32
    return %arg0, %c0_i32 : i32, i32
  }
}

module attributes {stable_mosaic.version = 11 : i64} {
  func.func @_bottleneck_kernel(%arg0: i32, %arg1: memref<1x256x4xbf16, #tpu.memory_space<vmem>>, %arg2: memref<256x2xf32, #tpu.memory_space<vmem>>, %arg3: memref<4x2xbf16, #tpu.memory_space<vmem>>, %arg4: memref<1x2xf32, #tpu.memory_space<vmem>>, %arg5: memref<9x2x4xbf16, #tpu.memory_space<vmem>>, %arg6: memref<1x4xf32, #tpu.memory_space<vmem>>, %arg7: memref<1x256x4xbf16, #tpu.memory_space<vmem>>, %arg8: memref<297x2xf32, #tpu.memory_space<vmem>>) attributes {dimension_semantics = [#tpu.dimension_semantics<parallel>], iteration_bounds = array<i64: 2>, scalar_prefetch = 0 : i64, scratch_operands = 1 : i64, tpu.core_type = #tpu.core_type<tc>, window_params = [{transform_indices = @transform_0, window_bounds = array<i64: 1, 256, 4>}, {pipeline_mode = #tpu.pipeline_mode<synchronous>, transform_indices = @transform_1, window_bounds = array<i64: 256, 2>}, {pipeline_mode = #tpu.pipeline_mode<synchronous>, transform_indices = @transform_2, window_bounds = array<i64: 4, 2>}, {pipeline_mode = #tpu.pipeline_mode<synchronous>, transform_indices = @transform_3, window_bounds = array<i64: 1, 2>}, {pipeline_mode = #tpu.pipeline_mode<synchronous>, transform_indices = @transform_4, window_bounds = array<i64: 9, 2, 4>}, {pipeline_mode = #tpu.pipeline_mode<synchronous>, transform_indices = @transform_5, window_bounds = array<i64: 1, 4>}, {transform_indices = @transform_6, window_bounds = array<i64: 1, 256, 4>}]} {
    %c0 = arith.constant 0 : index
    %c0_0 = arith.constant 0 : index
    %c0_1 = arith.constant 0 : index
    %0 = vector.load %arg1[%c0, %c0_0, %c0_1] : memref<1x256x4xbf16, #tpu.memory_space<vmem>>, vector<1x256x4xbf16>
    %1 = vector.shape_cast %0 : vector<1x256x4xbf16> to vector<256x4xbf16>
    %c0_2 = arith.constant 0 : index
    %c0_3 = arith.constant 0 : index
    %2 = vector.load %arg2[%c0_2, %c0_3] : memref<256x2xf32, #tpu.memory_space<vmem>>, vector<256x2xf32>
    %c0_4 = arith.constant 0 : index
    %c0_5 = arith.constant 0 : index
    %3 = vector.load %arg3[%c0_4, %c0_5] : memref<4x2xbf16, #tpu.memory_space<vmem>>, vector<4x2xbf16>
    %cst = arith.constant dense<0.000000e+00> : vector<256x2xf32>
    %4 = tpu.matmul %1, %3, %cst {dimension_numbers = #tpu.dot_dimension_numbers<[1], [0], [0], [1], [0, 0, 1, 1], [], []>} : vector<256x4xbf16>, vector<4x2xbf16>, vector<256x2xf32> -> vector<256x2xf32>
    %c0_6 = arith.constant 0 : index
    %c0_7 = arith.constant 0 : index
    %5 = vector.load %arg4[%c0_6, %c0_7] : memref<1x2xf32, #tpu.memory_space<vmem>>, vector<1x2xf32>
    %6 = vector.broadcast %5 : vector<1x2xf32> to vector<256x2xf32>
    %7 = arith.addf %4, %6 : vector<256x2xf32>
    %cst_8 = arith.constant 0.000000e+00 : f32
    %8 = vector.broadcast %cst_8 : f32 to vector<256x2xf32>
    %9 = arith.maximumf %7, %8 : vector<256x2xf32>
    %cst_9 = arith.constant 0.000000e+00 : f32
    %10 = vector.broadcast %cst_9 : f32 to vector<24x2xf32>
    %c0_10 = arith.constant 0 : index
    %c0_11 = arith.constant 0 : index
    %11 = vector.load %arg8[%c0_10, %c0_11] : memref<297x2xf32, #tpu.memory_space<vmem>>, vector<24x2xf32>
    tpu.vector_store %arg8[%c0_10, %c0_11], %10 {strides = array<i32>} : memref<297x2xf32, #tpu.memory_space<vmem>>, vector<24x2xf32>,
    %cst_12 = arith.constant 0.000000e+00 : f32
    %12 = vector.broadcast %cst_12 : f32 to vector<17x2xf32>
    %c280 = arith.constant 280 : index
    %c0_13 = arith.constant 0 : index
    %13 = vector.load %arg8[%c280, %c0_13] : memref<297x2xf32, #tpu.memory_space<vmem>>, vector<17x2xf32>
    tpu.vector_store %arg8[%c280, %c0_13], %12 {strides = array<i32>} : memref<297x2xf32, #tpu.memory_space<vmem>>, vector<17x2xf32>,
    %c24 = arith.constant 24 : index
    %c0_14 = arith.constant 0 : index
    %14 = vector.load %arg8[%c24, %c0_14] : memref<297x2xf32, #tpu.memory_space<vmem>>, vector<256x2xf32>
    tpu.vector_store %arg8[%c24, %c0_14], %9 {strides = array<i32>} : memref<297x2xf32, #tpu.memory_space<vmem>>, vector<256x2xf32>,
    %cst_15 = arith.constant 0.000000e+00 : f32
    %15 = vector.broadcast %cst_15 : f32 to vector<256x4xf32>
    %c0_16 = arith.constant 0 : index
    %c0_17 = arith.constant 0 : index
    %16 = vector.load %arg6[%c0_16, %c0_17] : memref<1x4xf32, #tpu.memory_space<vmem>>, vector<1x4xf32>
    %17 = vector.broadcast %16 : vector<1x4xf32> to vector<256x4xf32>
    %18 = arith.addf %15, %17 : vector<256x4xf32>
    %c7 = arith.constant 7 : index
    %c0_18 = arith.constant 0 : index
    %19 = vector.load %arg8[%c7, %c0_18] : memref<297x2xf32, #tpu.memory_space<vmem>>, vector<256x2xf32>
    %20 = arith.truncf %19 : vector<256x2xf32> to vector<256x2xbf16>
    %c0_19 = arith.constant 0 : index
    %c0_20 = arith.constant 0 : index
    %c0_21 = arith.constant 0 : index
    %21 = vector.load %arg5[%c0_19, %c0_20, %c0_21] : memref<9x2x4xbf16, #tpu.memory_space<vmem>>, vector<1x2x4xbf16>
    %22 = vector.shape_cast %21 : vector<1x2x4xbf16> to vector<2x4xbf16>
    %cst_22 = arith.constant dense<0.000000e+00> : vector<256x4xf32>
    %23 = tpu.matmul %20, %22, %cst_22 {dimension_numbers = #tpu.dot_dimension_numbers<[1], [0], [0], [1], [0, 0, 1, 1], [], []>} : vector<256x2xbf16>, vector<2x4xbf16>, vector<256x4xf32> -> vector<256x4xf32>
    %24 = vector.extract_strided_slice %2 {offsets = [0, 0], sizes = [256, 1], strides = [1, 1]} : vector<256x2xf32> to vector<256x1xf32>
    %25 = vector.broadcast %24 : vector<256x1xf32> to vector<256x4xf32>
    %26 = arith.mulf %23, %25 : vector<256x4xf32>
    %27 = arith.addf %18, %26 : vector<256x4xf32>
    %c8 = arith.constant 8 : index
    %c0_23 = arith.constant 0 : index
    %28 = vector.load %arg8[%c8, %c0_23] : memref<297x2xf32, #tpu.memory_space<vmem>>, vector<256x2xf32>
    %29 = arith.truncf %28 : vector<256x2xf32> to vector<256x2xbf16>
    %c1 = arith.constant 1 : index
    %c0_24 = arith.constant 0 : index
    %c0_25 = arith.constant 0 : index
    %30 = vector.load %arg5[%c1, %c0_24, %c0_25] : memref<9x2x4xbf16, #tpu.memory_space<vmem>>, vector<1x2x4xbf16>
    %31 = vector.shape_cast %30 : vector<1x2x4xbf16> to vector<2x4xbf16>
    %cst_26 = arith.constant dense<0.000000e+00> : vector<256x4xf32>
    %32 = tpu.matmul %29, %31, %cst_26 {dimension_numbers = #tpu.dot_dimension_numbers<[1], [0], [0], [1], [0, 0, 1, 1], [], []>} : vector<256x2xbf16>, vector<2x4xbf16>, vector<256x4xf32> -> vector<256x4xf32>
    %33 = arith.addf %27, %32 : vector<256x4xf32>
    %c9 = arith.constant 9 : index
    %c0_27 = arith.constant 0 : index
    %34 = vector.load %arg8[%c9, %c0_27] : memref<297x2xf32, #tpu.memory_space<vmem>>, vector<256x2xf32>
    %35 = arith.truncf %34 : vector<256x2xf32> to vector<256x2xbf16>
    %c2 = arith.constant 2 : index
    %c0_28 = arith.constant 0 : index
    %c0_29 = arith.constant 0 : index
    %36 = vector.load %arg5[%c2, %c0_28, %c0_29] : memref<9x2x4xbf16, #tpu.memory_space<vmem>>, vector<1x2x4xbf16>
    %37 = vector.shape_cast %36 : vector<1x2x4xbf16> to vector<2x4xbf16>
    %cst_30 = arith.constant dense<0.000000e+00> : vector<256x4xf32>
    %38 = tpu.matmul %35, %37, %cst_30 {dimension_numbers = #tpu.dot_dimension_numbers<[1], [0], [0], [1], [0, 0, 1, 1], [], []>} : vector<256x2xbf16>, vector<2x4xbf16>, vector<256x4xf32> -> vector<256x4xf32>
    %39 = vector.extract_strided_slice %2 {offsets = [0, 1], sizes = [256, 1], strides = [1, 1]} : vector<256x2xf32> to vector<256x1xf32>
    %40 = vector.broadcast %39 : vector<256x1xf32> to vector<256x4xf32>
    %41 = arith.mulf %38, %40 : vector<256x4xf32>
    %42 = arith.addf %33, %41 : vector<256x4xf32>
    %c23 = arith.constant 23 : index
    %c0_31 = arith.constant 0 : index
    %43 = vector.load %arg8[%c23, %c0_31] : memref<297x2xf32, #tpu.memory_space<vmem>>, vector<256x2xf32>
    %44 = arith.truncf %43 : vector<256x2xf32> to vector<256x2xbf16>
    %c3 = arith.constant 3 : index
    %c0_32 = arith.constant 0 : index
    %c0_33 = arith.constant 0 : index
    %45 = vector.load %arg5[%c3, %c0_32, %c0_33] : memref<9x2x4xbf16, #tpu.memory_space<vmem>>, vector<1x2x4xbf16>
    %46 = vector.shape_cast %45 : vector<1x2x4xbf16> to vector<2x4xbf16>
    %cst_34 = arith.constant dense<0.000000e+00> : vector<256x4xf32>
    %47 = tpu.matmul %44, %46, %cst_34 {dimension_numbers = #tpu.dot_dimension_numbers<[1], [0], [0], [1], [0, 0, 1, 1], [], []>} : vector<256x2xbf16>, vector<2x4xbf16>, vector<256x4xf32> -> vector<256x4xf32>
    %48 = vector.extract_strided_slice %2 {offsets = [0, 0], sizes = [256, 1], strides = [1, 1]} : vector<256x2xf32> to vector<256x1xf32>
    %49 = vector.broadcast %48 : vector<256x1xf32> to vector<256x4xf32>
    %50 = arith.mulf %47, %49 : vector<256x4xf32>
    %51 = arith.addf %42, %50 : vector<256x4xf32>
    %c24_35 = arith.constant 24 : index
    %c0_36 = arith.constant 0 : index
    %52 = vector.load %arg8[%c24_35, %c0_36] : memref<297x2xf32, #tpu.memory_space<vmem>>, vector<256x2xf32>
    %53 = arith.truncf %52 : vector<256x2xf32> to vector<256x2xbf16>
    %c4 = arith.constant 4 : index
    %c0_37 = arith.constant 0 : index
    %c0_38 = arith.constant 0 : index
    %54 = vector.load %arg5[%c4, %c0_37, %c0_38] : memref<9x2x4xbf16, #tpu.memory_space<vmem>>, vector<1x2x4xbf16>
    %55 = vector.shape_cast %54 : vector<1x2x4xbf16> to vector<2x4xbf16>
    %cst_39 = arith.constant dense<0.000000e+00> : vector<256x4xf32>
    %56 = tpu.matmul %53, %55, %cst_39 {dimension_numbers = #tpu.dot_dimension_numbers<[1], [0], [0], [1], [0, 0, 1, 1], [], []>} : vector<256x2xbf16>, vector<2x4xbf16>, vector<256x4xf32> -> vector<256x4xf32>
    %57 = arith.addf %51, %56 : vector<256x4xf32>
    %c25 = arith.constant 25 : index
    %c0_40 = arith.constant 0 : index
    %58 = vector.load %arg8[%c25, %c0_40] : memref<297x2xf32, #tpu.memory_space<vmem>>, vector<256x2xf32>
    %59 = arith.truncf %58 : vector<256x2xf32> to vector<256x2xbf16>
    %c5 = arith.constant 5 : index
    %c0_41 = arith.constant 0 : index
    %c0_42 = arith.constant 0 : index
    %60 = vector.load %arg5[%c5, %c0_41, %c0_42] : memref<9x2x4xbf16, #tpu.memory_space<vmem>>, vector<1x2x4xbf16>
    %61 = vector.shape_cast %60 : vector<1x2x4xbf16> to vector<2x4xbf16>
    %cst_43 = arith.constant dense<0.000000e+00> : vector<256x4xf32>
    %62 = tpu.matmul %59, %61, %cst_43 {dimension_numbers = #tpu.dot_dimension_numbers<[1], [0], [0], [1], [0, 0, 1, 1], [], []>} : vector<256x2xbf16>, vector<2x4xbf16>, vector<256x4xf32> -> vector<256x4xf32>
    %63 = vector.extract_strided_slice %2 {offsets = [0, 1], sizes = [256, 1], strides = [1, 1]} : vector<256x2xf32> to vector<256x1xf32>
    %64 = vector.broadcast %63 : vector<256x1xf32> to vector<256x4xf32>
    %65 = arith.mulf %62, %64 : vector<256x4xf32>
    %66 = arith.addf %57, %65 : vector<256x4xf32>
    %c39 = arith.constant 39 : index
    %c0_44 = arith.constant 0 : index
    %67 = vector.load %arg8[%c39, %c0_44] : memref<297x2xf32, #tpu.memory_space<vmem>>, vector<256x2xf32>
    %68 = arith.truncf %67 : vector<256x2xf32> to vector<256x2xbf16>
    %c6 = arith.constant 6 : index
    %c0_45 = arith.constant 0 : index
    %c0_46 = arith.constant 0 : index
    %69 = vector.load %arg5[%c6, %c0_45, %c0_46] : memref<9x2x4xbf16, #tpu.memory_space<vmem>>, vector<1x2x4xbf16>
    %70 = vector.shape_cast %69 : vector<1x2x4xbf16> to vector<2x4xbf16>
    %cst_47 = arith.constant dense<0.000000e+00> : vector<256x4xf32>
    %71 = tpu.matmul %68, %70, %cst_47 {dimension_numbers = #tpu.dot_dimension_numbers<[1], [0], [0], [1], [0, 0, 1, 1], [], []>} : vector<256x2xbf16>, vector<2x4xbf16>, vector<256x4xf32> -> vector<256x4xf32>
    %72 = vector.extract_strided_slice %2 {offsets = [0, 0], sizes = [256, 1], strides = [1, 1]} : vector<256x2xf32> to vector<256x1xf32>
    %73 = vector.broadcast %72 : vector<256x1xf32> to vector<256x4xf32>
    %74 = arith.mulf %71, %73 : vector<256x4xf32>
    %75 = arith.addf %66, %74 : vector<256x4xf32>
    %c40 = arith.constant 40 : index
    %c0_48 = arith.constant 0 : index
    %76 = vector.load %arg8[%c40, %c0_48] : memref<297x2xf32, #tpu.memory_space<vmem>>, vector<256x2xf32>
    %77 = arith.truncf %76 : vector<256x2xf32> to vector<256x2xbf16>
    %c7_49 = arith.constant 7 : index
    %c0_50 = arith.constant 0 : index
    %c0_51 = arith.constant 0 : index
    %78 = vector.load %arg5[%c7_49, %c0_50, %c0_51] : memref<9x2x4xbf16, #tpu.memory_space<vmem>>, vector<1x2x4xbf16>
    %79 = vector.shape_cast %78 : vector<1x2x4xbf16> to vector<2x4xbf16>
    %cst_52 = arith.constant dense<0.000000e+00> : vector<256x4xf32>
    %80 = tpu.matmul %77, %79, %cst_52 {dimension_numbers = #tpu.dot_dimension_numbers<[1], [0], [0], [1], [0, 0, 1, 1], [], []>} : vector<256x2xbf16>, vector<2x4xbf16>, vector<256x4xf32> -> vector<256x4xf32>
    %81 = arith.addf %75, %80 : vector<256x4xf32>
    %c41 = arith.constant 41 : index
    %c0_53 = arith.constant 0 : index
    %82 = vector.load %arg8[%c41, %c0_53] : memref<297x2xf32, #tpu.memory_space<vmem>>, vector<256x2xf32>
    %83 = arith.truncf %82 : vector<256x2xf32> to vector<256x2xbf16>
    %c8_54 = arith.constant 8 : index
    %c0_55 = arith.constant 0 : index
    %c0_56 = arith.constant 0 : index
    %84 = vector.load %arg5[%c8_54, %c0_55, %c0_56] : memref<9x2x4xbf16, #tpu.memory_space<vmem>>, vector<1x2x4xbf16>
    %85 = vector.shape_cast %84 : vector<1x2x4xbf16> to vector<2x4xbf16>
    %cst_57 = arith.constant dense<0.000000e+00> : vector<256x4xf32>
    %86 = tpu.matmul %83, %85, %cst_57 {dimension_numbers = #tpu.dot_dimension_numbers<[1], [0], [0], [1], [0, 0, 1, 1], [], []>} : vector<256x2xbf16>, vector<2x4xbf16>, vector<256x4xf32> -> vector<256x4xf32>
    %87 = vector.extract_strided_slice %2 {offsets = [0, 1], sizes = [256, 1], strides = [1, 1]} : vector<256x2xf32> to vector<256x1xf32>
    %88 = vector.broadcast %87 : vector<256x1xf32> to vector<256x4xf32>
    %89 = arith.mulf %86, %88 : vector<256x4xf32>
    %90 = arith.addf %81, %89 : vector<256x4xf32>
    %cst_58 = arith.constant 0.000000e+00 : f32
    %91 = vector.broadcast %cst_58 : f32 to vector<256x4xf32>
    %92 = arith.maximumf %90, %91 : vector<256x4xf32>
    %93 = arith.truncf %92 : vector<256x4xf32> to vector<256x4xbf16>
    %c0_59 = arith.constant 0 : index
    %c0_60 = arith.constant 0 : index
    %c0_61 = arith.constant 0 : index
    %94 = vector.load %arg7[%c0_59, %c0_60, %c0_61] : memref<1x256x4xbf16, #tpu.memory_space<vmem>>, vector<1x256x4xbf16>
    %95 = vector.shape_cast %94 : vector<1x256x4xbf16> to vector<256x4xbf16>
    %96 = vector.shape_cast %93 : vector<256x4xbf16> to vector<1x256x4xbf16>
    tpu.vector_store %arg7[%c0_59, %c0_60, %c0_61], %96 {strides = array<i32>} : memref<1x256x4xbf16, #tpu.memory_space<vmem>>, vector<1x256x4xbf16>,
    return
  }
  func.func @transform_0(%arg0: i32) -> (i32, i32, i32) {
    %c0_i32 = arith.constant 0 : i32
    %c0_i32_0 = arith.constant 0 : i32
    %c0_i32_1 = arith.constant 0 : i32
    return %arg0, %c0_i32, %c0_i32_0 : i32, i32, i32
  }
  func.func @transform_1(%arg0: i32) -> (i32, i32) {
    %c0_i32 = arith.constant 0 : i32
    %c0_i32_0 = arith.constant 0 : i32
    %c0_i32_1 = arith.constant 0 : i32
    return %c0_i32, %c0_i32_0 : i32, i32
  }
  func.func @transform_2(%arg0: i32) -> (i32, i32) {
    %c0_i32 = arith.constant 0 : i32
    %c0_i32_0 = arith.constant 0 : i32
    %c0_i32_1 = arith.constant 0 : i32
    return %c0_i32, %c0_i32_0 : i32, i32
  }
  func.func @transform_3(%arg0: i32) -> (i32, i32) {
    %c0_i32 = arith.constant 0 : i32
    %c0_i32_0 = arith.constant 0 : i32
    %c0_i32_1 = arith.constant 0 : i32
    return %c0_i32, %c0_i32_0 : i32, i32
  }
  func.func @transform_4(%arg0: i32) -> (i32, i32, i32) {
    %c0_i32 = arith.constant 0 : i32
    %c0_i32_0 = arith.constant 0 : i32
    %c0_i32_1 = arith.constant 0 : i32
    %c0_i32_2 = arith.constant 0 : i32
    return %c0_i32, %c0_i32_0, %c0_i32_1 : i32, i32, i32
  }
  func.func @transform_5(%arg0: i32) -> (i32, i32) {
    %c0_i32 = arith.constant 0 : i32
    %c0_i32_0 = arith.constant 0 : i32
    %c0_i32_1 = arith.constant 0 : i32
    return %c0_i32, %c0_i32_0 : i32, i32
  }
  func.func @transform_6(%arg0: i32) -> (i32, i32, i32) {
    %c0_i32 = arith.constant 0 : i32
    %c0_i32_0 = arith.constant 0 : i32
    %c0_i32_1 = arith.constant 0 : i32
    return %arg0, %c0_i32, %c0_i32_0 : i32, i32, i32
  }
}

module attributes {stable_mosaic.version = 11 : i64} {
  func.func @_tail_kernel(%arg0: i32, %arg1: memref<256x4xbf16, #tpu.memory_space<vmem>>, %arg2: memref<256x4xbf16, #tpu.memory_space<vmem>>, %arg3: memref<4x4xbf16, #tpu.memory_space<vmem>>, %arg4: memref<1x4xf32, #tpu.memory_space<vmem>>, %arg5: memref<4x4xbf16, #tpu.memory_space<vmem>>, %arg6: memref<4x4xbf16, #tpu.memory_space<vmem>>, %arg7: memref<1x4xf32, #tpu.memory_space<vmem>>, %arg8: memref<256x4xf32, #tpu.memory_space<vmem>>) attributes {dimension_semantics = [#tpu.dimension_semantics<parallel>], iteration_bounds = array<i64: 2>, scalar_prefetch = 0 : i64, scratch_operands = 0 : i64, tpu.core_type = #tpu.core_type<tc>, window_params = [{transform_indices = @transform_0, window_bounds = array<i64: 256, 4>}, {transform_indices = @transform_1, window_bounds = array<i64: 256, 4>}, {pipeline_mode = #tpu.pipeline_mode<synchronous>, transform_indices = @transform_2, window_bounds = array<i64: 4, 4>}, {pipeline_mode = #tpu.pipeline_mode<synchronous>, transform_indices = @transform_3, window_bounds = array<i64: 1, 4>}, {pipeline_mode = #tpu.pipeline_mode<synchronous>, transform_indices = @transform_4, window_bounds = array<i64: 4, 4>}, {pipeline_mode = #tpu.pipeline_mode<synchronous>, transform_indices = @transform_5, window_bounds = array<i64: 4, 4>}, {pipeline_mode = #tpu.pipeline_mode<synchronous>, transform_indices = @transform_6, window_bounds = array<i64: 1, 4>}, {transform_indices = @transform_7, window_bounds = array<i64: 256, 4>}]} {
    %c0 = arith.constant 0 : index
    %c0_0 = arith.constant 0 : index
    %0 = vector.load %arg2[%c0, %c0_0] : memref<256x4xbf16, #tpu.memory_space<vmem>>, vector<256x4xbf16>
    %c0_1 = arith.constant 0 : index
    %c0_2 = arith.constant 0 : index
    %1 = vector.load %arg3[%c0_1, %c0_2] : memref<4x4xbf16, #tpu.memory_space<vmem>>, vector<4x4xbf16>
    %cst = arith.constant dense<0.000000e+00> : vector<256x4xf32>
    %2 = tpu.matmul %0, %1, %cst {dimension_numbers = #tpu.dot_dimension_numbers<[1], [0], [0], [1], [0, 0, 1, 1], [], []>} : vector<256x4xbf16>, vector<4x4xbf16>, vector<256x4xf32> -> vector<256x4xf32>
    %c0_3 = arith.constant 0 : index
    %c0_4 = arith.constant 0 : index
    %3 = vector.load %arg4[%c0_3, %c0_4] : memref<1x4xf32, #tpu.memory_space<vmem>>, vector<1x4xf32>
    %4 = vector.broadcast %3 : vector<1x4xf32> to vector<256x4xf32>
    %5 = arith.addf %2, %4 : vector<256x4xf32>
    %cst_5 = arith.constant 0.000000e+00 : f32
    %6 = vector.broadcast %cst_5 : f32 to vector<256x4xf32>
    %7 = arith.maximumf %5, %6 : vector<256x4xf32>
    %c0_6 = arith.constant 0 : index
    %c0_7 = arith.constant 0 : index
    %8 = vector.load %arg1[%c0_6, %c0_7] : memref<256x4xbf16, #tpu.memory_space<vmem>>, vector<256x4xbf16>
    %c0_8 = arith.constant 0 : index
    %c0_9 = arith.constant 0 : index
    %9 = vector.load %arg5[%c0_8, %c0_9] : memref<4x4xbf16, #tpu.memory_space<vmem>>, vector<4x4xbf16>
    %cst_10 = arith.constant dense<0.000000e+00> : vector<256x4xf32>
    %10 = tpu.matmul %8, %9, %cst_10 {dimension_numbers = #tpu.dot_dimension_numbers<[1], [0], [0], [1], [0, 0, 1, 1], [], []>} : vector<256x4xbf16>, vector<4x4xbf16>, vector<256x4xf32> -> vector<256x4xf32>
    %11 = arith.truncf %7 : vector<256x4xf32> to vector<256x4xbf16>
    %c0_11 = arith.constant 0 : index
    %c0_12 = arith.constant 0 : index
    %12 = vector.load %arg6[%c0_11, %c0_12] : memref<4x4xbf16, #tpu.memory_space<vmem>>, vector<4x4xbf16>
    %cst_13 = arith.constant dense<0.000000e+00> : vector<256x4xf32>
    %13 = tpu.matmul %11, %12, %cst_13 {dimension_numbers = #tpu.dot_dimension_numbers<[1], [0], [0], [1], [0, 0, 1, 1], [], []>} : vector<256x4xbf16>, vector<4x4xbf16>, vector<256x4xf32> -> vector<256x4xf32>
    %14 = arith.addf %10, %13 : vector<256x4xf32>
    %c0_14 = arith.constant 0 : index
    %c0_15 = arith.constant 0 : index
    %15 = vector.load %arg7[%c0_14, %c0_15] : memref<1x4xf32, #tpu.memory_space<vmem>>, vector<1x4xf32>
    %16 = vector.broadcast %15 : vector<1x4xf32> to vector<256x4xf32>
    %17 = arith.addf %14, %16 : vector<256x4xf32>
    %cst_16 = arith.constant 0.000000e+00 : f32
    %18 = vector.broadcast %cst_16 : f32 to vector<256x4xf32>
    %19 = arith.maximumf %17, %18 : vector<256x4xf32>
    %c0_17 = arith.constant 0 : index
    %c0_18 = arith.constant 0 : index
    %20 = vector.load %arg8[%c0_17, %c0_18] : memref<256x4xf32, #tpu.memory_space<vmem>>, vector<256x4xf32>
    tpu.vector_store %arg8[%c0_17, %c0_18], %19 {strides = array<i32>} : memref<256x4xf32, #tpu.memory_space<vmem>>, vector<256x4xf32>,
    return
  }
  func.func @transform_0(%arg0: i32) -> (i32, i32) {
    %c0_i32 = arith.constant 0 : i32
    %c0_i32_0 = arith.constant 0 : i32
    return %arg0, %c0_i32 : i32, i32
  }
  func.func @transform_1(%arg0: i32) -> (i32, i32) {
    %c0_i32 = arith.constant 0 : i32
    %c0_i32_0 = arith.constant 0 : i32
    return %arg0, %c0_i32 : i32, i32
  }
  func.func @transform_2(%arg0: i32) -> (i32, i32) {
    %c0_i32 = arith.constant 0 : i32
    %c0_i32_0 = arith.constant 0 : i32
    %c0_i32_1 = arith.constant 0 : i32
    return %c0_i32, %c0_i32_0 : i32, i32
  }
  func.func @transform_3(%arg0: i32) -> (i32, i32) {
    %c0_i32 = arith.constant 0 : i32
    %c0_i32_0 = arith.constant 0 : i32
    %c0_i32_1 = arith.constant 0 : i32
    return %c0_i32, %c0_i32_0 : i32, i32
  }
  func.func @transform_4(%arg0: i32) -> (i32, i32) {
    %c0_i32 = arith.constant 0 : i32
    %c0_i32_0 = arith.constant 0 : i32
    %c0_i32_1 = arith.constant 0 : i32
    return %c0_i32, %c0_i32_0 : i32, i32
  }
  func.func @transform_5(%arg0: i32) -> (i32, i32) {
    %c0_i32 = arith.constant 0 : i32
    %c0_i32_0 = arith.constant 0 : i32
    %c0_i32_1 = arith.constant 0 : i32
    return %c0_i32, %c0_i32_0 : i32, i32
  }
  func.func @transform_6(%arg0: i32) -> (i32, i32) {
    %c0_i32 = arith.constant 0 : i32
    %c0_i32_0 = arith.constant 0 : i32
    %c0_i32_1 = arith.constant 0 : i32
    return %c0_i32, %c0_i32_0 : i32, i32
  }
  func.func @transform_7(%arg0: i32) -> (i32, i32) {
    %c0_i32 = arith.constant 0 : i32
    %c0_i32_0 = arith.constant 0 : i32
    return %arg0, %c0_i32 : i32, i32
  }
}

</mosaic_0001>

<llo_original>
// kernel: bottleneck_cspb_forward.3
$region0: #{bottleneck_cspb_forward.3}
  #allocation0 [shape = 'u32[]', space=smem, size = 0x4, offset = 0x4, fixed_abs, tag = 'smem constant byte address 0x4 - core index']
  #allocation1 [shape = 'u32[144,128]{1,0:T(1,128)}', space=vmem, size = 0x12000, scoped, tag = 'internal scratch']
  %s0 = inlined_call_operand.vmem [shape: f32[512,4], index: 0, kind: input, shape index: {}]
  %s1 = inlined_call_operand.vmem [shape: bf16[4,4], index: 1, kind: input, shape index: {}]
  %s2 = inlined_call_operand.vmem [shape: f32[1,4], index: 2, kind: input, shape index: {}]
  %s3 = inlined_call_operand.vmem [shape: bf16[512,4], index: 3, kind: output, shape index: {}]
  %s4 = sld [smem:[#allocation0]]
  $region45: #{bottleneck_cspb_forward.3} parent=0
    _
  %s6 = ssub.s32 1, %s4
  %s7 = scalar_select 0, %s6, %s4
  loop: start=0, step=1, limit=4
  $region2: #{bottleneck_cspb_forward.3} parent=0 // loop_pre_header
    _
  $region3: #{bottleneck_cspb_forward.3} parent=0 // loop_header
    %s9 = sphi 0, %s13
    %p10 = scmp.ge.s32.totalorder %s9, 4
    %s19 = sphi 0, %s21
    %s22 = sphi 0, %s19
    %s23 = sphi 0, %s22
    %s39 = sphi 0, %s23
    %s43 = sphi 0, %s43
    %s45 = sphi 0, %s43
    %s46 = sphi 0, %s45
    %s60 = sphi 0, %s46
    %s64 = sphi 0, %s64
    %s66 = sphi 0, %s64
    %s67 = sphi 0, %s66
    %s81 = sphi 0, %s67
    %s87 = sphi 0, %s89
    %s90 = sphi 0, %s87
    %s91 = sphi 0, %s90
    %s107 = sphi 0, %s91
  $region4: #{bottleneck_cspb_forward.3} parent=0 // loop_header_branch
    %12 = sbr.rel (%p10) target = $region8
  $region5: #{bottleneck_cspb_forward.3} parent=0 // loop_body
    %s14 = ssub.s32 %s9, 1
    %s15 = ssub.s32 %s9, 2
    %s16 = sadd.s32 %s9, 1
    %s17 = ssub.s32 %s9, %s16
    %p18 = scmp.eq.s32.totalorder %s17, 0
    %s20 = sadd.s32 %s19, 1
    %s21 = scalar_select %p18, %s19, %s20
    %p24 = pneg %p18
    %p25 = scmp.eq.s32.totalorder %s9, 1
    %p26 = por %p24, %p25
    %p27 = scmp.ne.s32.totalorder %s19, %s22
    %p28 = scmp.eq.s32.totalorder %s9, 0
    %p29 = por %p27, %p28
    %p30 = scmp.ne.s32.totalorder %s19, %s22
    %p31 = scmp.eq.s32.totalorder %s14, 1
    %p32 = por %p30, %p31
    %p33 = scmp.ne.s32.totalorder %s22, %s23
    %p34 = scmp.eq.s32.totalorder %s14, 0
    %p35 = por %p33, %p34
    %p36 = scmp.ne.s32.totalorder %s22, %s23
    %p37 = scmp.eq.s32.totalorder %s15, 1
    %p38 = por %p36, %p37
    %p40 = scmp.ne.s32.totalorder %s23, %s39
    %p41 = scmp.eq.s32.totalorder %s15, 0
    %p42 = por %p40, %p41
    %s44 = sadd.s32 %s43, 1
    %p47 = scmp.eq.s32.totalorder %s9, 1
    %p48 = scmp.ne.s32.totalorder %s43, %s45
    %p49 = scmp.eq.s32.totalorder %s9, 0
    %p50 = por %p48, %p49
    %p51 = scmp.ne.s32.totalorder %s43, %s45
    %p52 = scmp.eq.s32.totalorder %s14, 1
    %p53 = por %p51, %p52
    %p54 = scmp.ne.s32.totalorder %s45, %s46
    %p55 = scmp.eq.s32.totalorder %s14, 0
    %p56 = por %p54, %p55
    %p57 = scmp.ne.s32.totalorder %s45, %s46
    %p58 = scmp.eq.s32.totalorder %s15, 1
    %p59 = por %p57, %p58
    %p61 = scmp.ne.s32.totalorder %s46, %s60
    %p62 = scmp.eq.s32.totalorder %s15, 0
    %p63 = por %p61, %p62
    %s65 = sadd.s32 %s64, 1
    %p68 = scmp.eq.s32.totalorder %s9, 1
    %p69 = scmp.ne.s32.totalorder %s64, %s66
    %p70 = scmp.eq.s32.totalorder %s9, 0
    %p71 = por %p69, %p70
    %p72 = scmp.ne.s32.totalorder %s64, %s66
    %p73 = scmp.eq.s32.totalorder %s14, 1
    %p74 = por %p72, %p73
    %p75 = scmp.ne.s32.totalorder %s66, %s67
    %p76 = scmp.eq.s32.totalorder %s14, 0
    %p77 = por %p75, %p76
    %p78 = scmp.ne.s32.totalorder %s66, %s67
    %p79 = scmp.eq.s32.totalorder %s15, 1
    %p80 = por %p78, %p79
    %p82 = scmp.ne.s32.totalorder %s67, %s81
    %p83 = scmp.eq.s32.totalorder %s15, 0
    %p84 = por %p82, %p83
    %s85 = ssub.s32 %s9, %s16
    %p86 = scmp.eq.s32.totalorder %s85, 0
    %s88 = sadd.s32 %s87, 1
    %s89 = scalar_select %p86, %s87, %s88
    %p92 = pneg %p86
    %p93 = scmp.eq.s32.totalorder %s9, 1
    %p94 = por %p92, %p93
    %p95 = scmp.ne.s32.totalorder %s87, %s90
    %p96 = scmp.eq.s32.totalorder %s9, 0
    %p97 = por %p95, %p96
    %p98 = scmp.ne.s32.totalorder %s87, %s90
    %p99 = scmp.eq.s32.totalorder %s14, 1
    %p100 = por %p98, %p99
    %p101 = scmp.ne.s32.totalorder %s90, %s91
    %p102 = scmp.eq.s32.totalorder %s14, 0
    %p103 = por %p101, %p102
    %p104 = scmp.ne.s32.totalorder %s90, %s91
    %p105 = scmp.eq.s32.totalorder %s15, 1
    %p106 = por %p104, %p105
    %p108 = scmp.ne.s32.totalorder %s91, %s107
    %p109 = scmp.eq.s32.totalorder %s15, 0
    %p110 = por %p108, %p109
    %p111 = scmp.le.s32.totalorder 1, %s9
    %p112 = scmp.lt.s32.totalorder %s9, 3
    %p113 = pnand %p111, %p112
    %p114 = pneg %p113
    // Predicated region
    $region9: #{bottleneck_cspb_forward.3} parent=5 // pred_check
      _
    $region10: #{bottleneck_cspb_forward.3} parent=5 // pred_check_branch
      %116 = sbr.rel (%p113) target = $region12
    $region11: #{bottleneck_cspb_forward.3} parent=5 // pred_region
      %s117 = ssub.s32 %s9, 1
      // Predicated region
      $region13: #{bottleneck_cspb_forward.3} parent=11 // pred_check
        %p118 = pneg %p56
      $region14: #{bottleneck_cspb_forward.3} parent=11 // pred_check_branch
        %120 = sbr.rel (%p118) target = $region16
      $region15: #{bottleneck_cspb_forward.3} parent=11 // pred_region
        _
      $region16: #{bottleneck_cspb_forward.3} parent=11 // pred_fallthru
        _
      // Predicated region
      $region17: #{bottleneck_cspb_forward.3} parent=11 // pred_check
        %p121 = pneg %p77
      $region18: #{bottleneck_cspb_forward.3} parent=11 // pred_check_branch
        %123 = sbr.rel (%p121) target = $region20
      $region19: #{bottleneck_cspb_forward.3} parent=11 // pred_region
        _
      $region20: #{bottleneck_cspb_forward.3} parent=11 // pred_fallthru
        _
    $region12: #{bottleneck_cspb_forward.3} parent=5 // pred_fallthru
      _
    %p124 = scmp.lt.s32.totalorder %s9, 2
    // Predicated region
    $region21: #{bottleneck_cspb_forward.3} parent=5 // pred_check
      %p125 = pneg %p124
    $region22: #{bottleneck_cspb_forward.3} parent=5 // pred_check_branch
      %127 = sbr.rel (%p125) target = $region24
    $region23: #{bottleneck_cspb_forward.3} parent=5 // pred_region
      // Predicated region
      $region25: #{bottleneck_cspb_forward.3} parent=23 // pred_check
        %p128 = pneg %p29
      $region26: #{bottleneck_cspb_forward.3} parent=23 // pred_check_branch
        %130 = sbr.rel (%p128) target = $region28
      $region27: #{bottleneck_cspb_forward.3} parent=23 // pred_region
        %s131 = smul.u32 32, %s9
        %p132 = scmp.lt.s32.totalorder %s131, 63
        %s133 = scalar_select %p132, %s131, 63
        %s134 = smul.addr %s133, 8
        %s135 = scalar_lea.vmem %s0, %s134
        %s136 = smul.u32 32, %s9
      $region28: #{bottleneck_cspb_forward.3} parent=23 // pred_fallthru
        _
    $region24: #{bottleneck_cspb_forward.3} parent=5 // pred_fallthru
      _
    %p137 = scmp.le.s32.totalorder 1, %s9
    %p138 = scmp.lt.s32.totalorder %s9, 3
    %p139 = pnand %p137, %p138
    %p140 = pneg %p139
    // Predicated region
    $region29: #{bottleneck_cspb_forward.3} parent=5 // pred_check
      _
    $region30: #{bottleneck_cspb_forward.3} parent=5 // pred_check_branch
      %142 = sbr.rel (%p139) target = $region32
    $region31: #{bottleneck_cspb_forward.3} parent=5 // pred_region
      %s143 = ssub.s32 %s9, 1
      %s144 = smul.u32 32, %s14
      %p145 = scmp.lt.s32.totalorder %s144, 63
      %s146 = scalar_select %p145, %s144, 63
      %s147 = smul.addr %s146, 8
      %s148 = scalar_lea.vmem %s0, %s147
      %p149 = pneg %p35
      %p150 = pneg %p32
      %p151 = pneg %p56
      %p152 = pneg %p53
      %p153 = pneg %p77
      %p154 = pneg %p74
      %p155 = pneg %p103
      %p156 = pneg %p100
      %s157 = smul.u32 32, %s14
      %p158 = scmp.lt.s32.totalorder %s157, 63
      %s159 = scalar_select %p158, %s157, 63
      %s160 = smul.addr %s159, 4
      %s161 = scalar_lea.vmem %s3, %s160
      %s162 = smul.u32 32, %s14
      %p163 = scmp.lt.s32.totalorder %s162, 63
      %s164 = scalar_select %p163, %s162, 63
      %s165 = smul.addr %s164, 8
      %s166 = scalar_lea.vmem %s0, %s165
      %s167 = smul.u32 32, %s14
      %s168 = smul.u32 32, %s14
      %p169 = scmp.lt.s32.totalorder %s168, 63
      %s170 = scalar_select %p169, %s168, 63
      %s171 = smul.addr %s170, 4
      %s172 = scalar_lea.vmem %s3, %s171
      %s173 = smul.u32 32, %s14
      %v175 = vld [vmem:[%s166] sm:$0xff]
      %v176 = vld [vmem:[%s166 + $0x8] sm:$0xff]
      %v177 = vld [vmem:[%s166 + $0x10] sm:$0xff]
      %v178 = vld [vmem:[%s166 + $0x18] sm:$0xff]
      %v179 = vld [vmem:[%s166 + $0x20] sm:$0xff]
      %v180 = vld [vmem:[%s166 + $0x28] sm:$0xff]
      %v181 = vld [vmem:[%s166 + $0x30] sm:$0xff]
      %v182 = vld [vmem:[%s166 + $0x38] sm:$0xff]
      %v183 = vld [vmem:[%s166 + $0x40] sm:$0xff]
      %v184 = vld [vmem:[%s166 + $0x48] sm:$0xff]
      %v185 = vld [vmem:[%s166 + $0x50] sm:$0xff]
      %v186 = vld [vmem:[%s166 + $0x58] sm:$0xff]
      %v187 = vld [vmem:[%s166 + $0x60] sm:$0xff]
      %v188 = vld [vmem:[%s166 + $0x68] sm:$0xff]
      %v189 = vld [vmem:[%s166 + $0x70] sm:$0xff]
      %v190 = vld [vmem:[%s166 + $0x78] sm:$0xff]
      %v191 = vld [vmem:[%s166 + $0x80] sm:$0xff]
      %v192 = vld [vmem:[%s166 + $0x88] sm:$0xff]
      %v193 = vld [vmem:[%s166 + $0x90] sm:$0xff]
      %v194 = vld [vmem:[%s166 + $0x98] sm:$0xff]
      %v195 = vld [vmem:[%s166 + $0xa0] sm:$0xff]
      %v196 = vld [vmem:[%s166 + $0xa8] sm:$0xff]
      %v197 = vld [vmem:[%s166 + $0xb0] sm:$0xff]
      %v198 = vld [vmem:[%s166 + $0xb8] sm:$0xff]
      %v199 = vld [vmem:[%s166 + $0xc0] sm:$0xff]
      %v200 = vld [vmem:[%s166 + $0xc8] sm:$0xff]
      %v201 = vld [vmem:[%s166 + $0xd0] sm:$0xff]
      %v202 = vld [vmem:[%s166 + $0xd8] sm:$0xff]
      %v203 = vld [vmem:[%s166 + $0xe0] sm:$0xff]
      %v204 = vld [vmem:[%s166 + $0xe8] sm:$0xff]
      %v205 = vld [vmem:[%s166 + $0xf0] sm:$0xff]
      %v206 = vld [vmem:[%s166 + $0xf8] sm:$0xff]
      %v207 = vpack.c.bf16 %v176, %v175
      %v208 = vpack.c.bf16 %v178, %v177
      %v209 = vpack.c.bf16 %v180, %v179
      %v210 = vpack.c.bf16 %v182, %v181
      %v211 = vpack.c.bf16 %v184, %v183
      %v212 = vpack.c.bf16 %v186, %v185
      %v213 = vpack.c.bf16 %v188, %v187
      %v214 = vpack.c.bf16 %v190, %v189
      %v215 = vpack.c.bf16 %v192, %v191
      %v216 = vpack.c.bf16 %v194, %v193
      %v217 = vpack.c.bf16 %v196, %v195
      %v218 = vpack.c.bf16 %v198, %v197
      %v219 = vpack.c.bf16 %v200, %v199
      %v220 = vpack.c.bf16 %v202, %v201
      %v221 = vpack.c.bf16 %v204, %v203
      %v222 = vpack.c.bf16 %v206, %v205
      %v223 = vld [vmem:[%s1] sm:$0x3]
      %v224 = vld [vmem:[%s2] sm:$0x1]
      %v226 = vlaneseq
      %v227 = vshrl.u32 %v226, 7
      %v228 = vsub.s32 0, %v227
      %v229 = vrot.slane %v224, %v228
      %vm231 = vcmask 31744
      %v233 = vsel %vm231, %v207, 0
      %v236 = vsel %vm231, %v208, 0
      %v239 = vsel %vm231, %v209, 0
      %v242 = vsel %vm231, %v210, 0
      %v245 = vsel %vm231, %v211, 0
      %v248 = vsel %vm231, %v212, 0
      %v251 = vsel %vm231, %v213, 0
      %v254 = vsel %vm231, %v214, 0
      %v257 = vsel %vm231, %v215, 0
      %v260 = vsel %vm231, %v216, 0
      %v263 = vsel %vm231, %v217, 0
      %v266 = vsel %vm231, %v218, 0
      %v269 = vsel %vm231, %v219, 0
      %v272 = vsel %vm231, %v220, 0
      %v275 = vsel %vm231, %v221, 0
      %v278 = vsel %vm231, %v222, 0
      %vm280 = vcmask 1041408
      %v282 = vsel %vm280, %v223, 0
      %284 = vmatprep.subr.bf16.mxu0 0
      %285 = vmatpush1.bf16.msra.mxu0 %v282
      %286 = vmatprep.subr.bf16.mxu0 0
      %287 = vmatpush1.bf16.msra.mxu0 0
      %288 = vmatprep.subr.bf16.mxu0 0
      %289 = vmatpush1.bf16.msra.mxu0 0
      %290 = vmatprep.subr.bf16.mxu0 0
      %291 = vmatpush1.bf16.msra.mxu0 0
      %292 = vmatprep.subr.bf16.mxu0 0
      %293 = vmatpush1.bf16.msra.mxu0 0
      %294 = vmatprep.subr.bf16.mxu0 0
      %295 = vmatpush1.bf16.msra.mxu0 0
      %296 = vmatprep.subr.bf16.mxu0 0
      %297 = vmatpush1.bf16.msra.mxu0 0
      %298 = vmatprep.subr.bf16.mxu0 0
      %299 = vmatpush1.bf16.msra.mxu0 0
      %300 = vmatprep.subr.bf16.mxu0 0
      %301 = vmatpush1.bf16.msra.mxu0 0
      %302 = vmatprep.subr.bf16.mxu0 0
      %303 = vmatpush1.bf16.msra.mxu0 0
      %304 = vmatprep.subr.bf16.mxu0 0
      %305 = vmatpush1.bf16.msra.mxu0 0
      %306 = vmatprep.subr.bf16.mxu0 0
      %307 = vmatpush1.bf16.msra.mxu0 0
      %308 = vmatprep.subr.bf16.mxu0 0
      %309 = vmatpush1.bf16.msra.mxu0 0
      %310 = vmatprep.subr.bf16.mxu0 0
      %311 = vmatpush1.bf16.msra.mxu0 0
      %312 = vmatprep.subr.bf16.mxu0 0
      %313 = vmatpush1.bf16.msra.mxu0 0
      %314 = vmatprep.subr.bf16.mxu0 0
      %315 = vmatpush1.bf16.msra.mxu0 0
      %316 = vmatprep.mubr.bf16.mxu0 0
      %317 = vmatmul.mubr.bf16.gmra.mrb[0].mxu0 %v233
      %v318 = vpop.f32.mrb[0].mxu0
      %v319 = vadd.f32 %v229, %v318
      %v320 = vpop.f32.mrb[0].mxu0
      %v321 = vpop.f32.mrb[0].mxu0
      %v322 = vadd.f32 %v229, %v321
      %v323 = vpop.f32.mrb[0].mxu0
      %324 = vmatprep.mubr.bf16.mxu0 0
      %325 = vmatmul.mubr.bf16.gmra.mrb[0].mxu0 %v236
      %v326 = vpop.f32.mrb[0].mxu0
      %v327 = vadd.f32 %v229, %v326
      %v328 = vpop.f32.mrb[0].mxu0
      %v329 = vpop.f32.mrb[0].mxu0
      %v330 = vadd.f32 %v229, %v329
      %v331 = vpop.f32.mrb[0].mxu0
      %332 = vmatprep.mubr.bf16.mxu0 0
      %333 = vmatmul.mubr.bf16.gmra.mrb[0].mxu0 %v239
      %v334 = vpop.f32.mrb[0].mxu0
      %v335 = vadd.f32 %v229, %v334
      %v336 = vpop.f32.mrb[0].mxu0
      %v337 = vpop.f32.mrb[0].mxu0
      %v338 = vadd.f32 %v229, %v337
      %v339 = vpop.f32.mrb[0].mxu0
      %340 = vmatprep.mubr.bf16.mxu0 0
      %341 = vmatmul.mubr.bf16.gmra.mrb[0].mxu0 %v242
      %v342 = vpop.f32.mrb[0].mxu0
      %v343 = vadd.f32 %v229, %v342
      %v344 = vpop.f32.mrb[0].mxu0
      %v345 = vpop.f32.mrb[0].mxu0
      %v346 = vadd.f32 %v229, %v345
      %v347 = vpop.f32.mrb[0].mxu0
      %348 = vmatprep.mubr.bf16.mxu0 0
      %349 = vmatmul.mubr.bf16.gmra.mrb[0].mxu0 %v245
      %v350 = vpop.f32.mrb[0].mxu0
      %v351 = vadd.f32 %v229, %v350
      %v352 = vpop.f32.mrb[0].mxu0
      %v353 = vpop.f32.mrb[0].mxu0
      %v354 = vadd.f32 %v229, %v353
      %v355 = vpop.f32.mrb[0].mxu0
      %356 = vmatprep.mubr.bf16.mxu0 0
      %357 = vmatmul.mubr.bf16.gmra.mrb[0].mxu0 %v248
      %v358 = vpop.f32.mrb[0].mxu0
      %v359 = vadd.f32 %v229, %v358
      %v360 = vpop.f32.mrb[0].mxu0
      %v361 = vpop.f32.mrb[0].mxu0
      %v362 = vadd.f32 %v229, %v361
      %v363 = vpop.f32.mrb[0].mxu0
      %364 = vmatprep.mubr.bf16.mxu0 0
      %365 = vmatmul.mubr.bf16.gmra.mrb[0].mxu0 %v251
      %v366 = vpop.f32.mrb[0].mxu0
      %v367 = vadd.f32 %v229, %v366
      %v368 = vpop.f32.mrb[0].mxu0
      %v369 = vpop.f32.mrb[0].mxu0
      %v370 = vadd.f32 %v229, %v369
      %v371 = vpop.f32.mrb[0].mxu0
      %372 = vmatprep.mubr.bf16.mxu0 0
      %373 = vmatmul.mubr.bf16.gmra.mrb[0].mxu0 %v254
      %v374 = vpop.f32.mrb[0].mxu0
      %v375 = vadd.f32 %v229, %v374
      %v376 = vpop.f32.mrb[0].mxu0
      %v377 = vpop.f32.mrb[0].mxu0
      %v378 = vadd.f32 %v229, %v377
      %v379 = vpop.f32.mrb[0].mxu0
      %380 = vmatprep.mubr.bf16.mxu0 0
      %381 = vmatmul.mubr.bf16.gmra.mrb[0].mxu0 %v257
      %v382 = vpop.f32.mrb[0].mxu0
      %v383 = vadd.f32 %v229, %v382
      %v384 = vpop.f32.mrb[0].mxu0
      %v385 = vpop.f32.mrb[0].mxu0
      %v386 = vadd.f32 %v229, %v385
      %v387 = vpop.f32.mrb[0].mxu0
      %388 = vmatprep.mubr.bf16.mxu0 0
      %389 = vmatmul.mubr.bf16.gmra.mrb[0].mxu0 %v260
      %v390 = vpop.f32.mrb[0].mxu0
      %v391 = vadd.f32 %v229, %v390
      %v392 = vpop.f32.mrb[0].mxu0
      %v393 = vpop.f32.mrb[0].mxu0
      %v394 = vadd.f32 %v229, %v393
      %v395 = vpop.f32.mrb[0].mxu0
      %396 = vmatprep.mubr.bf16.mxu0 0
      %397 = vmatmul.mubr.bf16.gmra.mrb[0].mxu0 %v263
      %v398 = vpop.f32.mrb[0].mxu0
      %v399 = vadd.f32 %v229, %v398
      %v400 = vpop.f32.mrb[0].mxu0
      %v401 = vpop.f32.mrb[0].mxu0
      %v402 = vadd.f32 %v229, %v401
      %v403 = vpop.f32.mrb[0].mxu0
      %404 = vmatprep.mubr.bf16.mxu0 0
      %405 = vmatmul.mubr.bf16.gmra.mrb[0].mxu0 %v266
      %v406 = vpop.f32.mrb[0].mxu0
      %v407 = vadd.f32 %v229, %v406
      %v408 = vpop.f32.mrb[0].mxu0
      %v409 = vpop.f32.mrb[0].mxu0
      %v410 = vadd.f32 %v229, %v409
      %v411 = vpop.f32.mrb[0].mxu0
      %412 = vmatprep.mubr.bf16.mxu0 0
      %413 = vmatmul.mubr.bf16.gmra.mrb[0].mxu0 %v269
      %v414 = vpop.f32.mrb[0].mxu0
      %v415 = vadd.f32 %v229, %v414
      %v416 = vpop.f32.mrb[0].mxu0
      %v417 = vpop.f32.mrb[0].mxu0
      %v418 = vadd.f32 %v229, %v417
      %v419 = vpop.f32.mrb[0].mxu0
      %420 = vmatprep.mubr.bf16.mxu0 0
      %421 = vmatmul.mubr.bf16.gmra.mrb[0].mxu0 %v272
      %v422 = vpop.f32.mrb[0].mxu0
      %v423 = vadd.f32 %v229, %v422
      %v424 = vpop.f32.mrb[0].mxu0
      %v425 = vpop.f32.mrb[0].mxu0
      %v426 = vadd.f32 %v229, %v425
      %v427 = vpop.f32.mrb[0].mxu0
      %428 = vmatprep.mubr.bf16.mxu0 0
      %429 = vmatmul.mubr.bf16.gmra.mrb[0].mxu0 %v275
      %v430 = vpop.f32.mrb[0].mxu0
      %v431 = vadd.f32 %v229, %v430
      %v432 = vpop.f32.mrb[0].mxu0
      %v433 = vpop.f32.mrb[0].mxu0
      %v434 = vadd.f32 %v229, %v433
      %v435 = vpop.f32.mrb[0].mxu0
      %436 = vmatprep.mubr.bf16.mxu0 0
      %437 = vmatmul.mubr.bf16.gmra.mrb[0].mxu0 %v278
      %v438 = vpop.f32.mrb[0].mxu0
      %v439 = vadd.f32 %v229, %v438
      %v440 = vpop.f32.mrb[0].mxu0
      %v441 = vpop.f32.mrb[0].mxu0
      %v442 = vadd.f32 %v229, %v441
      %v443 = vpop.f32.mrb[0].mxu0
      %444 = vdwg.mxu0
      %v445 = vmax.f32 %v319, 0.0
      %v446 = vmax.f32 %v322, 0.0
      %v447 = vmax.f32 %v327, 0.0
      %v448 = vmax.f32 %v330, 0.0
      %v449 = vmax.f32 %v335, 0.0
      %v450 = vmax.f32 %v338, 0.0
      %v451 = vmax.f32 %v343, 0.0
      %v452 = vmax.f32 %v346, 0.0
      %v453 = vmax.f32 %v351, 0.0
      %v454 = vmax.f32 %v354, 0.0
      %v455 = vmax.f32 %v359, 0.0
      %v456 = vmax.f32 %v362, 0.0
      %v457 = vmax.f32 %v367, 0.0
      %v458 = vmax.f32 %v370, 0.0
      %v459 = vmax.f32 %v375, 0.0
      %v460 = vmax.f32 %v378, 0.0
      %v461 = vmax.f32 %v383, 0.0
      %v462 = vmax.f32 %v386, 0.0
      %v463 = vmax.f32 %v391, 0.0
      %v464 = vmax.f32 %v394, 0.0
      %v465 = vmax.f32 %v399, 0.0
      %v466 = vmax.f32 %v402, 0.0
      %v467 = vmax.f32 %v407, 0.0
      %v468 = vmax.f32 %v410, 0.0
      %v469 = vmax.f32 %v415, 0.0
      %v470 = vmax.f32 %v418, 0.0
      %v471 = vmax.f32 %v423, 0.0
      %v472 = vmax.f32 %v426, 0.0
      %v473 = vmax.f32 %v431, 0.0
      %v474 = vmax.f32 %v434, 0.0
      %v475 = vmax.f32 %v439, 0.0
      %v476 = vmax.f32 %v442, 0.0
      %v477 = vpack.c.bf16 %v446, %v445
      %v478 = vpack.c.bf16 %v448, %v447
      %v479 = vpack.c.bf16 %v450, %v449
      %v480 = vpack.c.bf16 %v452, %v451
      %v481 = vpack.c.bf16 %v454, %v453
      %v482 = vpack.c.bf16 %v456, %v455
      %v483 = vpack.c.bf16 %v458, %v457
      %v484 = vpack.c.bf16 %v460, %v459
      %v485 = vpack.c.bf16 %v462, %v461
      %v486 = vpack.c.bf16 %v464, %v463
      %v487 = vpack.c.bf16 %v466, %v465
      %v488 = vpack.c.bf16 %v468, %v467
      %v489 = vpack.c.bf16 %v470, %v469
      %v490 = vpack.c.bf16 %v472, %v471
      %v491 = vpack.c.bf16 %v474, %v473
      %v492 = vpack.c.bf16 %v476, %v475
      %v509 = vunpack.c.l.b16 %v477
      %v510 = vunpack.c.h.b16 %v477
      %v511 = vunpack.c.l.b16 %v478
      %v512 = vunpack.c.h.b16 %v478
      %v513 = vunpack.c.l.b16 %v479
      %v514 = vunpack.c.h.b16 %v479
      %v515 = vunpack.c.l.b16 %v480
      %v516 = vunpack.c.h.b16 %v480
      %v517 = vunpack.c.l.b16 %v481
      %v518 = vunpack.c.h.b16 %v481
      %v519 = vunpack.c.l.b16 %v482
      %v520 = vunpack.c.h.b16 %v482
      %v521 = vunpack.c.l.b16 %v483
      %v522 = vunpack.c.h.b16 %v483
      %v523 = vunpack.c.l.b16 %v484
      %v524 = vunpack.c.h.b16 %v484
      %v525 = vunpack.c.l.b16 %v485
      %v526 = vunpack.c.h.b16 %v485
      %v527 = vunpack.c.l.b16 %v486
      %v528 = vunpack.c.h.b16 %v486
      %v529 = vunpack.c.l.b16 %v487
      %v530 = vunpack.c.h.b16 %v487
      %v531 = vunpack.c.l.b16 %v488
      %v532 = vunpack.c.h.b16 %v488
      %v533 = vunpack.c.l.b16 %v489
      %v534 = vunpack.c.h.b16 %v489
      %v535 = vunpack.c.l.b16 %v490
      %v536 = vunpack.c.h.b16 %v490
      %v537 = vunpack.c.l.b16 %v491
      %v538 = vunpack.c.h.b16 %v491
      %v539 = vunpack.c.l.b16 %v492
      %v540 = vunpack.c.h.b16 %v492
      %v541 = vpack.c.b16 %v509, %v509
      %v542 = vpack.c.b16 %v510, %v510
      %v543 = vpack.c.b16 %v511, %v511
      %v544 = vpack.c.b16 %v512, %v512
      %v545 = vpack.c.b16 %v513, %v513
      %v546 = vpack.c.b16 %v514, %v514
      %v547 = vpack.c.b16 %v515, %v515
      %v548 = vpack.c.b16 %v516, %v516
      %v549 = vpack.c.b16 %v517, %v517
      %v550 = vpack.c.b16 %v518, %v518
      %v551 = vpack.c.b16 %v519, %v519
      %v552 = vpack.c.b16 %v520, %v520
      %v553 = vpack.c.b16 %v521, %v521
      %v554 = vpack.c.b16 %v522, %v522
      %v555 = vpack.c.b16 %v523, %v523
      %v556 = vpack.c.b16 %v524, %v524
      %v557 = vpack.c.b16 %v525, %v525
      %v558 = vpack.c.b16 %v526, %v526
      %v559 = vpack.c.b16 %v527, %v527
      %v560 = vpack.c.b16 %v528, %v528
      %v561 = vpack.c.b16 %v529, %v529
      %v562 = vpack.c.b16 %v530, %v530
      %v563 = vpack.c.b16 %v531, %v531
      %v564 = vpack.c.b16 %v532, %v532
      %v565 = vpack.c.b16 %v533, %v533
      %v566 = vpack.c.b16 %v534, %v534
      %v567 = vpack.c.b16 %v535, %v535
      %v568 = vpack.c.b16 %v536, %v536
      %v569 = vpack.c.b16 %v537, %v537
      %v570 = vpack.c.b16 %v538, %v538
      %v571 = vpack.c.b16 %v539, %v539
      %v572 = vpack.c.b16 %v540, %v540
      %vm605 = vcmask 27648
      %606 = vst.msk [vmem:[%s172] sm:$0xf] %vm605, %v541
      %607 = vst.msk [vmem:[%s172 + $0x4] sm:$0xf] %vm605, %v542
      %608 = vst.msk [vmem:[%s172 + $0x8] sm:$0xf] %vm605, %v543
      %609 = vst.msk [vmem:[%s172 + $0xc] sm:$0xf] %vm605, %v544
      %610 = vst.msk [vmem:[%s172 + $0x10] sm:$0xf] %vm605, %v545
      %611 = vst.msk [vmem:[%s172 + $0x14] sm:$0xf] %vm605, %v546
      %612 = vst.msk [vmem:[%s172 + $0x18] sm:$0xf] %vm605, %v547
      %613 = vst.msk [vmem:[%s172 + $0x1c] sm:$0xf] %vm605, %v548
      %614 = vst.msk [vmem:[%s172 + $0x20] sm:$0xf] %vm605, %v549
      %615 = vst.msk [vmem:[%s172 + $0x24] sm:$0xf] %vm605, %v550
      %616 = vst.msk [vmem:[%s172 + $0x28] sm:$0xf] %vm605, %v551
      %617 = vst.msk [vmem:[%s172 + $0x2c] sm:$0xf] %vm605, %v552
      %618 = vst.msk [vmem:[%s172 + $0x30] sm:$0xf] %vm605, %v553
      %619 = vst.msk [vmem:[%s172 + $0x34] sm:$0xf] %vm605, %v554
      %620 = vst.msk [vmem:[%s172 + $0x38] sm:$0xf] %vm605, %v555
      %621 = vst.msk [vmem:[%s172 + $0x3c] sm:$0xf] %vm605, %v556
      %622 = vst.msk [vmem:[%s172 + $0x40] sm:$0xf] %vm605, %v557
      %623 = vst.msk [vmem:[%s172 + $0x44] sm:$0xf] %vm605, %v558
      %624 = vst.msk [vmem:[%s172 + $0x48] sm:$0xf] %vm605, %v559
      %625 = vst.msk [vmem:[%s172 + $0x4c] sm:$0xf] %vm605, %v560
      %626 = vst.msk [vmem:[%s172 + $0x50] sm:$0xf] %vm605, %v561
      %627 = vst.msk [vmem:[%s172 + $0x54] sm:$0xf] %vm605, %v562
      %628 = vst.msk [vmem:[%s172 + $0x58] sm:$0xf] %vm605, %v563
      %629 = vst.msk [vmem:[%s172 + $0x5c] sm:$0xf] %vm605, %v564
      %630 = vst.msk [vmem:[%s172 + $0x60] sm:$0xf] %vm605, %v565
      %631 = vst.msk [vmem:[%s172 + $0x64] sm:$0xf] %vm605, %v566
      %632 = vst.msk [vmem:[%s172 + $0x68] sm:$0xf] %vm605, %v567
      %633 = vst.msk [vmem:[%s172 + $0x6c] sm:$0xf] %vm605, %v568
      %634 = vst.msk [vmem:[%s172 + $0x70] sm:$0xf] %vm605, %v569
      %635 = vst.msk [vmem:[%s172 + $0x74] sm:$0xf] %vm605, %v570
      %636 = vst.msk [vmem:[%s172 + $0x78] sm:$0xf] %vm605, %v571
      %637 = vst.msk [vmem:[%s172 + $0x7c] sm:$0xf] %vm605, %v572
      %s638 = smul.u32 32, %s14
      %p639 = scmp.lt.s32.totalorder %s638, 63
      %s640 = scalar_select %p639, %s638, 63
      %s641 = smul.addr %s640, 4
      %s642 = scalar_lea.vmem %s3, %s641
      // Predicated region
      $region33: #{bottleneck_cspb_forward.3} parent=31 // pred_check
        %p643 = pneg %p100
      $region34: #{bottleneck_cspb_forward.3} parent=31 // pred_check_branch
        %645 = sbr.rel (%p643) target = $region36
      $region35: #{bottleneck_cspb_forward.3} parent=31 // pred_region
        %s646 = smul.u32 32, %s14
      $region36: #{bottleneck_cspb_forward.3} parent=31 // pred_fallthru
        _
    $region32: #{bottleneck_cspb_forward.3} parent=5 // pred_fallthru
      _
    %p647 = scmp.le.s32.totalorder 2, %s9
    // Predicated region
    $region37: #{bottleneck_cspb_forward.3} parent=5 // pred_check
      %p648 = pneg %p647
    $region38: #{bottleneck_cspb_forward.3} parent=5 // pred_check_branch
      %650 = sbr.rel (%p648) target = $region40
    $region39: #{bottleneck_cspb_forward.3} parent=5 // pred_region
      %s651 = ssub.s32 %s9, 2
      // Predicated region
      $region41: #{bottleneck_cspb_forward.3} parent=39 // pred_check
        %p652 = pneg %p106
      $region42: #{bottleneck_cspb_forward.3} parent=39 // pred_check_branch
        %654 = sbr.rel (%p652) target = $region44
      $region43: #{bottleneck_cspb_forward.3} parent=39 // pred_region
        %s655 = smul.u32 32, %s15
        %p656 = scmp.lt.s32.totalorder %s655, 63
        %s657 = scalar_select %p656, %s655, 63
        %s658 = smul.addr %s657, 4
        %s659 = scalar_lea.vmem %s3, %s658
      $region44: #{bottleneck_cspb_forward.3} parent=39 // pred_fallthru
        _
    $region40: #{bottleneck_cspb_forward.3} parent=5 // pred_fallthru
      _
  $region6: #{bottleneck_cspb_forward.3} parent=0 // loop_footer
    %s13 = sadd.s32 1, %s9
  $region7: #{bottleneck_cspb_forward.3} parent=0 // loop_footer_branch
    %8 = sbr.rel target = $region3
  $region8: #{bottleneck_cspb_forward.3} parent=0 // loop_exit
    _

// kernel: bottleneck_cspb_forward.5
$region0: #{bottleneck_cspb_forward.5}
  #allocation0 [shape = 'u32[]', space=smem, size = 0x4, offset = 0x4, fixed_abs, tag = 'smem constant byte address 0x4 - core index']
  #allocation1 [shape = 'u32[144,128]{1,0:T(1,128)}', space=vmem, size = 0x12000, scoped, tag = 'internal scratch']
  %s0 = inlined_call_operand.vmem [shape: bf16[512,4], index: 0, kind: input, shape index: {}]
  %s1 = inlined_call_operand.vmem [shape: bf16[512,4], index: 1, kind: input, shape index: {}]
  %s2 = inlined_call_operand.vmem [shape: bf16[4,4], index: 2, kind: input, shape index: {}]
  %s3 = inlined_call_operand.vmem [shape: f32[1,4], index: 3, kind: input, shape index: {}]
  %s4 = inlined_call_operand.vmem [shape: bf16[4,4], index: 4, kind: input, shape index: {}]
  %s5 = inlined_call_operand.vmem [shape: bf16[4,4], index: 5, kind: input, shape index: {}]
  %s6 = inlined_call_operand.vmem [shape: f32[1,4], index: 6, kind: input, shape index: {}]
  %s7 = inlined_call_operand.vmem [shape: f32[512,4], index: 7, kind: output, shape index: {}]
  %s8 = sld [smem:[#allocation0]]
  $region61: #{bottleneck_cspb_forward.5} parent=0
    _
  %s10 = ssub.s32 1, %s8
  %s11 = scalar_select 0, %s10, %s8
  loop: start=0, step=1, limit=4
  $region2: #{bottleneck_cspb_forward.5} parent=0 // loop_pre_header
    _
  $region3: #{bottleneck_cspb_forward.5} parent=0 // loop_header
    %s13 = sphi 0, %s17
    %p14 = scmp.ge.s32.totalorder %s13, 4
    %s23 = sphi 0, %s25
    %s26 = sphi 0, %s23
    %s27 = sphi 0, %s26
    %s43 = sphi 0, %s27
    %s49 = sphi 0, %s51
    %s52 = sphi 0, %s49
    %s53 = sphi 0, %s52
    %s69 = sphi 0, %s53
    %s73 = sphi 0, %s73
    %s75 = sphi 0, %s73
    %s76 = sphi 0, %s75
    %s90 = sphi 0, %s76
    %s94 = sphi 0, %s94
    %s96 = sphi 0, %s94
    %s97 = sphi 0, %s96
    %s111 = sphi 0, %s97
    %s115 = sphi 0, %s115
    %s117 = sphi 0, %s115
    %s118 = sphi 0, %s117
    %s132 = sphi 0, %s118
    %s136 = sphi 0, %s136
    %s138 = sphi 0, %s136
    %s139 = sphi 0, %s138
    %s153 = sphi 0, %s139
    %s157 = sphi 0, %s157
    %s159 = sphi 0, %s157
    %s160 = sphi 0, %s159
    %s174 = sphi 0, %s160
    %s180 = sphi 0, %s182
    %s183 = sphi 0, %s180
    %s184 = sphi 0, %s183
    %s200 = sphi 0, %s184
  $region4: #{bottleneck_cspb_forward.5} parent=0 // loop_header_branch
    %16 = sbr.rel (%p14) target = $region8
  $region5: #{bottleneck_cspb_forward.5} parent=0 // loop_body
    %s18 = ssub.s32 %s13, 1
    %s19 = ssub.s32 %s13, 2
    %s20 = sadd.s32 %s13, 1
    %s21 = ssub.s32 %s13, %s20
    %p22 = scmp.eq.s32.totalorder %s21, 0
    %s24 = sadd.s32 %s23, 1
    %s25 = scalar_select %p22, %s23, %s24
    %p28 = pneg %p22
    %p29 = scmp.eq.s32.totalorder %s13, 1
    %p30 = por %p28, %p29
    %p31 = scmp.ne.s32.totalorder %s23, %s26
    %p32 = scmp.eq.s32.totalorder %s13, 0
    %p33 = por %p31, %p32
    %p34 = scmp.ne.s32.totalorder %s23, %s26
    %p35 = scmp.eq.s32.totalorder %s18, 1
    %p36 = por %p34, %p35
    %p37 = scmp.ne.s32.totalorder %s26, %s27
    %p38 = scmp.eq.s32.totalorder %s18, 0
    %p39 = por %p37, %p38
    %p40 = scmp.ne.s32.totalorder %s26, %s27
    %p41 = scmp.eq.s32.totalorder %s19, 1
    %p42 = por %p40, %p41
    %p44 = scmp.ne.s32.totalorder %s27, %s43
    %p45 = scmp.eq.s32.totalorder %s19, 0
    %p46 = por %p44, %p45
    %s47 = ssub.s32 %s13, %s20
    %p48 = scmp.eq.s32.totalorder %s47, 0
    %s50 = sadd.s32 %s49, 1
    %s51 = scalar_select %p48, %s49, %s50
    %p54 = pneg %p48
    %p55 = scmp.eq.s32.totalorder %s13, 1
    %p56 = por %p54, %p55
    %p57 = scmp.ne.s32.totalorder %s49, %s52
    %p58 = scmp.eq.s32.totalorder %s13, 0
    %p59 = por %p57, %p58
    %p60 = scmp.ne.s32.totalorder %s49, %s52
    %p61 = scmp.eq.s32.totalorder %s18, 1
    %p62 = por %p60, %p61
    %p63 = scmp.ne.s32.totalorder %s52, %s53
    %p64 = scmp.eq.s32.totalorder %s18, 0
    %p65 = por %p63, %p64
    %p66 = scmp.ne.s32.totalorder %s52, %s53
    %p67 = scmp.eq.s32.totalorder %s19, 1
    %p68 = por %p66, %p67
    %p70 = scmp.ne.s32.totalorder %s53, %s69
    %p71 = scmp.eq.s32.totalorder %s19, 0
    %p72 = por %p70, %p71
    %s74 = sadd.s32 %s73, 1
    %p77 = scmp.eq.s32.totalorder %s13, 1
    %p78 = scmp.ne.s32.totalorder %s73, %s75
    %p79 = scmp.eq.s32.totalorder %s13, 0
    %p80 = por %p78, %p79
    %p81 = scmp.ne.s32.totalorder %s73, %s75
    %p82 = scmp.eq.s32.totalorder %s18, 1
    %p83 = por %p81, %p82
    %p84 = scmp.ne.s32.totalorder %s75, %s76
    %p85 = scmp.eq.s32.totalorder %s18, 0
    %p86 = por %p84, %p85
    %p87 = scmp.ne.s32.totalorder %s75, %s76
    %p88 = scmp.eq.s32.totalorder %s19, 1
    %p89 = por %p87, %p88
    %p91 = scmp.ne.s32.totalorder %s76, %s90
    %p92 = scmp.eq.s32.totalorder %s19, 0
    %p93 = por %p91, %p92
    %s95 = sadd.s32 %s94, 1
    %p98 = scmp.eq.s32.totalorder %s13, 1
    %p99 = scmp.ne.s32.totalorder %s94, %s96
    %p100 = scmp.eq.s32.totalorder %s13, 0
    %p101 = por %p99, %p100
    %p102 = scmp.ne.s32.totalorder %s94, %s96
    %p103 = scmp.eq.s32.totalorder %s18, 1
    %p104 = por %p102, %p103
    %p105 = scmp.ne.s32.totalorder %s96, %s97
    %p106 = scmp.eq.s32.totalorder %s18, 0
    %p107 = por %p105, %p106
    %p108 = scmp.ne.s32.totalorder %s96, %s97
    %p109 = scmp.eq.s32.totalorder %s19, 1
    %p110 = por %p108, %p109
    %p112 = scmp.ne.s32.totalorder %s97, %s111
    %p113 = scmp.eq.s32.totalorder %s19, 0
    %p114 = por %p112, %p113
    %s116 = sadd.s32 %s115, 1
    %p119 = scmp.eq.s32.totalorder %s13, 1
    %p120 = scmp.ne.s32.totalorder %s115, %s117
    %p121 = scmp.eq.s32.totalorder %s13, 0
    %p122 = por %p120, %p121
    %p123 = scmp.ne.s32.totalorder %s115, %s117
    %p124 = scmp.eq.s32.totalorder %s18, 1
    %p125 = por %p123, %p124
    %p126 = scmp.ne.s32.totalorder %s117, %s118
    %p127 = scmp.eq.s32.totalorder %s18, 0
    %p128 = por %p126, %p127
    %p129 = scmp.ne.s32.totalorder %s117, %s118
    %p130 = scmp.eq.s32.totalorder %s19, 1
    %p131 = por %p129, %p130
    %p133 = scmp.ne.s32.totalorder %s118, %s132
    %p134 = scmp.eq.s32.totalorder %s19, 0
    %p135 = por %p133, %p134
    %s137 = sadd.s32 %s136, 1
    %p140 = scmp.eq.s32.totalorder %s13, 1
    %p141 = scmp.ne.s32.totalorder %s136, %s138
    %p142 = scmp.eq.s32.totalorder %s13, 0
    %p143 = por %p141, %p142
    %p144 = scmp.ne.s32.totalorder %s136, %s138
    %p145 = scmp.eq.s32.totalorder %s18, 1
    %p146 = por %p144, %p145
    %p147 = scmp.ne.s32.totalorder %s138, %s139
    %p148 = scmp.eq.s32.totalorder %s18, 0
    %p149 = por %p147, %p148
    %p150 = scmp.ne.s32.totalorder %s138, %s139
    %p151 = scmp.eq.s32.totalorder %s19, 1
    %p152 = por %p150, %p151
    %p154 = scmp.ne.s32.totalorder %s139, %s153
    %p155 = scmp.eq.s32.totalorder %s19, 0
    %p156 = por %p154, %p155
    %s158 = sadd.s32 %s157, 1
    %p161 = scmp.eq.s32.totalorder %s13, 1
    %p162 = scmp.ne.s32.totalorder %s157, %s159
    %p163 = scmp.eq.s32.totalorder %s13, 0
    %p164 = por %p162, %p163
    %p165 = scmp.ne.s32.totalorder %s157, %s159
    %p166 = scmp.eq.s32.totalorder %s18, 1
    %p167 = por %p165, %p166
    %p168 = scmp.ne.s32.totalorder %s159, %s160
    %p169 = scmp.eq.s32.totalorder %s18, 0
    %p170 = por %p168, %p169
    %p171 = scmp.ne.s32.totalorder %s159, %s160
    %p172 = scmp.eq.s32.totalorder %s19, 1
    %p173 = por %p171, %p172
    %p175 = scmp.ne.s32.totalorder %s160, %s174
    %p176 = scmp.eq.s32.totalorder %s19, 0
    %p177 = por %p175, %p176
    %s178 = ssub.s32 %s13, %s20
    %p179 = scmp.eq.s32.totalorder %s178, 0
    %s181 = sadd.s32 %s180, 1
    %s182 = scalar_select %p179, %s180, %s181
    %p185 = pneg %p179
    %p186 = scmp.eq.s32.totalorder %s13, 1
    %p187 = por %p185, %p186
    %p188 = scmp.ne.s32.totalorder %s180, %s183
    %p189 = scmp.eq.s32.totalorder %s13, 0
    %p190 = por %p188, %p189
    %p191 = scmp.ne.s32.totalorder %s180, %s183
    %p192 = scmp.eq.s32.totalorder %s18, 1
    %p193 = por %p191, %p192
    %p194 = scmp.ne.s32.totalorder %s183, %s184
    %p195 = scmp.eq.s32.totalorder %s18, 0
    %p196 = por %p194, %p195
    %p197 = scmp.ne.s32.totalorder %s183, %s184
    %p198 = scmp.eq.s32.totalorder %s19, 1
    %p199 = por %p197, %p198
    %p201 = scmp.ne.s32.totalorder %s184, %s200
    %p202 = scmp.eq.s32.totalorder %s19, 0
    %p203 = por %p201, %p202
    %p204 = scmp.le.s32.totalorder 1, %s13
    %p205 = scmp.lt.s32.totalorder %s13, 3
    %p206 = pnand %p204, %p205
    %p207 = pneg %p206
    // Predicated region
    $region9: #{bottleneck_cspb_forward.5} parent=5 // pred_check
      _
    $region10: #{bottleneck_cspb_forward.5} parent=5 // pred_check_branch
      %209 = sbr.rel (%p206) target = $region12
    $region11: #{bottleneck_cspb_forward.5} parent=5 // pred_region
      %s210 = ssub.s32 %s13, 1
      // Predicated region
      $region13: #{bottleneck_cspb_forward.5} parent=11 // pred_check
        %p211 = pneg %p86
      $region14: #{bottleneck_cspb_forward.5} parent=11 // pred_check_branch
        %213 = sbr.rel (%p211) target = $region16
      $region15: #{bottleneck_cspb_forward.5} parent=11 // pred_region
        _
      $region16: #{bottleneck_cspb_forward.5} parent=11 // pred_fallthru
        _
      // Predicated region
      $region17: #{bottleneck_cspb_forward.5} parent=11 // pred_check
        %p214 = pneg %p107
      $region18: #{bottleneck_cspb_forward.5} parent=11 // pred_check_branch
        %216 = sbr.rel (%p214) target = $region20
      $region19: #{bottleneck_cspb_forward.5} parent=11 // pred_region
        _
      $region20: #{bottleneck_cspb_forward.5} parent=11 // pred_fallthru
        _
      // Predicated region
      $region21: #{bottleneck_cspb_forward.5} parent=11 // pred_check
        %p217 = pneg %p128
      $region22: #{bottleneck_cspb_forward.5} parent=11 // pred_check_branch
        %219 = sbr.rel (%p217) target = $region24
      $region23: #{bottleneck_cspb_forward.5} parent=11 // pred_region
        _
      $region24: #{bottleneck_cspb_forward.5} parent=11 // pred_fallthru
        _
      // Predicated region
      $region25: #{bottleneck_cspb_forward.5} parent=11 // pred_check
        %p220 = pneg %p149
      $region26: #{bottleneck_cspb_forward.5} parent=11 // pred_check_branch
        %222 = sbr.rel (%p220) target = $region28
      $region27: #{bottleneck_cspb_forward.5} parent=11 // pred_region
        _
      $region28: #{bottleneck_cspb_forward.5} parent=11 // pred_fallthru
        _
      // Predicated region
      $region29: #{bottleneck_cspb_forward.5} parent=11 // pred_check
        %p223 = pneg %p170
      $region30: #{bottleneck_cspb_forward.5} parent=11 // pred_check_branch
        %225 = sbr.rel (%p223) target = $region32
      $region31: #{bottleneck_cspb_forward.5} parent=11 // pred_region
        _
      $region32: #{bottleneck_cspb_forward.5} parent=11 // pred_fallthru
        _
    $region12: #{bottleneck_cspb_forward.5} parent=5 // pred_fallthru
      _
    %p226 = scmp.lt.s32.totalorder %s13, 2
    // Predicated region
    $region33: #{bottleneck_cspb_forward.5} parent=5 // pred_check
      %p227 = pneg %p226
    $region34: #{bottleneck_cspb_forward.5} parent=5 // pred_check_branch
      %229 = sbr.rel (%p227) target = $region36
    $region35: #{bottleneck_cspb_forward.5} parent=5 // pred_region
      // Predicated region
      $region37: #{bottleneck_cspb_forward.5} parent=35 // pred_check
        %p230 = pneg %p33
      $region38: #{bottleneck_cspb_forward.5} parent=35 // pred_check_branch
        %232 = sbr.rel (%p230) target = $region40
      $region39: #{bottleneck_cspb_forward.5} parent=35 // pred_region
        %s233 = smul.u32 32, %s13
        %p234 = scmp.lt.s32.totalorder %s233, 63
        %s235 = scalar_select %p234, %s233, 63
        %s236 = smul.addr %s235, 4
        %s237 = scalar_lea.vmem %s0, %s236
        %s238 = smul.u32 32, %s13
      $region40: #{bottleneck_cspb_forward.5} parent=35 // pred_fallthru
        _
      // Predicated region
      $region41: #{bottleneck_cspb_forward.5} parent=35 // pred_check
        %p239 = pneg %p59
      $region42: #{bottleneck_cspb_forward.5} parent=35 // pred_check_branch
        %241 = sbr.rel (%p239) target = $region44
      $region43: #{bottleneck_cspb_forward.5} parent=35 // pred_region
        %s242 = smul.u32 32, %s13
        %p243 = scmp.lt.s32.totalorder %s242, 63
        %s244 = scalar_select %p243, %s242, 63
        %s245 = smul.addr %s244, 4
        %s246 = scalar_lea.vmem %s1, %s245
        %s247 = smul.u32 32, %s13
      $region44: #{bottleneck_cspb_forward.5} parent=35 // pred_fallthru
        _
    $region36: #{bottleneck_cspb_forward.5} parent=5 // pred_fallthru
      _
    %p248 = scmp.le.s32.totalorder 1, %s13
    %p249 = scmp.lt.s32.totalorder %s13, 3
    %p250 = pnand %p248, %p249
    %p251 = pneg %p250
    // Predicated region
    $region45: #{bottleneck_cspb_forward.5} parent=5 // pred_check
      _
    $region46: #{bottleneck_cspb_forward.5} parent=5 // pred_check_branch
      %253 = sbr.rel (%p250) target = $region48
    $region47: #{bottleneck_cspb_forward.5} parent=5 // pred_region
      %s254 = ssub.s32 %s13, 1
      %s255 = smul.u32 32, %s18
      %p256 = scmp.lt.s32.totalorder %s255, 63
      %s257 = scalar_select %p256, %s255, 63
      %s258 = smul.addr %s257, 4
      %s259 = scalar_lea.vmem %s0, %s258
      %p260 = pneg %p39
      %p261 = pneg %p36
      %s262 = smul.u32 32, %s18
      %p263 = scmp.lt.s32.totalorder %s262, 63
      %s264 = scalar_select %p263, %s262, 63
      %s265 = smul.addr %s264, 4
      %s266 = scalar_lea.vmem %s1, %s265
      %p267 = pneg %p65
      %p268 = pneg %p62
      %p269 = pneg %p86
      %p270 = pneg %p83
      %p271 = pneg %p107
      %p272 = pneg %p104
      %p273 = pneg %p128
      %p274 = pneg %p125
      %p275 = pneg %p149
      %p276 = pneg %p146
      %p277 = pneg %p170
      %p278 = pneg %p167
      %p279 = pneg %p196
      %p280 = pneg %p193
      %s281 = smul.u32 32, %s18
      %p282 = scmp.lt.s32.totalorder %s281, 63
      %s283 = scalar_select %p282, %s281, 63
      %s284 = smul.addr %s283, 8
      %s285 = scalar_lea.vmem %s7, %s284
      %s286 = smul.u32 32, %s18
      %p287 = scmp.lt.s32.totalorder %s286, 63
      %s288 = scalar_select %p287, %s286, 63
      %s289 = smul.addr %s288, 4
      %s290 = scalar_lea.vmem %s0, %s289
      %s291 = smul.u32 32, %s18
      %s292 = smul.u32 32, %s18
      %p293 = scmp.lt.s32.totalorder %s292, 63
      %s294 = scalar_select %p293, %s292, 63
      %s295 = smul.addr %s294, 4
      %s296 = scalar_lea.vmem %s1, %s295
      %s297 = smul.u32 32, %s18
      %s298 = smul.u32 32, %s18
      %p299 = scmp.lt.s32.totalorder %s298, 63
      %s300 = scalar_select %p299, %s298, 63
      %s301 = smul.addr %s300, 8
      %s302 = scalar_lea.vmem %s7, %s301
      %s303 = smul.u32 32, %s18
      %v305 = vld [vmem:[%s296] sm:$0xf]
      %v306 = vld [vmem:[%s296 + $0x4] sm:$0xf]
      %v307 = vld [vmem:[%s296 + $0x8] sm:$0xf]
      %v308 = vld [vmem:[%s296 + $0xc] sm:$0xf]
      %v309 = vld [vmem:[%s296 + $0x10] sm:$0xf]
      %v310 = vld [vmem:[%s296 + $0x14] sm:$0xf]
      %v311 = vld [vmem:[%s296 + $0x18] sm:$0xf]
      %v312 = vld [vmem:[%s296 + $0x1c] sm:$0xf]
      %v313 = vld [vmem:[%s296 + $0x20] sm:$0xf]
      %v314 = vld [vmem:[%s296 + $0x24] sm:$0xf]
      %v315 = vld [vmem:[%s296 + $0x28] sm:$0xf]
      %v316 = vld [vmem:[%s296 + $0x2c] sm:$0xf]
      %v317 = vld [vmem:[%s296 + $0x30] sm:$0xf]
      %v318 = vld [vmem:[%s296 + $0x34] sm:$0xf]
      %v319 = vld [vmem:[%s296 + $0x38] sm:$0xf]
      %v320 = vld [vmem:[%s296 + $0x3c] sm:$0xf]
      %v321 = vld [vmem:[%s296 + $0x40] sm:$0xf]
      %v322 = vld [vmem:[%s296 + $0x44] sm:$0xf]
      %v323 = vld [vmem:[%s296 + $0x48] sm:$0xf]
      %v324 = vld [vmem:[%s296 + $0x4c] sm:$0xf]
      %v325 = vld [vmem:[%s296 + $0x50] sm:$0xf]
      %v326 = vld [vmem:[%s296 + $0x54] sm:$0xf]
      %v327 = vld [vmem:[%s296 + $0x58] sm:$0xf]
      %v328 = vld [vmem:[%s296 + $0x5c] sm:$0xf]
      %v329 = vld [vmem:[%s296 + $0x60] sm:$0xf]
      %v330 = vld [vmem:[%s296 + $0x64] sm:$0xf]
      %v331 = vld [vmem:[%s296 + $0x68] sm:$0xf]
      %v332 = vld [vmem:[%s296 + $0x6c] sm:$0xf]
      %v333 = vld [vmem:[%s296 + $0x70] sm:$0xf]
      %v334 = vld [vmem:[%s296 + $0x74] sm:$0xf]
      %v335 = vld [vmem:[%s296 + $0x78] sm:$0xf]
      %v336 = vld [vmem:[%s296 + $0x7c] sm:$0xf]
      %v337 = vld [vmem:[%s2] sm:$0x3]
      %v338 = vld [vmem:[%s3] sm:$0x1]
      %v340 = vlaneseq
      %v341 = vshrl.u32 %v340, 7
      %v342 = vsub.s32 0, %v341
      %v343 = vrot.slane %v338, %v342
      %v377 = vunpack.c.l.b16 %v305
      %v378 = vunpack.c.l.b16 %v306
      %v379 = vunpack.c.l.b16 %v307
      %v380 = vunpack.c.l.b16 %v308
      %v381 = vunpack.c.l.b16 %v309
      %v382 = vunpack.c.l.b16 %v310
      %v383 = vunpack.c.l.b16 %v311
      %v384 = vunpack.c.l.b16 %v312
      %v385 = vunpack.c.l.b16 %v313
      %v386 = vunpack.c.l.b16 %v314
      %v387 = vunpack.c.l.b16 %v315
      %v388 = vunpack.c.l.b16 %v316
      %v389 = vunpack.c.l.b16 %v317
      %v390 = vunpack.c.l.b16 %v318
      %v391 = vunpack.c.l.b16 %v319
      %v392 = vunpack.c.l.b16 %v320
      %v393 = vunpack.c.l.b16 %v321
      %v394 = vunpack.c.l.b16 %v322
      %v395 = vunpack.c.l.b16 %v323
      %v396 = vunpack.c.l.b16 %v324
      %v397 = vunpack.c.l.b16 %v325
      %v398 = vunpack.c.l.b16 %v326
      %v399 = vunpack.c.l.b16 %v327
      %v400 = vunpack.c.l.b16 %v328
      %v401 = vunpack.c.l.b16 %v329
      %v402 = vunpack.c.l.b16 %v330
      %v403 = vunpack.c.l.b16 %v331
      %v404 = vunpack.c.l.b16 %v332
      %v405 = vunpack.c.l.b16 %v333
      %v406 = vunpack.c.l.b16 %v334
      %v407 = vunpack.c.l.b16 %v335
      %v408 = vunpack.c.l.b16 %v336
      %v409 = vpack.c.b16 %v378, %v377
      %v410 = vpack.c.b16 %v380, %v379
      %v411 = vpack.c.b16 %v382, %v381
      %v412 = vpack.c.b16 %v384, %v383
      %v413 = vpack.c.b16 %v386, %v385
      %v414 = vpack.c.b16 %v388, %v387
      %v415 = vpack.c.b16 %v390, %v389
      %v416 = vpack.c.b16 %v392, %v391
      %v417 = vpack.c.b16 %v394, %v393
      %v418 = vpack.c.b16 %v396, %v395
      %v419 = vpack.c.b16 %v398, %v397
      %v420 = vpack.c.b16 %v400, %v399
      %v421 = vpack.c.b16 %v402, %v401
      %v422 = vpack.c.b16 %v404, %v403
      %v423 = vpack.c.b16 %v406, %v405
      %v424 = vpack.c.b16 %v408, %v407
      %vm425 = vcmask 31744
      %v427 = vsel %vm425, %v409, 0
      %v430 = vsel %vm425, %v410, 0
      %v433 = vsel %vm425, %v411, 0
      %v436 = vsel %vm425, %v412, 0
      %v439 = vsel %vm425, %v413, 0
      %v442 = vsel %vm425, %v414, 0
      %v445 = vsel %vm425, %v415, 0
      %v448 = vsel %vm425, %v416, 0
      %v451 = vsel %vm425, %v417, 0
      %v454 = vsel %vm425, %v418, 0
      %v457 = vsel %vm425, %v419, 0
      %v460 = vsel %vm425, %v420, 0
      %v463 = vsel %vm425, %v421, 0
      %v466 = vsel %vm425, %v422, 0
      %v469 = vsel %vm425, %v423, 0
      %v472 = vsel %vm425, %v424, 0
      %vm474 = vcmask 1041408
      %v476 = vsel %vm474, %v337, 0
      %478 = vmatprep.subr.bf16.mxu0 0
      %479 = vmatpush1.bf16.msra.mxu0 %v476
      %480 = vmatprep.subr.bf16.mxu0 0
      %481 = vmatpush1.bf16.msra.mxu0 0
      %482 = vmatprep.subr.bf16.mxu0 0
      %483 = vmatpush1.bf16.msra.mxu0 0
      %484 = vmatprep.subr.bf16.mxu0 0
      %485 = vmatpush1.bf16.msra.mxu0 0
      %486 = vmatprep.subr.bf16.mxu0 0
      %487 = vmatpush1.bf16.msra.mxu0 0
      %488 = vmatprep.subr.bf16.mxu0 0
      %489 = vmatpush1.bf16.msra.mxu0 0
      %490 = vmatprep.subr.bf16.mxu0 0
      %491 = vmatpush1.bf16.msra.mxu0 0
      %492 = vmatprep.subr.bf16.mxu0 0
      %493 = vmatpush1.bf16.msra.mxu0 0
      %494 = vmatprep.subr.bf16.mxu0 0
      %495 = vmatpush1.bf16.msra.mxu0 0
      %496 = vmatprep.subr.bf16.mxu0 0
      %497 = vmatpush1.bf16.msra.mxu0 0
      %498 = vmatprep.subr.bf16.mxu0 0
      %499 = vmatpush1.bf16.msra.mxu0 0
      %500 = vmatprep.subr.bf16.mxu0 0
      %501 = vmatpush1.bf16.msra.mxu0 0
      %502 = vmatprep.subr.bf16.mxu0 0
      %503 = vmatpush1.bf16.msra.mxu0 0
      %504 = vmatprep.subr.bf16.mxu0 0
      %505 = vmatpush1.bf16.msra.mxu0 0
      %506 = vmatprep.subr.bf16.mxu0 0
      %507 = vmatpush1.bf16.msra.mxu0 0
      %508 = vmatprep.subr.bf16.mxu0 0
      %509 = vmatpush1.bf16.msra.mxu0 0
      %510 = vmatprep.mubr.bf16.mxu0 0
      %511 = vmatmul.mubr.bf16.gmra.mrb[0].mxu0 %v427
      %v512 = vpop.f32.mrb[0].mxu0
      %v513 = vadd.f32 %v343, %v512
      %v514 = vpop.f32.mrb[0].mxu0
      %v515 = vpop.f32.mrb[0].mxu0
      %v516 = vadd.f32 %v343, %v515
      %v517 = vpop.f32.mrb[0].mxu0
      %518 = vmatprep.mubr.bf16.mxu0 0
      %519 = vmatmul.mubr.bf16.gmra.mrb[0].mxu0 %v430
      %v520 = vpop.f32.mrb[0].mxu0
      %v521 = vadd.f32 %v343, %v520
      %v522 = vpop.f32.mrb[0].mxu0
      %v523 = vpop.f32.mrb[0].mxu0
      %v524 = vadd.f32 %v343, %v523
      %v525 = vpop.f32.mrb[0].mxu0
      %526 = vmatprep.mubr.bf16.mxu0 0
      %527 = vmatmul.mubr.bf16.gmra.mrb[0].mxu0 %v433
      %v528 = vpop.f32.mrb[0].mxu0
      %v529 = vadd.f32 %v343, %v528
      %v530 = vpop.f32.mrb[0].mxu0
      %v531 = vpop.f32.mrb[0].mxu0
      %v532 = vadd.f32 %v343, %v531
      %v533 = vpop.f32.mrb[0].mxu0
      %534 = vmatprep.mubr.bf16.mxu0 0
      %535 = vmatmul.mubr.bf16.gmra.mrb[0].mxu0 %v436
      %v536 = vpop.f32.mrb[0].mxu0
      %v537 = vadd.f32 %v343, %v536
      %v538 = vpop.f32.mrb[0].mxu0
      %v539 = vpop.f32.mrb[0].mxu0
      %v540 = vadd.f32 %v343, %v539
      %v541 = vpop.f32.mrb[0].mxu0
      %542 = vmatprep.mubr.bf16.mxu0 0
      %543 = vmatmul.mubr.bf16.gmra.mrb[0].mxu0 %v439
      %v544 = vpop.f32.mrb[0].mxu0
      %v545 = vadd.f32 %v343, %v544
      %v546 = vpop.f32.mrb[0].mxu0
      %v547 = vpop.f32.mrb[0].mxu0
      %v548 = vadd.f32 %v343, %v547
      %v549 = vpop.f32.mrb[0].mxu0
      %550 = vmatprep.mubr.bf16.mxu0 0
      %551 = vmatmul.mubr.bf16.gmra.mrb[0].mxu0 %v442
      %v552 = vpop.f32.mrb[0].mxu0
      %v553 = vadd.f32 %v343, %v552
      %v554 = vpop.f32.mrb[0].mxu0
      %v555 = vpop.f32.mrb[0].mxu0
      %v556 = vadd.f32 %v343, %v555
      %v557 = vpop.f32.mrb[0].mxu0
      %558 = vmatprep.mubr.bf16.mxu0 0
      %559 = vmatmul.mubr.bf16.gmra.mrb[0].mxu0 %v445
      %v560 = vpop.f32.mrb[0].mxu0
      %v561 = vadd.f32 %v343, %v560
      %v562 = vpop.f32.mrb[0].mxu0
      %v563 = vpop.f32.mrb[0].mxu0
      %v564 = vadd.f32 %v343, %v563
      %v565 = vpop.f32.mrb[0].mxu0
      %566 = vmatprep.mubr.bf16.mxu0 0
      %567 = vmatmul.mubr.bf16.gmra.mrb[0].mxu0 %v448
      %v568 = vpop.f32.mrb[0].mxu0
      %v569 = vadd.f32 %v343, %v568
      %v570 = vpop.f32.mrb[0].mxu0
      %v571 = vpop.f32.mrb[0].mxu0
      %v572 = vadd.f32 %v343, %v571
      %v573 = vpop.f32.mrb[0].mxu0
      %574 = vmatprep.mubr.bf16.mxu0 0
      %575 = vmatmul.mubr.bf16.gmra.mrb[0].mxu0 %v451
      %v576 = vpop.f32.mrb[0].mxu0
      %v577 = vadd.f32 %v343, %v576
      %v578 = vpop.f32.mrb[0].mxu0
      %v579 = vpop.f32.mrb[0].mxu0
      %v580 = vadd.f32 %v343, %v579
      %v581 = vpop.f32.mrb[0].mxu0
      %582 = vmatprep.mubr.bf16.mxu0 0
      %583 = vmatmul.mubr.bf16.gmra.mrb[0].mxu0 %v454
      %v584 = vpop.f32.mrb[0].mxu0
      %v585 = vadd.f32 %v343, %v584
      %v586 = vpop.f32.mrb[0].mxu0
      %v587 = vpop.f32.mrb[0].mxu0
      %v588 = vadd.f32 %v343, %v587
      %v589 = vpop.f32.mrb[0].mxu0
      %590 = vmatprep.mubr.bf16.mxu0 0
      %591 = vmatmul.mubr.bf16.gmra.mrb[0].mxu0 %v457
      %v592 = vpop.f32.mrb[0].mxu0
      %v593 = vadd.f32 %v343, %v592
      %v594 = vpop.f32.mrb[0].mxu0
      %v595 = vpop.f32.mrb[0].mxu0
      %v596 = vadd.f32 %v343, %v595
      %v597 = vpop.f32.mrb[0].mxu0
      %598 = vmatprep.mubr.bf16.mxu0 0
      %599 = vmatmul.mubr.bf16.gmra.mrb[0].mxu0 %v460
      %v600 = vpop.f32.mrb[0].mxu0
      %v601 = vadd.f32 %v343, %v600
      %v602 = vpop.f32.mrb[0].mxu0
      %v603 = vpop.f32.mrb[0].mxu0
      %v604 = vadd.f32 %v343, %v603
      %v605 = vpop.f32.mrb[0].mxu0
      %606 = vmatprep.mubr.bf16.mxu0 0
      %607 = vmatmul.mubr.bf16.gmra.mrb[0].mxu0 %v463
      %v608 = vpop.f32.mrb[0].mxu0
      %v609 = vadd.f32 %v343, %v608
      %v610 = vpop.f32.mrb[0].mxu0
      %v611 = vpop.f32.mrb[0].mxu0
      %v612 = vadd.f32 %v343, %v611
      %v613 = vpop.f32.mrb[0].mxu0
      %614 = vmatprep.mubr.bf16.mxu0 0
      %615 = vmatmul.mubr.bf16.gmra.mrb[0].mxu0 %v466
      %v616 = vpop.f32.mrb[0].mxu0
      %v617 = vadd.f32 %v343, %v616
      %v618 = vpop.f32.mrb[0].mxu0
      %v619 = vpop.f32.mrb[0].mxu0
      %v620 = vadd.f32 %v343, %v619
      %v621 = vpop.f32.mrb[0].mxu0
      %622 = vmatprep.mubr.bf16.mxu0 0
      %623 = vmatmul.mubr.bf16.gmra.mrb[0].mxu0 %v469
      %v624 = vpop.f32.mrb[0].mxu0
      %v625 = vadd.f32 %v343, %v624
      %v626 = vpop.f32.mrb[0].mxu0
      %v627 = vpop.f32.mrb[0].mxu0
      %v628 = vadd.f32 %v343, %v627
      %v629 = vpop.f32.mrb[0].mxu0
      %630 = vmatprep.mubr.bf16.mxu0 0
      %631 = vmatmul.mubr.bf16.gmra.mrb[0].mxu0 %v472
      %v632 = vpop.f32.mrb[0].mxu0
      %v633 = vadd.f32 %v343, %v632
      %v634 = vpop.f32.mrb[0].mxu0
      %v635 = vpop.f32.mrb[0].mxu0
      %v636 = vadd.f32 %v343, %v635
      %v637 = vpop.f32.mrb[0].mxu0
      %638 = vdwg.mxu0
      %v639 = vmax.f32 %v513, 0.0
      %v640 = vmax.f32 %v516, 0.0
      %v641 = vmax.f32 %v521, 0.0
      %v642 = vmax.f32 %v524, 0.0
      %v643 = vmax.f32 %v529, 0.0
      %v644 = vmax.f32 %v532, 0.0
      %v645 = vmax.f32 %v537, 0.0
      %v646 = vmax.f32 %v540, 0.0
      %v647 = vmax.f32 %v545, 0.0
      %v648 = vmax.f32 %v548, 0.0
      %v649 = vmax.f32 %v553, 0.0
      %v650 = vmax.f32 %v556, 0.0
      %v651 = vmax.f32 %v561, 0.0
      %v652 = vmax.f32 %v564, 0.0
      %v653 = vmax.f32 %v569, 0.0
      %v654 = vmax.f32 %v572, 0.0
      %v655 = vmax.f32 %v577, 0.0
      %v656 = vmax.f32 %v580, 0.0
      %v657 = vmax.f32 %v585, 0.0
      %v658 = vmax.f32 %v588, 0.0
      %v659 = vmax.f32 %v593, 0.0
      %v660 = vmax.f32 %v596, 0.0
      %v661 = vmax.f32 %v601, 0.0
      %v662 = vmax.f32 %v604, 0.0
      %v663 = vmax.f32 %v609, 0.0
      %v664 = vmax.f32 %v612, 0.0
      %v665 = vmax.f32 %v617, 0.0
      %v666 = vmax.f32 %v620, 0.0
      %v667 = vmax.f32 %v625, 0.0
      %v668 = vmax.f32 %v628, 0.0
      %v669 = vmax.f32 %v633, 0.0
      %v670 = vmax.f32 %v636, 0.0
      %v671 = vld [vmem:[%s290] sm:$0xf]
      %v672 = vld [vmem:[%s290 + $0x4] sm:$0xf]
      %v673 = vld [vmem:[%s290 + $0x8] sm:$0xf]
      %v674 = vld [vmem:[%s290 + $0xc] sm:$0xf]
      %v675 = vld [vmem:[%s290 + $0x10] sm:$0xf]
      %v676 = vld [vmem:[%s290 + $0x14] sm:$0xf]
      %v677 = vld [vmem:[%s290 + $0x18] sm:$0xf]
      %v678 = vld [vmem:[%s290 + $0x1c] sm:$0xf]
      %v679 = vld [vmem:[%s290 + $0x20] sm:$0xf]
      %v680 = vld [vmem:[%s290 + $0x24] sm:$0xf]
      %v681 = vld [vmem:[%s290 + $0x28] sm:$0xf]
      %v682 = vld [vmem:[%s290 + $0x2c] sm:$0xf]
      %v683 = vld [vmem:[%s290 + $0x30] sm:$0xf]
      %v684 = vld [vmem:[%s290 + $0x34] sm:$0xf]
      %v685 = vld [vmem:[%s290 + $0x38] sm:$0xf]
      %v686 = vld [vmem:[%s290 + $0x3c] sm:$0xf]
      %v687 = vld [vmem:[%s290 + $0x40] sm:$0xf]
      %v688 = vld [vmem:[%s290 + $0x44] sm:$0xf]
      %v689 = vld [vmem:[%s290 + $0x48] sm:$0xf]
      %v690 = vld [vmem:[%s290 + $0x4c] sm:$0xf]
      %v691 = vld [vmem:[%s290 + $0x50] sm:$0xf]
      %v692 = vld [vmem:[%s290 + $0x54] sm:$0xf]
      %v693 = vld [vmem:[%s290 + $0x58] sm:$0xf]
      %v694 = vld [vmem:[%s290 + $0x5c] sm:$0xf]
      %v695 = vld [vmem:[%s290 + $0x60] sm:$0xf]
      %v696 = vld [vmem:[%s290 + $0x64] sm:$0xf]
      %v697 = vld [vmem:[%s290 + $0x68] sm:$0xf]
      %v698 = vld [vmem:[%s290 + $0x6c] sm:$0xf]
      %v699 = vld [vmem:[%s290 + $0x70] sm:$0xf]
      %v700 = vld [vmem:[%s290 + $0x74] sm:$0xf]
      %v701 = vld [vmem:[%s290 + $0x78] sm:$0xf]
      %v702 = vld [vmem:[%s290 + $0x7c] sm:$0xf]
      %v703 = vld [vmem:[%s4] sm:$0x3]
      %v704 = vpack.c.bf16 %v640, %v639
      %v705 = vpack.c.bf16 %v642, %v641
      %v706 = vpack.c.bf16 %v644, %v643
      %v707 = vpack.c.bf16 %v646, %v645
      %v708 = vpack.c.bf16 %v648, %v647
      %v709 = vpack.c.bf16 %v650, %v649
      %v710 = vpack.c.bf16 %v652, %v651
      %v711 = vpack.c.bf16 %v654, %v653
      %v712 = vpack.c.bf16 %v656, %v655
      %v713 = vpack.c.bf16 %v658, %v657
      %v714 = vpack.c.bf16 %v660, %v659
      %v715 = vpack.c.bf16 %v662, %v661
      %v716 = vpack.c.bf16 %v664, %v663
      %v717 = vpack.c.bf16 %v666, %v665
      %v718 = vpack.c.bf16 %v668, %v667
      %v719 = vpack.c.bf16 %v670, %v669
      %v720 = vld [vmem:[%s5] sm:$0x3]
      %v722 = vsel %vm425, %v704, 0
      %v725 = vsel %vm425, %v705, 0
      %v728 = vsel %vm425, %v706, 0
      %v731 = vsel %vm425, %v707, 0
      %v734 = vsel %vm425, %v708, 0
      %v737 = vsel %vm425, %v709, 0
      %v740 = vsel %vm425, %v710, 0
      %v743 = vsel %vm425, %v711, 0
      %v746 = vsel %vm425, %v712, 0
      %v749 = vsel %vm425, %v713, 0
      %v752 = vsel %vm425, %v714, 0
      %v755 = vsel %vm425, %v715, 0
      %v758 = vsel %vm425, %v716, 0
      %v761 = vsel %vm425, %v717, 0
      %v764 = vsel %vm425, %v718, 0
      %v767 = vsel %vm425, %v719, 0
      %v770 = vsel %vm474, %v720, 0
      %772 = vmatprep.subr.bf16.mxu0 0
      %773 = vmatpush1.bf16.msra.mxu0 %v770
      %774 = vmatprep.subr.bf16.mxu0 0
      %775 = vmatpush1.bf16.msra.mxu0 0
      %776 = vmatprep.subr.bf16.mxu0 0
      %777 = vmatpush1.bf16.msra.mxu0 0
      %778 = vmatprep.subr.bf16.mxu0 0
      %779 = vmatpush1.bf16.msra.mxu0 0
      %780 = vmatprep.subr.bf16.mxu0 0
      %781 = vmatpush1.bf16.msra.mxu0 0
      %782 = vmatprep.subr.bf16.mxu0 0
      %783 = vmatpush1.bf16.msra.mxu0 0
      %784 = vmatprep.subr.bf16.mxu0 0
      %785 = vmatpush1.bf16.msra.mxu0 0
      %786 = vmatprep.subr.bf16.mxu0 0
      %787 = vmatpush1.bf16.msra.mxu0 0
      %788 = vmatprep.subr.bf16.mxu0 0
      %789 = vmatpush1.bf16.msra.mxu0 0
      %790 = vmatprep.subr.bf16.mxu0 0
      %791 = vmatpush1.bf16.msra.mxu0 0
      %792 = vmatprep.subr.bf16.mxu0 0
      %793 = vmatpush1.bf16.msra.mxu0 0
      %794 = vmatprep.subr.bf16.mxu0 0
      %795 = vmatpush1.bf16.msra.mxu0 0
      %796 = vmatprep.subr.bf16.mxu0 0
      %797 = vmatpush1.bf16.msra.mxu0 0
      %798 = vmatprep.subr.bf16.mxu0 0
      %799 = vmatpush1.bf16.msra.mxu0 0
      %800 = vmatprep.subr.bf16.mxu0 0
      %801 = vmatpush1.bf16.msra.mxu0 0
      %802 = vmatprep.subr.bf16.mxu0 0
      %803 = vmatpush1.bf16.msra.mxu0 0
      %804 = vmatprep.mubr.bf16.mxu0 0
      %805 = vmatmul.mubr.bf16.gmra.mrb[0].mxu0 %v722
      %v806 = vpop.f32.mrb[0].mxu0
      %v807 = vadd.f32 0.0, %v806
      %v808 = vpop.f32.mrb[0].mxu0
      %v809 = vpop.f32.mrb[0].mxu0
      %v810 = vadd.f32 0.0, %v809
      %v811 = vpop.f32.mrb[0].mxu0
      %812 = vmatprep.mubr.bf16.mxu0 0
      %813 = vmatmul.mubr.bf16.gmra.mrb[0].mxu0 %v725
      %v814 = vpop.f32.mrb[0].mxu0
      %v815 = vadd.f32 0.0, %v814
      %v816 = vpop.f32.mrb[0].mxu0
      %v817 = vpop.f32.mrb[0].mxu0
      %v818 = vadd.f32 0.0, %v817
      %v819 = vpop.f32.mrb[0].mxu0
      %820 = vmatprep.mubr.bf16.mxu0 0
      %821 = vmatmul.mubr.bf16.gmra.mrb[0].mxu0 %v728
      %v822 = vpop.f32.mrb[0].mxu0
      %v823 = vadd.f32 0.0, %v822
      %v824 = vpop.f32.mrb[0].mxu0
      %v825 = vpop.f32.mrb[0].mxu0
      %v826 = vadd.f32 0.0, %v825
      %v827 = vpop.f32.mrb[0].mxu0
      %828 = vmatprep.mubr.bf16.mxu0 0
      %829 = vmatmul.mubr.bf16.gmra.mrb[0].mxu0 %v731
      %v830 = vpop.f32.mrb[0].mxu0
      %v831 = vadd.f32 0.0, %v830
      %v832 = vpop.f32.mrb[0].mxu0
      %v833 = vpop.f32.mrb[0].mxu0
      %v834 = vadd.f32 0.0, %v833
      %v835 = vpop.f32.mrb[0].mxu0
      %836 = vmatprep.mubr.bf16.mxu0 0
      %837 = vmatmul.mubr.bf16.gmra.mrb[0].mxu0 %v734
      %v838 = vpop.f32.mrb[0].mxu0
      %v839 = vadd.f32 0.0, %v838
      %v840 = vpop.f32.mrb[0].mxu0
      %v841 = vpop.f32.mrb[0].mxu0
      %v842 = vadd.f32 0.0, %v841
      %v843 = vpop.f32.mrb[0].mxu0
      %844 = vmatprep.mubr.bf16.mxu0 0
      %845 = vmatmul.mubr.bf16.gmra.mrb[0].mxu0 %v737
      %v846 = vpop.f32.mrb[0].mxu0
      %v847 = vadd.f32 0.0, %v846
      %v848 = vpop.f32.mrb[0].mxu0
      %v849 = vpop.f32.mrb[0].mxu0
      %v850 = vadd.f32 0.0, %v849
      %v851 = vpop.f32.mrb[0].mxu0
      %852 = vmatprep.mubr.bf16.mxu0 0
      %853 = vmatmul.mubr.bf16.gmra.mrb[0].mxu0 %v740
      %v854 = vpop.f32.mrb[0].mxu0
      %v855 = vadd.f32 0.0, %v854
      %v856 = vpop.f32.mrb[0].mxu0
      %v857 = vpop.f32.mrb[0].mxu0
      %v858 = vadd.f32 0.0, %v857
      %v859 = vpop.f32.mrb[0].mxu0
      %860 = vmatprep.mubr.bf16.mxu0 0
      %861 = vmatmul.mubr.bf16.gmra.mrb[0].mxu0 %v743
      %v862 = vpop.f32.mrb[0].mxu0
      %v863 = vadd.f32 0.0, %v862
      %v864 = vpop.f32.mrb[0].mxu0
      %v865 = vpop.f32.mrb[0].mxu0
      %v866 = vadd.f32 0.0, %v865
      %v867 = vpop.f32.mrb[0].mxu0
      %868 = vmatprep.mubr.bf16.mxu0 0
      %869 = vmatmul.mubr.bf16.gmra.mrb[0].mxu0 %v746
      %v870 = vpop.f32.mrb[0].mxu0
      %v871 = vadd.f32 0.0, %v870
      %v872 = vpop.f32.mrb[0].mxu0
      %v873 = vpop.f32.mrb[0].mxu0
      %v874 = vadd.f32 0.0, %v873
      %v875 = vpop.f32.mrb[0].mxu0
      %876 = vmatprep.mubr.bf16.mxu0 0
      %877 = vmatmul.mubr.bf16.gmra.mrb[0].mxu0 %v749
      %v878 = vpop.f32.mrb[0].mxu0
      %v879 = vadd.f32 0.0, %v878
      %v880 = vpop.f32.mrb[0].mxu0
      %v881 = vpop.f32.mrb[0].mxu0
      %v882 = vadd.f32 0.0, %v881
      %v883 = vpop.f32.mrb[0].mxu0
      %884 = vmatprep.mubr.bf16.mxu0 0
      %885 = vmatmul.mubr.bf16.gmra.mrb[0].mxu0 %v752
      %v886 = vpop.f32.mrb[0].mxu0
      %v887 = vadd.f32 0.0, %v886
      %v888 = vpop.f32.mrb[0].mxu0
      %v889 = vpop.f32.mrb[0].mxu0
      %v890 = vadd.f32 0.0, %v889
      %v891 = vpop.f32.mrb[0].mxu0
      %892 = vmatprep.mubr.bf16.mxu0 0
      %893 = vmatmul.mubr.bf16.gmra.mrb[0].mxu0 %v755
      %v894 = vpop.f32.mrb[0].mxu0
      %v895 = vadd.f32 0.0, %v894
      %v896 = vpop.f32.mrb[0].mxu0
      %v897 = vpop.f32.mrb[0].mxu0
      %v898 = vadd.f32 0.0, %v897
      %v899 = vpop.f32.mrb[0].mxu0
      %900 = vmatprep.mubr.bf16.mxu0 0
      %901 = vmatmul.mubr.bf16.gmra.mrb[0].mxu0 %v758
      %v902 = vpop.f32.mrb[0].mxu0
      %v903 = vadd.f32 0.0, %v902
      %v904 = vpop.f32.mrb[0].mxu0
      %v905 = vpop.f32.mrb[0].mxu0
      %v906 = vadd.f32 0.0, %v905
      %v907 = vpop.f32.mrb[0].mxu0
      %908 = vmatprep.mubr.bf16.mxu0 0
      %909 = vmatmul.mubr.bf16.gmra.mrb[0].mxu0 %v761
      %v910 = vpop.f32.mrb[0].mxu0
      %v911 = vadd.f32 0.0, %v910
      %v912 = vpop.f32.mrb[0].mxu0
      %v913 = vpop.f32.mrb[0].mxu0
      %v914 = vadd.f32 0.0, %v913
      %v915 = vpop.f32.mrb[0].mxu0
      %916 = vmatprep.mubr.bf16.mxu0 0
      %917 = vmatmul.mubr.bf16.gmra.mrb[0].mxu0 %v764
      %v918 = vpop.f32.mrb[0].mxu0
      %v919 = vadd.f32 0.0, %v918
      %v920 = vpop.f32.mrb[0].mxu0
      %v921 = vpop.f32.mrb[0].mxu0
      %v922 = vadd.f32 0.0, %v921
      %v923 = vpop.f32.mrb[0].mxu0
      %924 = vmatprep.mubr.bf16.mxu0 0
      %925 = vmatmul.mubr.bf16.gmra.mrb[0].mxu0 %v767
      %v926 = vpop.f32.mrb[0].mxu0
      %v927 = vadd.f32 0.0, %v926
      %v928 = vpop.f32.mrb[0].mxu0
      %v929 = vpop.f32.mrb[0].mxu0
      %v930 = vadd.f32 0.0, %v929
      %v931 = vpop.f32.mrb[0].mxu0
      %932 = vdwg.mxu0
      %v965 = vunpack.c.l.b16 %v671
      %v966 = vunpack.c.l.b16 %v672
      %v967 = vunpack.c.l.b16 %v673
      %v968 = vunpack.c.l.b16 %v674
      %v969 = vunpack.c.l.b16 %v675
      %v970 = vunpack.c.l.b16 %v676
      %v971 = vunpack.c.l.b16 %v677
      %v972 = vunpack.c.l.b16 %v678
      %v973 = vunpack.c.l.b16 %v679
      %v974 = vunpack.c.l.b16 %v680
      %v975 = vunpack.c.l.b16 %v681
      %v976 = vunpack.c.l.b16 %v682
      %v977 = vunpack.c.l.b16 %v683
      %v978 = vunpack.c.l.b16 %v684
      %v979 = vunpack.c.l.b16 %v685
      %v980 = vunpack.c.l.b16 %v686
      %v981 = vunpack.c.l.b16 %v687
      %v982 = vunpack.c.l.b16 %v688
      %v983 = vunpack.c.l.b16 %v689
      %v984 = vunpack.c.l.b16 %v690
      %v985 = vunpack.c.l.b16 %v691
      %v986 = vunpack.c.l.b16 %v692
      %v987 = vunpack.c.l.b16 %v693
      %v988 = vunpack.c.l.b16 %v694
      %v989 = vunpack.c.l.b16 %v695
      %v990 = vunpack.c.l.b16 %v696
      %v991 = vunpack.c.l.b16 %v697
      %v992 = vunpack.c.l.b16 %v698
      %v993 = vunpack.c.l.b16 %v699
      %v994 = vunpack.c.l.b16 %v700
      %v995 = vunpack.c.l.b16 %v701
      %v996 = vunpack.c.l.b16 %v702
      %v997 = vpack.c.b16 %v966, %v965
      %v998 = vpack.c.b16 %v968, %v967
      %v999 = vpack.c.b16 %v970, %v969
      %v1000 = vpack.c.b16 %v972, %v971
      %v1001 = vpack.c.b16 %v974, %v973
      %v1002 = vpack.c.b16 %v976, %v975
      %v1003 = vpack.c.b16 %v978, %v977
      %v1004 = vpack.c.b16 %v980, %v979
      %v1005 = vpack.c.b16 %v982, %v981
      %v1006 = vpack.c.b16 %v984, %v983
      %v1007 = vpack.c.b16 %v986, %v985
      %v1008 = vpack.c.b16 %v988, %v987
      %v1009 = vpack.c.b16 %v990, %v989
      %v1010 = vpack.c.b16 %v992, %v991
      %v1011 = vpack.c.b16 %v994, %v993
      %v1012 = vpack.c.b16 %v996, %v995
      %v1014 = vsel %vm425, %v997, 0
      %v1017 = vsel %vm425, %v998, 0
      %v1020 = vsel %vm425, %v999, 0
      %v1023 = vsel %vm425, %v1000, 0
      %v1026 = vsel %vm425, %v1001, 0
      %v1029 = vsel %vm425, %v1002, 0
      %v1032 = vsel %vm425, %v1003, 0
      %v1035 = vsel %vm425, %v1004, 0
      %v1038 = vsel %vm425, %v1005, 0
      %v1041 = vsel %vm425, %v1006, 0
      %v1044 = vsel %vm425, %v1007, 0
      %v1047 = vsel %vm425, %v1008, 0
      %v1050 = vsel %vm425, %v1009, 0
      %v1053 = vsel %vm425, %v1010, 0
      %v1056 = vsel %vm425, %v1011, 0
      %v1059 = vsel %vm425, %v1012, 0
      %v1062 = vsel %vm474, %v703, 0
      %1064 = vmatprep.subr.bf16.mxu0 0
      %1065 = vmatpush1.bf16.msra.mxu0 %v1062
      %1066 = vmatprep.subr.bf16.mxu0 0
      %1067 = vmatpush1.bf16.msra.mxu0 0
      %1068 = vmatprep.subr.bf16.mxu0 0
      %1069 = vmatpush1.bf16.msra.mxu0 0
      %1070 = vmatprep.subr.bf16.mxu0 0
      %1071 = vmatpush1.bf16.msra.mxu0 0
      %1072 = vmatprep.subr.bf16.mxu0 0
      %1073 = vmatpush1.bf16.msra.mxu0 0
      %1074 = vmatprep.subr.bf16.mxu0 0
      %1075 = vmatpush1.bf16.msra.mxu0 0
      %1076 = vmatprep.subr.bf16.mxu0 0
      %1077 = vmatpush1.bf16.msra.mxu0 0
      %1078 = vmatprep.subr.bf16.mxu0 0
      %1079 = vmatpush1.bf16.msra.mxu0 0
      %1080 = vmatprep.subr.bf16.mxu0 0
      %1081 = vmatpush1.bf16.msra.mxu0 0
      %1082 = vmatprep.subr.bf16.mxu0 0
      %1083 = vmatpush1.bf16.msra.mxu0 0
      %1084 = vmatprep.subr.bf16.mxu0 0
      %1085 = vmatpush1.bf16.msra.mxu0 0
      %1086 = vmatprep.subr.bf16.mxu0 0
      %1087 = vmatpush1.bf16.msra.mxu0 0
      %1088 = vmatprep.subr.bf16.mxu0 0
      %1089 = vmatpush1.bf16.msra.mxu0 0
      %1090 = vmatprep.subr.bf16.mxu0 0
      %1091 = vmatpush1.bf16.msra.mxu0 0
      %1092 = vmatprep.subr.bf16.mxu0 0
      %1093 = vmatpush1.bf16.msra.mxu0 0
      %1094 = vmatprep.subr.bf16.mxu0 0
      %1095 = vmatpush1.bf16.msra.mxu0 0
      %1096 = vmatprep.mubr.bf16.mxu0 0
      %1097 = vmatmul.mubr.bf16.gmra.mrb[0].mxu0 %v1014
      %v1098 = vpop.f32.mrb[0].mxu0
      %v1099 = vadd.f32 %v807, %v1098
      %v1100 = vpop.f32.mrb[0].mxu0
      %v1101 = vpop.f32.mrb[0].mxu0
      %v1102 = vadd.f32 %v810, %v1101
      %v1103 = vpop.f32.mrb[0].mxu0
      %1104 = vmatprep.mubr.bf16.mxu0 0
      %1105 = vmatmul.mubr.bf16.gmra.mrb[0].mxu0 %v1017
      %v1106 = vpop.f32.mrb[0].mxu0
      %v1107 = vadd.f32 %v815, %v1106
      %v1108 = vpop.f32.mrb[0].mxu0
      %v1109 = vpop.f32.mrb[0].mxu0
      %v1110 = vadd.f32 %v818, %v1109
      %v1111 = vpop.f32.mrb[0].mxu0
      %1112 = vmatprep.mubr.bf16.mxu0 0
      %1113 = vmatmul.mubr.bf16.gmra.mrb[0].mxu0 %v1020
      %v1114 = vpop.f32.mrb[0].mxu0
      %v1115 = vadd.f32 %v823, %v1114
      %v1116 = vpop.f32.mrb[0].mxu0
      %v1117 = vpop.f32.mrb[0].mxu0
      %v1118 = vadd.f32 %v826, %v1117
      %v1119 = vpop.f32.mrb[0].mxu0
      %1120 = vmatprep.mubr.bf16.mxu0 0
      %1121 = vmatmul.mubr.bf16.gmra.mrb[0].mxu0 %v1023
      %v1122 = vpop.f32.mrb[0].mxu0
      %v1123 = vadd.f32 %v831, %v1122
      %v1124 = vpop.f32.mrb[0].mxu0
      %v1125 = vpop.f32.mrb[0].mxu0
      %v1126 = vadd.f32 %v834, %v1125
      %v1127 = vpop.f32.mrb[0].mxu0
      %1128 = vmatprep.mubr.bf16.mxu0 0
      %1129 = vmatmul.mubr.bf16.gmra.mrb[0].mxu0 %v1026
      %v1130 = vpop.f32.mrb[0].mxu0
      %v1131 = vadd.f32 %v839, %v1130
      %v1132 = vpop.f32.mrb[0].mxu0
      %v1133 = vpop.f32.mrb[0].mxu0
      %v1134 = vadd.f32 %v842, %v1133
      %v1135 = vpop.f32.mrb[0].mxu0
      %1136 = vmatprep.mubr.bf16.mxu0 0
      %1137 = vmatmul.mubr.bf16.gmra.mrb[0].mxu0 %v1029
      %v1138 = vpop.f32.mrb[0].mxu0
      %v1139 = vadd.f32 %v847, %v1138
      %v1140 = vpop.f32.mrb[0].mxu0
      %v1141 = vpop.f32.mrb[0].mxu0
      %v1142 = vadd.f32 %v850, %v1141
      %v1143 = vpop.f32.mrb[0].mxu0
      %1144 = vmatprep.mubr.bf16.mxu0 0
      %1145 = vmatmul.mubr.bf16.gmra.mrb[0].mxu0 %v1032
      %v1146 = vpop.f32.mrb[0].mxu0
      %v1147 = vadd.f32 %v855, %v1146
      %v1148 = vpop.f32.mrb[0].mxu0
      %v1149 = vpop.f32.mrb[0].mxu0
      %v1150 = vadd.f32 %v858, %v1149
      %v1151 = vpop.f32.mrb[0].mxu0
      %1152 = vmatprep.mubr.bf16.mxu0 0
      %1153 = vmatmul.mubr.bf16.gmra.mrb[0].mxu0 %v1035
      %v1154 = vpop.f32.mrb[0].mxu0
      %v1155 = vadd.f32 %v863, %v1154
      %v1156 = vpop.f32.mrb[0].mxu0
      %v1157 = vpop.f32.mrb[0].mxu0
      %v1158 = vadd.f32 %v866, %v1157
      %v1159 = vpop.f32.mrb[0].mxu0
      %1160 = vmatprep.mubr.bf16.mxu0 0
      %1161 = vmatmul.mubr.bf16.gmra.mrb[0].mxu0 %v1038
      %v1162 = vpop.f32.mrb[0].mxu0
      %v1163 = vadd.f32 %v871, %v1162
      %v1164 = vpop.f32.mrb[0].mxu0
      %v1165 = vpop.f32.mrb[0].mxu0
      %v1166 = vadd.f32 %v874, %v1165
      %v1167 = vpop.f32.mrb[0].mxu0
      %1168 = vmatprep.mubr.bf16.mxu0 0
      %1169 = vmatmul.mubr.bf16.gmra.mrb[0].mxu0 %v1041
      %v1170 = vpop.f32.mrb[0].mxu0
      %v1171 = vadd.f32 %v879, %v1170
      %v1172 = vpop.f32.mrb[0].mxu0
      %v1173 = vpop.f32.mrb[0].mxu0
      %v1174 = vadd.f32 %v882, %v1173
      %v1175 = vpop.f32.mrb[0].mxu0
      %1176 = vmatprep.mubr.bf16.mxu0 0
      %1177 = vmatmul.mubr.bf16.gmra.mrb[0].mxu0 %v1044
      %v1178 = vpop.f32.mrb[0].mxu0
      %v1179 = vadd.f32 %v887, %v1178
      %v1180 = vpop.f32.mrb[0].mxu0
      %v1181 = vpop.f32.mrb[0].mxu0
      %v1182 = vadd.f32 %v890, %v1181
      %v1183 = vpop.f32.mrb[0].mxu0
      %1184 = vmatprep.mubr.bf16.mxu0 0
      %1185 = vmatmul.mubr.bf16.gmra.mrb[0].mxu0 %v1047
      %v1186 = vpop.f32.mrb[0].mxu0
      %v1187 = vadd.f32 %v895, %v1186
      %v1188 = vpop.f32.mrb[0].mxu0
      %v1189 = vpop.f32.mrb[0].mxu0
      %v1190 = vadd.f32 %v898, %v1189
      %v1191 = vpop.f32.mrb[0].mxu0
      %1192 = vmatprep.mubr.bf16.mxu0 0
      %1193 = vmatmul.mubr.bf16.gmra.mrb[0].mxu0 %v1050
      %v1194 = vpop.f32.mrb[0].mxu0
      %v1195 = vadd.f32 %v903, %v1194
      %v1196 = vpop.f32.mrb[0].mxu0
      %v1197 = vpop.f32.mrb[0].mxu0
      %v1198 = vadd.f32 %v906, %v1197
      %v1199 = vpop.f32.mrb[0].mxu0
      %1200 = vmatprep.mubr.bf16.mxu0 0
      %1201 = vmatmul.mubr.bf16.gmra.mrb[0].mxu0 %v1053
      %v1202 = vpop.f32.mrb[0].mxu0
      %v1203 = vadd.f32 %v911, %v1202
      %v1204 = vpop.f32.mrb[0].mxu0
      %v1205 = vpop.f32.mrb[0].mxu0
      %v1206 = vadd.f32 %v914, %v1205
      %v1207 = vpop.f32.mrb[0].mxu0
      %1208 = vmatprep.mubr.bf16.mxu0 0
      %1209 = vmatmul.mubr.bf16.gmra.mrb[0].mxu0 %v1056
      %v1210 = vpop.f32.mrb[0].mxu0
      %v1211 = vadd.f32 %v919, %v1210
      %v1212 = vpop.f32.mrb[0].mxu0
      %v1213 = vpop.f32.mrb[0].mxu0
      %v1214 = vadd.f32 %v922, %v1213
      %v1215 = vpop.f32.mrb[0].mxu0
      %1216 = vmatprep.mubr.bf16.mxu0 0
      %1217 = vmatmul.mubr.bf16.gmra.mrb[0].mxu0 %v1059
      %v1218 = vpop.f32.mrb[0].mxu0
      %v1219 = vadd.f32 %v927, %v1218
      %v1220 = vpop.f32.mrb[0].mxu0
      %v1221 = vpop.f32.mrb[0].mxu0
      %v1222 = vadd.f32 %v930, %v1221
      %v1223 = vpop.f32.mrb[0].mxu0
      %1224 = vdwg.mxu0
      %v1225 = vld [vmem:[%s6] sm:$0x1]
      %v1227 = vlaneseq
      %v1228 = vshrl.u32 %v1227, 7
      %v1229 = vsub.s32 0, %v1228
      %v1230 = vrot.slane %v1225, %v1229
      %v1232 = vadd.f32 %v1099, %v1230
      %v1233 = vadd.f32 %v1102, %v1230
      %v1234 = vadd.f32 %v1107, %v1230
      %v1235 = vadd.f32 %v1110, %v1230
      %v1236 = vadd.f32 %v1115, %v1230
      %v1237 = vadd.f32 %v1118, %v1230
      %v1238 = vadd.f32 %v1123, %v1230
      %v1239 = vadd.f32 %v1126, %v1230
      %v1240 = vadd.f32 %v1131, %v1230
      %v1241 = vadd.f32 %v1134, %v1230
      %v1242 = vadd.f32 %v1139, %v1230
      %v1243 = vadd.f32 %v1142, %v1230
      %v1244 = vadd.f32 %v1147, %v1230
      %v1245 = vadd.f32 %v1150, %v1230
      %v1246 = vadd.f32 %v1155, %v1230
      %v1247 = vadd.f32 %v1158, %v1230
      %v1248 = vadd.f32 %v1163, %v1230
      %v1249 = vadd.f32 %v1166, %v1230
      %v1250 = vadd.f32 %v1171, %v1230
      %v1251 = vadd.f32 %v1174, %v1230
      %v1252 = vadd.f32 %v1179, %v1230
      %v1253 = vadd.f32 %v1182, %v1230
      %v1254 = vadd.f32 %v1187, %v1230
      %v1255 = vadd.f32 %v1190, %v1230
      %v1256 = vadd.f32 %v1195, %v1230
      %v1257 = vadd.f32 %v1198, %v1230
      %v1258 = vadd.f32 %v1203, %v1230
      %v1259 = vadd.f32 %v1206, %v1230
      %v1260 = vadd.f32 %v1211, %v1230
      %v1261 = vadd.f32 %v1214, %v1230
      %v1262 = vadd.f32 %v1219, %v1230
      %v1263 = vadd.f32 %v1222, %v1230
      %v1264 = vmax.f32 %v1232, 0.0
      %v1265 = vmax.f32 %v1233, 0.0
      %v1266 = vmax.f32 %v1234, 0.0
      %v1267 = vmax.f32 %v1235, 0.0
      %v1268 = vmax.f32 %v1236, 0.0
      %v1269 = vmax.f32 %v1237, 0.0
      %v1270 = vmax.f32 %v1238, 0.0
      %v1271 = vmax.f32 %v1239, 0.0
      %v1272 = vmax.f32 %v1240, 0.0
      %v1273 = vmax.f32 %v1241, 0.0
      %v1274 = vmax.f32 %v1242, 0.0
      %v1275 = vmax.f32 %v1243, 0.0
      %v1276 = vmax.f32 %v1244, 0.0
      %v1277 = vmax.f32 %v1245, 0.0
      %v1278 = vmax.f32 %v1246, 0.0
      %v1279 = vmax.f32 %v1247, 0.0
      %v1280 = vmax.f32 %v1248, 0.0
      %v1281 = vmax.f32 %v1249, 0.0
      %v1282 = vmax.f32 %v1250, 0.0
      %v1283 = vmax.f32 %v1251, 0.0
      %v1284 = vmax.f32 %v1252, 0.0
      %v1285 = vmax.f32 %v1253, 0.0
      %v1286 = vmax.f32 %v1254, 0.0
      %v1287 = vmax.f32 %v1255, 0.0
      %v1288 = vmax.f32 %v1256, 0.0
      %v1289 = vmax.f32 %v1257, 0.0
      %v1290 = vmax.f32 %v1258, 0.0
      %v1291 = vmax.f32 %v1259, 0.0
      %v1292 = vmax.f32 %v1260, 0.0
      %v1293 = vmax.f32 %v1261, 0.0
      %v1294 = vmax.f32 %v1262, 0.0
      %v1295 = vmax.f32 %v1263, 0.0
      %1296 = vst.msk [vmem:[%s302] sm:$0xff] %vm425, %v1264
      %1297 = vst.msk [vmem:[%s302 + $0x8] sm:$0xff] %vm425, %v1265
      %1298 = vst.msk [vmem:[%s302 + $0x10] sm:$0xff] %vm425, %v1266
      %1299 = vst.msk [vmem:[%s302 + $0x18] sm:$0xff] %vm425, %v1267
      %1300 = vst.msk [vmem:[%s302 + $0x20] sm:$0xff] %vm425, %v1268
      %1301 = vst.msk [vmem:[%s302 + $0x28] sm:$0xff] %vm425, %v1269
      %1302 = vst.msk [vmem:[%s302 + $0x30] sm:$0xff] %vm425, %v1270
      %1303 = vst.msk [vmem:[%s302 + $0x38] sm:$0xff] %vm425, %v1271
      %1304 = vst.msk [vmem:[%s302 + $0x40] sm:$0xff] %vm425, %v1272
      %1305 = vst.msk [vmem:[%s302 + $0x48] sm:$0xff] %vm425, %v1273
      %1306 = vst.msk [vmem:[%s302 + $0x50] sm:$0xff] %vm425, %v1274
      %1307 = vst.msk [vmem:[%s302 + $0x58] sm:$0xff] %vm425, %v1275
      %1308 = vst.msk [vmem:[%s302 + $0x60] sm:$0xff] %vm425, %v1276
      %1309 = vst.msk [vmem:[%s302 + $0x68] sm:$0xff] %vm425, %v1277
      %1310 = vst.msk [vmem:[%s302 + $0x70] sm:$0xff] %vm425, %v1278
      %1311 = vst.msk [vmem:[%s302 + $0x78] sm:$0xff] %vm425, %v1279
      %1312 = vst.msk [vmem:[%s302 + $0x80] sm:$0xff] %vm425, %v1280
      %1313 = vst.msk [vmem:[%s302 + $0x88] sm:$0xff] %vm425, %v1281
      %1314 = vst.msk [vmem:[%s302 + $0x90] sm:$0xff] %vm425, %v1282
      %1315 = vst.msk [vmem:[%s302 + $0x98] sm:$0xff] %vm425, %v1283
      %1316 = vst.msk [vmem:[%s302 + $0xa0] sm:$0xff] %vm425, %v1284
      %1317 = vst.msk [vmem:[%s302 + $0xa8] sm:$0xff] %vm425, %v1285
      %1318 = vst.msk [vmem:[%s302 + $0xb0] sm:$0xff] %vm425, %v1286
      %1319 = vst.msk [vmem:[%s302 + $0xb8] sm:$0xff] %vm425, %v1287
      %1320 = vst.msk [vmem:[%s302 + $0xc0] sm:$0xff] %vm425, %v1288
      %1321 = vst.msk [vmem:[%s302 + $0xc8] sm:$0xff] %vm425, %v1289
      %1322 = vst.msk [vmem:[%s302 + $0xd0] sm:$0xff] %vm425, %v1290
      %1323 = vst.msk [vmem:[%s302 + $0xd8] sm:$0xff] %vm425, %v1291
      %1324 = vst.msk [vmem:[%s302 + $0xe0] sm:$0xff] %vm425, %v1292
      %1325 = vst.msk [vmem:[%s302 + $0xe8] sm:$0xff] %vm425, %v1293
      %1326 = vst.msk [vmem:[%s302 + $0xf0] sm:$0xff] %vm425, %v1294
      %1327 = vst.msk [vmem:[%s302 + $0xf8] sm:$0xff] %vm425, %v1295
      %s1328 = smul.u32 32, %s18
      %p1329 = scmp.lt.s32.totalorder %s1328, 63
      %s1330 = scalar_select %p1329, %s1328, 63
      %s1331 = smul.addr %s1330, 8
      %s1332 = scalar_lea.vmem %s7, %s1331
      // Predicated region
      $region49: #{bottleneck_cspb_forward.5} parent=47 // pred_check
        %p1333 = pneg %p193
      $region50: #{bottleneck_cspb_forward.5} parent=47 // pred_check_branch
        %1335 = sbr.rel (%p1333) target = $region52
      $region51: #{bottleneck_cspb_forward.5} parent=47 // pred_region
        %s1336 = smul.u32 32, %s18
      $region52: #{bottleneck_cspb_forward.5} parent=47 // pred_fallthru
        _
    $region48: #{bottleneck_cspb_forward.5} parent=5 // pred_fallthru
      _
    %p1337 = scmp.le.s32.totalorder 2, %s13
    // Predicated region
    $region53: #{bottleneck_cspb_forward.5} parent=5 // pred_check
      %p1338 = pneg %p1337
    $region54: #{bottleneck_cspb_forward.5} parent=5 // pred_check_branch
      %1340 = sbr.rel (%p1338) target = $region56
    $region55: #{bottleneck_cspb_forward.5} parent=5 // pred_region
      %s1341 = ssub.s32 %s13, 2
      // Predicated region
      $region57: #{bottleneck_cspb_forward.5} parent=55 // pred_check
        %p1342 = pneg %p199
      $region58: #{bottleneck_cspb_forward.5} parent=55 // pred_check_branch
        %1344 = sbr.rel (%p1342) target = $region60
      $region59: #{bottleneck_cspb_forward.5} parent=55 // pred_region
        %s1345 = smul.u32 32, %s19
        %p1346 = scmp.lt.s32.totalorder %s1345, 63
        %s1347 = scalar_select %p1346, %s1345, 63
        %s1348 = smul.addr %s1347, 8
        %s1349 = scalar_lea.vmem %s7, %s1348
      $region60: #{bottleneck_cspb_forward.5} parent=55 // pred_fallthru
        _
    $region56: #{bottleneck_cspb_forward.5} parent=5 // pred_fallthru
      _
  $region6: #{bottleneck_cspb_forward.5} parent=0 // loop_footer
    %s17 = sadd.s32 1, %s13
  $region7: #{bottleneck_cspb_forward.5} parent=0 // loop_footer_branch
    %12 = sbr.rel target = $region3
  $region8: #{bottleneck_cspb_forward.5} parent=0 // loop_exit
    _

// kernel: bottleneck_cspb_forward.4
$region0: #{bottleneck_cspb_forward.4}
  #allocation0 [shape = 'u32[]', space=smem, size = 0x4, offset = 0x4, fixed_abs, tag = 'smem constant byte address 0x4 - core index']
  #allocation1 [shape = 'u32[144,128]{1,0:T(1,128)}', space=vmem, size = 0x12000, scoped, tag = 'internal scratch']
  #allocation2 [shape = 'f32[297,2]{1,0:T(8,128)}', space=vmem, size = 0x26000, scoped, tag = 'scratch operand']
  %s0 = inlined_call_operand.vmem [shape: bf16[2,256,4], index: 0, kind: input, shape index: {}]
  %s1 = inlined_call_operand.vmem [shape: f32[256,2], index: 1, kind: input, shape index: {}]
  %s2 = inlined_call_operand.vmem [shape: bf16[4,2], index: 2, kind: input, shape index: {}]
  %s3 = inlined_call_operand.vmem [shape: f32[1,2], index: 3, kind: input, shape index: {}]
  %s4 = inlined_call_operand.vmem [shape: bf16[9,2,4], index: 4, kind: input, shape index: {}]
  %s5 = inlined_call_operand.vmem [shape: f32[1,4], index: 5, kind: input, shape index: {}]
  %s6 = inlined_call_operand.vmem [shape: bf16[2,256,4], index: 6, kind: output, shape index: {}]
  %s7 = sld [smem:[#allocation0]]
  $region57: #{bottleneck_cspb_forward.4} parent=0
    _
  %s9 = ssub.s32 1, %s7
  %s10 = scalar_select 0, %s9, %s7
  loop: start=0, step=1, limit=4
  $region2: #{bottleneck_cspb_forward.4} parent=0 // loop_pre_header
    _
  $region3: #{bottleneck_cspb_forward.4} parent=0 // loop_header
    %s12 = sphi 0, %s16
    %p13 = scmp.ge.s32.totalorder %s12, 4
    %s22 = sphi 0, %s24
    %s25 = sphi 0, %s22
    %s26 = sphi 0, %s25
    %s42 = sphi 0, %s26
    %s46 = sphi 0, %s46
    %s48 = sphi 0, %s46
    %s49 = sphi 0, %s48
    %s63 = sphi 0, %s49
    %s67 = sphi 0, %s67
    %s69 = sphi 0, %s67
    %s70 = sphi 0, %s69
    %s84 = sphi 0, %s70
    %s88 = sphi 0, %s88
    %s90 = sphi 0, %s88
    %s91 = sphi 0, %s90
    %s105 = sphi 0, %s91
    %s109 = sphi 0, %s109
    %s111 = sphi 0, %s109
    %s112 = sphi 0, %s111
    %s126 = sphi 0, %s112
    %s130 = sphi 0, %s130
    %s132 = sphi 0, %s130
    %s133 = sphi 0, %s132
    %s147 = sphi 0, %s133
    %s153 = sphi 0, %s155
    %s156 = sphi 0, %s153
    %s157 = sphi 0, %s156
    %s173 = sphi 0, %s157
  $region4: #{bottleneck_cspb_forward.4} parent=0 // loop_header_branch
    %15 = sbr.rel (%p13) target = $region8
  $region5: #{bottleneck_cspb_forward.4} parent=0 // loop_body
    %s17 = ssub.s32 %s12, 1
    %s18 = ssub.s32 %s12, 2
    %s19 = sadd.s32 %s12, 1
    %s20 = ssub.s32 %s12, %s19
    %p21 = scmp.eq.s32.totalorder %s20, 0
    %s23 = sadd.s32 %s22, 1
    %s24 = scalar_select %p21, %s22, %s23
    %p27 = pneg %p21
    %p28 = scmp.eq.s32.totalorder %s12, 1
    %p29 = por %p27, %p28
    %p30 = scmp.ne.s32.totalorder %s22, %s25
    %p31 = scmp.eq.s32.totalorder %s12, 0
    %p32 = por %p30, %p31
    %p33 = scmp.ne.s32.totalorder %s22, %s25
    %p34 = scmp.eq.s32.totalorder %s17, 1
    %p35 = por %p33, %p34
    %p36 = scmp.ne.s32.totalorder %s25, %s26
    %p37 = scmp.eq.s32.totalorder %s17, 0
    %p38 = por %p36, %p37
    %p39 = scmp.ne.s32.totalorder %s25, %s26
    %p40 = scmp.eq.s32.totalorder %s18, 1
    %p41 = por %p39, %p40
    %p43 = scmp.ne.s32.totalorder %s26, %s42
    %p44 = scmp.eq.s32.totalorder %s18, 0
    %p45 = por %p43, %p44
    %s47 = sadd.s32 %s46, 1
    %p50 = scmp.eq.s32.totalorder %s12, 1
    %p51 = scmp.ne.s32.totalorder %s46, %s48
    %p52 = scmp.eq.s32.totalorder %s12, 0
    %p53 = por %p51, %p52
    %p54 = scmp.ne.s32.totalorder %s46, %s48
    %p55 = scmp.eq.s32.totalorder %s17, 1
    %p56 = por %p54, %p55
    %p57 = scmp.ne.s32.totalorder %s48, %s49
    %p58 = scmp.eq.s32.totalorder %s17, 0
    %p59 = por %p57, %p58
    %p60 = scmp.ne.s32.totalorder %s48, %s49
    %p61 = scmp.eq.s32.totalorder %s18, 1
    %p62 = por %p60, %p61
    %p64 = scmp.ne.s32.totalorder %s49, %s63
    %p65 = scmp.eq.s32.totalorder %s18, 0
    %p66 = por %p64, %p65
    %s68 = sadd.s32 %s67, 1
    %p71 = scmp.eq.s32.totalorder %s12, 1
    %p72 = scmp.ne.s32.totalorder %s67, %s69
    %p73 = scmp.eq.s32.totalorder %s12, 0
    %p74 = por %p72, %p73
    %p75 = scmp.ne.s32.totalorder %s67, %s69
    %p76 = scmp.eq.s32.totalorder %s17, 1
    %p77 = por %p75, %p76
    %p78 = scmp.ne.s32.totalorder %s69, %s70
    %p79 = scmp.eq.s32.totalorder %s17, 0
    %p80 = por %p78, %p79
    %p81 = scmp.ne.s32.totalorder %s69, %s70
    %p82 = scmp.eq.s32.totalorder %s18, 1
    %p83 = por %p81, %p82
    %p85 = scmp.ne.s32.totalorder %s70, %s84
    %p86 = scmp.eq.s32.totalorder %s18, 0
    %p87 = por %p85, %p86
    %s89 = sadd.s32 %s88, 1
    %p92 = scmp.eq.s32.totalorder %s12, 1
    %p93 = scmp.ne.s32.totalorder %s88, %s90
    %p94 = scmp.eq.s32.totalorder %s12, 0
    %p95 = por %p93, %p94
    %p96 = scmp.ne.s32.totalorder %s88, %s90
    %p97 = scmp.eq.s32.totalorder %s17, 1
    %p98 = por %p96, %p97
    %p99 = scmp.ne.s32.totalorder %s90, %s91
    %p100 = scmp.eq.s32.totalorder %s17, 0
    %p101 = por %p99, %p100
    %p102 = scmp.ne.s32.totalorder %s90, %s91
    %p103 = scmp.eq.s32.totalorder %s18, 1
    %p104 = por %p102, %p103
    %p106 = scmp.ne.s32.totalorder %s91, %s105
    %p107 = scmp.eq.s32.totalorder %s18, 0
    %p108 = por %p106, %p107
    %s110 = sadd.s32 %s109, 1
    %p113 = scmp.eq.s32.totalorder %s12, 1
    %p114 = scmp.ne.s32.totalorder %s109, %s111
    %p115 = scmp.eq.s32.totalorder %s12, 0
    %p116 = por %p114, %p115
    %p117 = scmp.ne.s32.totalorder %s109, %s111
    %p118 = scmp.eq.s32.totalorder %s17, 1
    %p119 = por %p117, %p118
    %p120 = scmp.ne.s32.totalorder %s111, %s112
    %p121 = scmp.eq.s32.totalorder %s17, 0
    %p122 = por %p120, %p121
    %p123 = scmp.ne.s32.totalorder %s111, %s112
    %p124 = scmp.eq.s32.totalorder %s18, 1
    %p125 = por %p123, %p124
    %p127 = scmp.ne.s32.totalorder %s112, %s126
    %p128 = scmp.eq.s32.totalorder %s18, 0
    %p129 = por %p127, %p128
    %s131 = sadd.s32 %s130, 1
    %p134 = scmp.eq.s32.totalorder %s12, 1
    %p135 = scmp.ne.s32.totalorder %s130, %s132
    %p136 = scmp.eq.s32.totalorder %s12, 0
    %p137 = por %p135, %p136
    %p138 = scmp.ne.s32.totalorder %s130, %s132
    %p139 = scmp.eq.s32.totalorder %s17, 1
    %p140 = por %p138, %p139
    %p141 = scmp.ne.s32.totalorder %s132, %s133
    %p142 = scmp.eq.s32.totalorder %s17, 0
    %p143 = por %p141, %p142
    %p144 = scmp.ne.s32.totalorder %s132, %s133
    %p145 = scmp.eq.s32.totalorder %s18, 1
    %p146 = por %p144, %p145
    %p148 = scmp.ne.s32.totalorder %s133, %s147
    %p149 = scmp.eq.s32.totalorder %s18, 0
    %p150 = por %p148, %p149
    %s151 = ssub.s32 %s12, %s19
    %p152 = scmp.eq.s32.totalorder %s151, 0
    %s154 = sadd.s32 %s153, 1
    %s155 = scalar_select %p152, %s153, %s154
    %p158 = pneg %p152
    %p159 = scmp.eq.s32.totalorder %s12, 1
    %p160 = por %p158, %p159
    %p161 = scmp.ne.s32.totalorder %s153, %s156
    %p162 = scmp.eq.s32.totalorder %s12, 0
    %p163 = por %p161, %p162
    %p164 = scmp.ne.s32.totalorder %s153, %s156
    %p165 = scmp.eq.s32.totalorder %s17, 1
    %p166 = por %p164, %p165
    %p167 = scmp.ne.s32.totalorder %s156, %s157
    %p168 = scmp.eq.s32.totalorder %s17, 0
    %p169 = por %p167, %p168
    %p170 = scmp.ne.s32.totalorder %s156, %s157
    %p171 = scmp.eq.s32.totalorder %s18, 1
    %p172 = por %p170, %p171
    %p174 = scmp.ne.s32.totalorder %s157, %s173
    %p175 = scmp.eq.s32.totalorder %s18, 0
    %p176 = por %p174, %p175
    %p177 = scmp.le.s32.totalorder 1, %s12
    %p178 = scmp.lt.s32.totalorder %s12, 3
    %p179 = pnand %p177, %p178
    %p180 = pneg %p179
    // Predicated region
    $region9: #{bottleneck_cspb_forward.4} parent=5 // pred_check
      _
    $region10: #{bottleneck_cspb_forward.4} parent=5 // pred_check_branch
      %182 = sbr.rel (%p179) target = $region12
    $region11: #{bottleneck_cspb_forward.4} parent=5 // pred_region
      %s183 = ssub.s32 %s12, 1
      // Predicated region
      $region13: #{bottleneck_cspb_forward.4} parent=11 // pred_check
        %p184 = pneg %p59
      $region14: #{bottleneck_cspb_forward.4} parent=11 // pred_check_branch
        %186 = sbr.rel (%p184) target = $region16
      $region15: #{bottleneck_cspb_forward.4} parent=11 // pred_region
        _
      $region16: #{bottleneck_cspb_forward.4} parent=11 // pred_fallthru
        _
      // Predicated region
      $region17: #{bottleneck_cspb_forward.4} parent=11 // pred_check
        %p187 = pneg %p80
      $region18: #{bottleneck_cspb_forward.4} parent=11 // pred_check_branch
        %189 = sbr.rel (%p187) target = $region20
      $region19: #{bottleneck_cspb_forward.4} parent=11 // pred_region
        _
      $region20: #{bottleneck_cspb_forward.4} parent=11 // pred_fallthru
        _
      // Predicated region
      $region21: #{bottleneck_cspb_forward.4} parent=11 // pred_check
        %p190 = pneg %p101
      $region22: #{bottleneck_cspb_forward.4} parent=11 // pred_check_branch
        %192 = sbr.rel (%p190) target = $region24
      $region23: #{bottleneck_cspb_forward.4} parent=11 // pred_region
        _
      $region24: #{bottleneck_cspb_forward.4} parent=11 // pred_fallthru
        _
      // Predicated region
      $region25: #{bottleneck_cspb_forward.4} parent=11 // pred_check
        %p193 = pneg %p122
      $region26: #{bottleneck_cspb_forward.4} parent=11 // pred_check_branch
        %195 = sbr.rel (%p193) target = $region28
      $region27: #{bottleneck_cspb_forward.4} parent=11 // pred_region
        _
      $region28: #{bottleneck_cspb_forward.4} parent=11 // pred_fallthru
        _
      // Predicated region
      $region29: #{bottleneck_cspb_forward.4} parent=11 // pred_check
        %p196 = pneg %p143
      $region30: #{bottleneck_cspb_forward.4} parent=11 // pred_check_branch
        %198 = sbr.rel (%p196) target = $region32
      $region31: #{bottleneck_cspb_forward.4} parent=11 // pred_region
        _
      $region32: #{bottleneck_cspb_forward.4} parent=11 // pred_fallthru
        _
    $region12: #{bottleneck_cspb_forward.4} parent=5 // pred_fallthru
      _
    %p199 = scmp.lt.s32.totalorder %s12, 2
    // Predicated region
    $region33: #{bottleneck_cspb_forward.4} parent=5 // pred_check
      %p200 = pneg %p199
    $region34: #{bottleneck_cspb_forward.4} parent=5 // pred_check_branch
      %202 = sbr.rel (%p200) target = $region36
    $region35: #{bottleneck_cspb_forward.4} parent=5 // pred_region
      // Predicated region
      $region37: #{bottleneck_cspb_forward.4} parent=35 // pred_check
        %p203 = pneg %p32
      $region38: #{bottleneck_cspb_forward.4} parent=35 // pred_check_branch
        %205 = sbr.rel (%p203) target = $region40
      $region39: #{bottleneck_cspb_forward.4} parent=35 // pred_region
        %p206 = scmp.lt.s32.totalorder %s12, 1
        %s207 = scalar_select %p206, %s12, 1
        %s208 = smul.addr %s207, 32
        %s209 = smul.addr %s208, 4
        %s210 = scalar_lea.vmem %s0, %s209
      $region40: #{bottleneck_cspb_forward.4} parent=35 // pred_fallthru
        _
    $region36: #{bottleneck_cspb_forward.4} parent=5 // pred_fallthru
      _
    %p211 = scmp.le.s32.totalorder 1, %s12
    %p212 = scmp.lt.s32.totalorder %s12, 3
    %p213 = pnand %p211, %p212
    %p214 = pneg %p213
    // Predicated region
    $region41: #{bottleneck_cspb_forward.4} parent=5 // pred_check
      _
    $region42: #{bottleneck_cspb_forward.4} parent=5 // pred_check_branch
      %216 = sbr.rel (%p213) target = $region44
    $region43: #{bottleneck_cspb_forward.4} parent=5 // pred_region
      %s217 = ssub.s32 %s12, 1
      %p218 = scmp.lt.s32.totalorder %s17, 1
      %s219 = scalar_select %p218, %s17, 1
      %s220 = smul.addr %s219, 32
      %s221 = smul.addr %s220, 4
      %s222 = scalar_lea.vmem %s0, %s221
      %p223 = pneg %p38
      %p224 = pneg %p35
      %p225 = pneg %p59
      %p226 = pneg %p56
      %p227 = pneg %p80
      %p228 = pneg %p77
      %p229 = pneg %p101
      %p230 = pneg %p98
      %p231 = pneg %p122
      %p232 = pneg %p119
      %p233 = pneg %p143
      %p234 = pneg %p140
      %p235 = pneg %p169
      %p236 = pneg %p166
      %p237 = scmp.lt.s32.totalorder %s17, 1
      %s238 = scalar_select %p237, %s17, 1
      %s239 = smul.addr %s238, 32
      %s240 = smul.addr %s239, 4
      %s241 = scalar_lea.vmem %s6, %s240
      %p242 = scmp.lt.s32.totalorder %s17, 1
      %s243 = scalar_select %p242, %s17, 1
      %s244 = smul.addr %s243, 32
      %s245 = smul.addr %s244, 4
      %s246 = scalar_lea.vmem %s0, %s245
      %p247 = scmp.lt.s32.totalorder %s17, 1
      %s248 = scalar_select %p247, %s17, 1
      %s249 = smul.addr %s248, 32
      %s250 = smul.addr %s249, 4
      %s251 = scalar_lea.vmem %s6, %s250
      %v253 = vld [vmem:[%s246] sm:$0xf]
      %v254 = vld [vmem:[%s246 + $0x4] sm:$0xf]
      %v255 = vld [vmem:[%s246 + $0x8] sm:$0xf]
      %v256 = vld [vmem:[%s246 + $0xc] sm:$0xf]
      %v257 = vld [vmem:[%s246 + $0x10] sm:$0xf]
      %v258 = vld [vmem:[%s246 + $0x14] sm:$0xf]
      %v259 = vld [vmem:[%s246 + $0x18] sm:$0xf]
      %v260 = vld [vmem:[%s246 + $0x1c] sm:$0xf]
      %v261 = vld [vmem:[%s246 + $0x20] sm:$0xf]
      %v262 = vld [vmem:[%s246 + $0x24] sm:$0xf]
      %v263 = vld [vmem:[%s246 + $0x28] sm:$0xf]
      %v264 = vld [vmem:[%s246 + $0x2c] sm:$0xf]
      %v265 = vld [vmem:[%s246 + $0x30] sm:$0xf]
      %v266 = vld [vmem:[%s246 + $0x34] sm:$0xf]
      %v267 = vld [vmem:[%s246 + $0x38] sm:$0xf]
      %v268 = vld [vmem:[%s246 + $0x3c] sm:$0xf]
      %v269 = vld [vmem:[%s246 + $0x40] sm:$0xf]
      %v270 = vld [vmem:[%s246 + $0x44] sm:$0xf]
      %v271 = vld [vmem:[%s246 + $0x48] sm:$0xf]
      %v272 = vld [vmem:[%s246 + $0x4c] sm:$0xf]
      %v273 = vld [vmem:[%s246 + $0x50] sm:$0xf]
      %v274 = vld [vmem:[%s246 + $0x54] sm:$0xf]
      %v275 = vld [vmem:[%s246 + $0x58] sm:$0xf]
      %v276 = vld [vmem:[%s246 + $0x5c] sm:$0xf]
      %v277 = vld [vmem:[%s246 + $0x60] sm:$0xf]
      %v278 = vld [vmem:[%s246 + $0x64] sm:$0xf]
      %v279 = vld [vmem:[%s246 + $0x68] sm:$0xf]
      %v280 = vld [vmem:[%s246 + $0x6c] sm:$0xf]
      %v281 = vld [vmem:[%s246 + $0x70] sm:$0xf]
      %v282 = vld [vmem:[%s246 + $0x74] sm:$0xf]
      %v283 = vld [vmem:[%s246 + $0x78] sm:$0xf]
      %v284 = vld [vmem:[%s246 + $0x7c] sm:$0xf]
      %v285 = vld [vmem:[%s1] sm:$0xff]
      %v286 = vld [vmem:[%s1 + $0x8] sm:$0xff]
      %v287 = vld [vmem:[%s1 + $0x10] sm:$0xff]
      %v288 = vld [vmem:[%s1 + $0x18] sm:$0xff]
      %v289 = vld [vmem:[%s1 + $0x20] sm:$0xff]
      %v290 = vld [vmem:[%s1 + $0x28] sm:$0xff]
      %v291 = vld [vmem:[%s1 + $0x30] sm:$0xff]
      %v292 = vld [vmem:[%s1 + $0x38] sm:$0xff]
      %v293 = vld [vmem:[%s1 + $0x40] sm:$0xff]
      %v294 = vld [vmem:[%s1 + $0x48] sm:$0xff]
      %v295 = vld [vmem:[%s1 + $0x50] sm:$0xff]
      %v296 = vld [vmem:[%s1 + $0x58] sm:$0xff]
      %v297 = vld [vmem:[%s1 + $0x60] sm:$0xff]
      %v298 = vld [vmem:[%s1 + $0x68] sm:$0xff]
      %v299 = vld [vmem:[%s1 + $0x70] sm:$0xff]
      %v300 = vld [vmem:[%s1 + $0x78] sm:$0xff]
      %v301 = vld [vmem:[%s1 + $0x80] sm:$0xff]
      %v302 = vld [vmem:[%s1 + $0x88] sm:$0xff]
      %v303 = vld [vmem:[%s1 + $0x90] sm:$0xff]
      %v304 = vld [vmem:[%s1 + $0x98] sm:$0xff]
      %v305 = vld [vmem:[%s1 + $0xa0] sm:$0xff]
      %v306 = vld [vmem:[%s1 + $0xa8] sm:$0xff]
      %v307 = vld [vmem:[%s1 + $0xb0] sm:$0xff]
      %v308 = vld [vmem:[%s1 + $0xb8] sm:$0xff]
      %v309 = vld [vmem:[%s1 + $0xc0] sm:$0xff]
      %v310 = vld [vmem:[%s1 + $0xc8] sm:$0xff]
      %v311 = vld [vmem:[%s1 + $0xd0] sm:$0xff]
      %v312 = vld [vmem:[%s1 + $0xd8] sm:$0xff]
      %v313 = vld [vmem:[%s1 + $0xe0] sm:$0xff]
      %v314 = vld [vmem:[%s1 + $0xe8] sm:$0xff]
      %v315 = vld [vmem:[%s1 + $0xf0] sm:$0xff]
      %v316 = vld [vmem:[%s1 + $0xf8] sm:$0xff]
      %v317 = vld [vmem:[%s2] sm:$0x3]
      %v318 = vld [vmem:[%s3] sm:$0x1]
      %v320 = vlaneseq
      %v321 = vshrl.u32 %v320, 7
      %v322 = vsub.s32 0, %v321
      %v323 = vrot.slane %v318, %v322
      %v357 = vunpack.c.l.b16 %v253
      %v358 = vunpack.c.l.b16 %v254
      %v359 = vunpack.c.l.b16 %v255
      %v360 = vunpack.c.l.b16 %v256
      %v361 = vunpack.c.l.b16 %v257
      %v362 = vunpack.c.l.b16 %v258
      %v363 = vunpack.c.l.b16 %v259
      %v364 = vunpack.c.l.b16 %v260
      %v365 = vunpack.c.l.b16 %v261
      %v366 = vunpack.c.l.b16 %v262
      %v367 = vunpack.c.l.b16 %v263
      %v368 = vunpack.c.l.b16 %v264
      %v369 = vunpack.c.l.b16 %v265
      %v370 = vunpack.c.l.b16 %v266
      %v371 = vunpack.c.l.b16 %v267
      %v372 = vunpack.c.l.b16 %v268
      %v373 = vunpack.c.l.b16 %v269
      %v374 = vunpack.c.l.b16 %v270
      %v375 = vunpack.c.l.b16 %v271
      %v376 = vunpack.c.l.b16 %v272
      %v377 = vunpack.c.l.b16 %v273
      %v378 = vunpack.c.l.b16 %v274
      %v379 = vunpack.c.l.b16 %v275
      %v380 = vunpack.c.l.b16 %v276
      %v381 = vunpack.c.l.b16 %v277
      %v382 = vunpack.c.l.b16 %v278
      %v383 = vunpack.c.l.b16 %v279
      %v384 = vunpack.c.l.b16 %v280
      %v385 = vunpack.c.l.b16 %v281
      %v386 = vunpack.c.l.b16 %v282
      %v387 = vunpack.c.l.b16 %v283
      %v388 = vunpack.c.l.b16 %v284
      %v389 = vpack.c.b16 %v358, %v357
      %v390 = vpack.c.b16 %v360, %v359
      %v391 = vpack.c.b16 %v362, %v361
      %v392 = vpack.c.b16 %v364, %v363
      %v393 = vpack.c.b16 %v366, %v365
      %v394 = vpack.c.b16 %v368, %v367
      %v395 = vpack.c.b16 %v370, %v369
      %v396 = vpack.c.b16 %v372, %v371
      %v397 = vpack.c.b16 %v374, %v373
      %v398 = vpack.c.b16 %v376, %v375
      %v399 = vpack.c.b16 %v378, %v377
      %v400 = vpack.c.b16 %v380, %v379
      %v401 = vpack.c.b16 %v382, %v381
      %v402 = vpack.c.b16 %v384, %v383
      %v403 = vpack.c.b16 %v386, %v385
      %v404 = vpack.c.b16 %v388, %v387
      %vm405 = vcmask 31744
      %v407 = vsel %vm405, %v389, 0
      %v410 = vsel %vm405, %v390, 0
      %v413 = vsel %vm405, %v391, 0
      %v416 = vsel %vm405, %v392, 0
      %v419 = vsel %vm405, %v393, 0
      %v422 = vsel %vm405, %v394, 0
      %v425 = vsel %vm405, %v395, 0
      %v428 = vsel %vm405, %v396, 0
      %v431 = vsel %vm405, %v397, 0
      %v434 = vsel %vm405, %v398, 0
      %v437 = vsel %vm405, %v399, 0
      %v440 = vsel %vm405, %v400, 0
      %v443 = vsel %vm405, %v401, 0
      %v446 = vsel %vm405, %v402, 0
      %v449 = vsel %vm405, %v403, 0
      %v452 = vsel %vm405, %v404, 0
      %vm454 = vcmask 1041408
      %v456 = vsel %vm454, %v317, 0
      %458 = vmatprep.subr.bf16.mxu0 0
      %459 = vmatpush1.bf16.msra.mxu0 %v456
      %460 = vmatprep.subr.bf16.mxu0 0
      %461 = vmatpush1.bf16.msra.mxu0 0
      %462 = vmatprep.subr.bf16.mxu0 0
      %463 = vmatpush1.bf16.msra.mxu0 0
      %464 = vmatprep.subr.bf16.mxu0 0
      %465 = vmatpush1.bf16.msra.mxu0 0
      %466 = vmatprep.subr.bf16.mxu0 0
      %467 = vmatpush1.bf16.msra.mxu0 0
      %468 = vmatprep.subr.bf16.mxu0 0
      %469 = vmatpush1.bf16.msra.mxu0 0
      %470 = vmatprep.subr.bf16.mxu0 0
      %471 = vmatpush1.bf16.msra.mxu0 0
      %472 = vmatprep.subr.bf16.mxu0 0
      %473 = vmatpush1.bf16.msra.mxu0 0
      %474 = vmatprep.subr.bf16.mxu0 0
      %475 = vmatpush1.bf16.msra.mxu0 0
      %476 = vmatprep.subr.bf16.mxu0 0
      %477 = vmatpush1.bf16.msra.mxu0 0
      %478 = vmatprep.subr.bf16.mxu0 0
      %479 = vmatpush1.bf16.msra.mxu0 0
      %480 = vmatprep.subr.bf16.mxu0 0
      %481 = vmatpush1.bf16.msra.mxu0 0
      %482 = vmatprep.subr.bf16.mxu0 0
      %483 = vmatpush1.bf16.msra.mxu0 0
      %484 = vmatprep.subr.bf16.mxu0 0
      %485 = vmatpush1.bf16.msra.mxu0 0
      %486 = vmatprep.subr.bf16.mxu0 0
      %487 = vmatpush1.bf16.msra.mxu0 0
      %488 = vmatprep.subr.bf16.mxu0 0
      %489 = vmatpush1.bf16.msra.mxu0 0
      %490 = vmatprep.mubr.bf16.mxu0 0
      %491 = vmatmul.mubr.bf16.gmra.mrb[0].mxu0 %v407
      %v492 = vpop.f32.mrb[0].mxu0
      %v493 = vadd.f32 %v323, %v492
      %v494 = vpop.f32.mrb[0].mxu0
      %v495 = vpop.f32.mrb[0].mxu0
      %v496 = vadd.f32 %v323, %v495
      %v497 = vpop.f32.mrb[0].mxu0
      %498 = vmatprep.mubr.bf16.mxu0 0
      %499 = vmatmul.mubr.bf16.gmra.mrb[0].mxu0 %v410
      %v500 = vpop.f32.mrb[0].mxu0
      %v501 = vadd.f32 %v323, %v500
      %v502 = vpop.f32.mrb[0].mxu0
      %v503 = vpop.f32.mrb[0].mxu0
      %v504 = vadd.f32 %v323, %v503
      %v505 = vpop.f32.mrb[0].mxu0
      %506 = vmatprep.mubr.bf16.mxu0 0
      %507 = vmatmul.mubr.bf16.gmra.mrb[0].mxu0 %v413
      %v508 = vpop.f32.mrb[0].mxu0
      %v509 = vadd.f32 %v323, %v508
      %v510 = vpop.f32.mrb[0].mxu0
      %v511 = vpop.f32.mrb[0].mxu0
      %v512 = vadd.f32 %v323, %v511
      %v513 = vpop.f32.mrb[0].mxu0
      %514 = vmatprep.mubr.bf16.mxu0 0
      %515 = vmatmul.mubr.bf16.gmra.mrb[0].mxu0 %v416
      %v516 = vpop.f32.mrb[0].mxu0
      %v517 = vadd.f32 %v323, %v516
      %v518 = vpop.f32.mrb[0].mxu0
      %v519 = vpop.f32.mrb[0].mxu0
      %v520 = vadd.f32 %v323, %v519
      %v521 = vpop.f32.mrb[0].mxu0
      %522 = vmatprep.mubr.bf16.mxu0 0
      %523 = vmatmul.mubr.bf16.gmra.mrb[0].mxu0 %v419
      %v524 = vpop.f32.mrb[0].mxu0
      %v525 = vadd.f32 %v323, %v524
      %v526 = vpop.f32.mrb[0].mxu0
      %v527 = vpop.f32.mrb[0].mxu0
      %v528 = vadd.f32 %v323, %v527
      %v529 = vpop.f32.mrb[0].mxu0
      %530 = vmatprep.mubr.bf16.mxu0 0
      %531 = vmatmul.mubr.bf16.gmra.mrb[0].mxu0 %v422
      %v532 = vpop.f32.mrb[0].mxu0
      %v533 = vadd.f32 %v323, %v532
      %v534 = vpop.f32.mrb[0].mxu0
      %v535 = vpop.f32.mrb[0].mxu0
      %v536 = vadd.f32 %v323, %v535
      %v537 = vpop.f32.mrb[0].mxu0
      %538 = vmatprep.mubr.bf16.mxu0 0
      %539 = vmatmul.mubr.bf16.gmra.mrb[0].mxu0 %v425
      %v540 = vpop.f32.mrb[0].mxu0
      %v541 = vadd.f32 %v323, %v540
      %v542 = vpop.f32.mrb[0].mxu0
      %v543 = vpop.f32.mrb[0].mxu0
      %v544 = vadd.f32 %v323, %v543
      %v545 = vpop.f32.mrb[0].mxu0
      %546 = vmatprep.mubr.bf16.mxu0 0
      %547 = vmatmul.mubr.bf16.gmra.mrb[0].mxu0 %v428
      %v548 = vpop.f32.mrb[0].mxu0
      %v549 = vadd.f32 %v323, %v548
      %v550 = vpop.f32.mrb[0].mxu0
      %v551 = vpop.f32.mrb[0].mxu0
      %v552 = vadd.f32 %v323, %v551
      %v553 = vpop.f32.mrb[0].mxu0
      %554 = vmatprep.mubr.bf16.mxu0 0
      %555 = vmatmul.mubr.bf16.gmra.mrb[0].mxu0 %v431
      %v556 = vpop.f32.mrb[0].mxu0
      %v557 = vadd.f32 %v323, %v556
      %v558 = vpop.f32.mrb[0].mxu0
      %v559 = vpop.f32.mrb[0].mxu0
      %v560 = vadd.f32 %v323, %v559
      %v561 = vpop.f32.mrb[0].mxu0
      %562 = vmatprep.mubr.bf16.mxu0 0
      %563 = vmatmul.mubr.bf16.gmra.mrb[0].mxu0 %v434
      %v564 = vpop.f32.mrb[0].mxu0
      %v565 = vadd.f32 %v323, %v564
      %v566 = vpop.f32.mrb[0].mxu0
      %v567 = vpop.f32.mrb[0].mxu0
      %v568 = vadd.f32 %v323, %v567
      %v569 = vpop.f32.mrb[0].mxu0
      %570 = vmatprep.mubr.bf16.mxu0 0
      %571 = vmatmul.mubr.bf16.gmra.mrb[0].mxu0 %v437
      %v572 = vpop.f32.mrb[0].mxu0
      %v573 = vadd.f32 %v323, %v572
      %v574 = vpop.f32.mrb[0].mxu0
      %v575 = vpop.f32.mrb[0].mxu0
      %v576 = vadd.f32 %v323, %v575
      %v577 = vpop.f32.mrb[0].mxu0
      %578 = vmatprep.mubr.bf16.mxu0 0
      %579 = vmatmul.mubr.bf16.gmra.mrb[0].mxu0 %v440
      %v580 = vpop.f32.mrb[0].mxu0
      %v581 = vadd.f32 %v323, %v580
      %v582 = vpop.f32.mrb[0].mxu0
      %v583 = vpop.f32.mrb[0].mxu0
      %v584 = vadd.f32 %v323, %v583
      %v585 = vpop.f32.mrb[0].mxu0
      %586 = vmatprep.mubr.bf16.mxu0 0
      %587 = vmatmul.mubr.bf16.gmra.mrb[0].mxu0 %v443
      %v588 = vpop.f32.mrb[0].mxu0
      %v589 = vadd.f32 %v323, %v588
      %v590 = vpop.f32.mrb[0].mxu0
      %v591 = vpop.f32.mrb[0].mxu0
      %v592 = vadd.f32 %v323, %v591
      %v593 = vpop.f32.mrb[0].mxu0
      %594 = vmatprep.mubr.bf16.mxu0 0
      %595 = vmatmul.mubr.bf16.gmra.mrb[0].mxu0 %v446
      %v596 = vpop.f32.mrb[0].mxu0
      %v597 = vadd.f32 %v323, %v596
      %v598 = vpop.f32.mrb[0].mxu0
      %v599 = vpop.f32.mrb[0].mxu0
      %v600 = vadd.f32 %v323, %v599
      %v601 = vpop.f32.mrb[0].mxu0
      %602 = vmatprep.mubr.bf16.mxu0 0
      %603 = vmatmul.mubr.bf16.gmra.mrb[0].mxu0 %v449
      %v604 = vpop.f32.mrb[0].mxu0
      %v605 = vadd.f32 %v323, %v604
      %v606 = vpop.f32.mrb[0].mxu0
      %v607 = vpop.f32.mrb[0].mxu0
      %v608 = vadd.f32 %v323, %v607
      %v609 = vpop.f32.mrb[0].mxu0
      %610 = vmatprep.mubr.bf16.mxu0 0
      %611 = vmatmul.mubr.bf16.gmra.mrb[0].mxu0 %v452
      %v612 = vpop.f32.mrb[0].mxu0
      %v613 = vadd.f32 %v323, %v612
      %v614 = vpop.f32.mrb[0].mxu0
      %v615 = vpop.f32.mrb[0].mxu0
      %v616 = vadd.f32 %v323, %v615
      %v617 = vpop.f32.mrb[0].mxu0
      %618 = vdwg.mxu0
      %v619 = vmax.f32 %v493, 0.0
      %v620 = vmax.f32 %v496, 0.0
      %v621 = vmax.f32 %v501, 0.0
      %v622 = vmax.f32 %v504, 0.0
      %v623 = vmax.f32 %v509, 0.0
      %v624 = vmax.f32 %v512, 0.0
      %v625 = vmax.f32 %v517, 0.0
      %v626 = vmax.f32 %v520, 0.0
      %v627 = vmax.f32 %v525, 0.0
      %v628 = vmax.f32 %v528, 0.0
      %v629 = vmax.f32 %v533, 0.0
      %v630 = vmax.f32 %v536, 0.0
      %v631 = vmax.f32 %v541, 0.0
      %v632 = vmax.f32 %v544, 0.0
      %v633 = vmax.f32 %v549, 0.0
      %v634 = vmax.f32 %v552, 0.0
      %v635 = vmax.f32 %v557, 0.0
      %v636 = vmax.f32 %v560, 0.0
      %v637 = vmax.f32 %v565, 0.0
      %v638 = vmax.f32 %v568, 0.0
      %v639 = vmax.f32 %v573, 0.0
      %v640 = vmax.f32 %v576, 0.0
      %v641 = vmax.f32 %v581, 0.0
      %v642 = vmax.f32 %v584, 0.0
      %v643 = vmax.f32 %v589, 0.0
      %v644 = vmax.f32 %v592, 0.0
      %v645 = vmax.f32 %v597, 0.0
      %v646 = vmax.f32 %v600, 0.0
      %v647 = vmax.f32 %v605, 0.0
      %v648 = vmax.f32 %v608, 0.0
      %v649 = vmax.f32 %v613, 0.0
      %v650 = vmax.f32 %v616, 0.0
      %vm651 = vcmask 15360
      %652 = vst.msk [vmem:[#allocation2] sm:$0xff] %vm651, 0.0
      %653 = vst.msk [vmem:[#allocation2 + $0x8] sm:$0xff] %vm651, 0.0
      %654 = vst.msk [vmem:[#allocation2 + $0x10] sm:$0xff] %vm651, 0.0
      %655 = vst.msk [vmem:[#allocation2 + $0x118] sm:$0xff] %vm651, 0.0
      %656 = vst.msk [vmem:[#allocation2 + $0x120] sm:$0xff] %vm651, 0.0
      %vm657 = vcmask 8192
      %658 = vst.msk [vmem:[#allocation2 + $0x128] sm:$0x1] %vm657, 0.0
      %659 = vst.msk [vmem:[#allocation2 + $0x18] sm:$0xff] %vm651, %v619
      %660 = vst.msk [vmem:[#allocation2 + $0x20] sm:$0xff] %vm651, %v620
      %661 = vst.msk [vmem:[#allocation2 + $0x28] sm:$0xff] %vm651, %v621
      %662 = vst.msk [vmem:[#allocation2 + $0x30] sm:$0xff] %vm651, %v622
      %663 = vst.msk [vmem:[#allocation2 + $0x38] sm:$0xff] %vm651, %v623
      %664 = vst.msk [vmem:[#allocation2 + $0x40] sm:$0xff] %vm651, %v624
      %665 = vst.msk [vmem:[#allocation2 + $0x48] sm:$0xff] %vm651, %v625
      %666 = vst.msk [vmem:[#allocation2 + $0x50] sm:$0xff] %vm651, %v626
      %667 = vst.msk [vmem:[#allocation2 + $0x58] sm:$0xff] %vm651, %v627
      %668 = vst.msk [vmem:[#allocation2 + $0x60] sm:$0xff] %vm651, %v628
      %669 = vst.msk [vmem:[#allocation2 + $0x68] sm:$0xff] %vm651, %v629
      %670 = vst.msk [vmem:[#allocation2 + $0x70] sm:$0xff] %vm651, %v630
      %671 = vst.msk [vmem:[#allocation2 + $0x78] sm:$0xff] %vm651, %v631
      %672 = vst.msk [vmem:[#allocation2 + $0x80] sm:$0xff] %vm651, %v632
      %673 = vst.msk [vmem:[#allocation2 + $0x88] sm:$0xff] %vm651, %v633
      %674 = vst.msk [vmem:[#allocation2 + $0x90] sm:$0xff] %vm651, %v634
      %675 = vst.msk [vmem:[#allocation2 + $0x98] sm:$0xff] %vm651, %v635
      %676 = vst.msk [vmem:[#allocation2 + $0xa0] sm:$0xff] %vm651, %v636
      %677 = vst.msk [vmem:[#allocation2 + $0xa8] sm:$0xff] %vm651, %v637
      %678 = vst.msk [vmem:[#allocation2 + $0xb0] sm:$0xff] %vm651, %v638
      %679 = vst.msk [vmem:[#allocation2 + $0xb8] sm:$0xff] %vm651, %v639
      %680 = vst.msk [vmem:[#allocation2 + $0xc0] sm:$0xff] %vm651, %v640
      %681 = vst.msk [vmem:[#allocation2 + $0xc8] sm:$0xff] %vm651, %v641
      %682 = vst.msk [vmem:[#allocation2 + $0xd0] sm:$0xff] %vm651, %v642
      %683 = vst.msk [vmem:[#allocation2 + $0xd8] sm:$0xff] %vm651, %v643
      %684 = vst.msk [vmem:[#allocation2 + $0xe0] sm:$0xff] %vm651, %v644
      %685 = vst.msk [vmem:[#allocation2 + $0xe8] sm:$0xff] %vm651, %v645
      %686 = vst.msk [vmem:[#allocation2 + $0xf0] sm:$0xff] %vm651, %v646
      %687 = vst.msk [vmem:[#allocation2 + $0xf8] sm:$0xff] %vm651, %v647
      %688 = vst.msk [vmem:[#allocation2 + $0x100] sm:$0xff] %vm651, %v648
      %689 = vst.msk [vmem:[#allocation2 + $0x108] sm:$0xff] %vm651, %v649
      %690 = vst.msk [vmem:[#allocation2 + $0x110] sm:$0xff] %vm651, %v650
      %v691 = vld [vmem:[%s5] sm:$0x1]
      %v693 = vlaneseq
      %v694 = vshrl.u32 %v693, 7
      %v695 = vsub.s32 0, %v694
      %v696 = vrot.slane %v691, %v695
      %v698 = vadd.f32 %v696, 0.0
      %v699 = vld [vmem:[#allocation2 + $0x7] sm:$0xff]
      %v700 = vld [vmem:[#allocation2 + $0xf] sm:$0xff]
      %v701 = vld [vmem:[#allocation2 + $0x17] sm:$0xff]
      %v702 = vld [vmem:[#allocation2 + $0x1f] sm:$0xff]
      %v703 = vld [vmem:[#allocation2 + $0x27] sm:$0xff]
      %v704 = vld [vmem:[#allocation2 + $0x2f] sm:$0xff]
      %v705 = vld [vmem:[#allocation2 + $0x37] sm:$0xff]
      %v706 = vld [vmem:[#allocation2 + $0x3f] sm:$0xff]
      %v707 = vld [vmem:[#allocation2 + $0x47] sm:$0xff]
      %v708 = vld [vmem:[#allocation2 + $0x4f] sm:$0xff]
      %v709 = vld [vmem:[#allocation2 + $0x57] sm:$0xff]
      %v710 = vld [vmem:[#allocation2 + $0x5f] sm:$0xff]
      %v711 = vld [vmem:[#allocation2 + $0x67] sm:$0xff]
      %v712 = vld [vmem:[#allocation2 + $0x6f] sm:$0xff]
      %v713 = vld [vmem:[#allocation2 + $0x77] sm:$0xff]
      %v714 = vld [vmem:[#allocation2 + $0x7f] sm:$0xff]
      %v715 = vld [vmem:[#allocation2 + $0x87] sm:$0xff]
      %v716 = vld [vmem:[#allocation2 + $0x8f] sm:$0xff]
      %v717 = vld [vmem:[#allocation2 + $0x97] sm:$0xff]
      %v718 = vld [vmem:[#allocation2 + $0x9f] sm:$0xff]
      %v719 = vld [vmem:[#allocation2 + $0xa7] sm:$0xff]
      %v720 = vld [vmem:[#allocation2 + $0xaf] sm:$0xff]
      %v721 = vld [vmem:[#allocation2 + $0xb7] sm:$0xff]
      %v722 = vld [vmem:[#allocation2 + $0xbf] sm:$0xff]
      %v723 = vld [vmem:[#allocation2 + $0xc7] sm:$0xff]
      %v724 = vld [vmem:[#allocation2 + $0xcf] sm:$0xff]
      %v725 = vld [vmem:[#allocation2 + $0xd7] sm:$0xff]
      %v726 = vld [vmem:[#allocation2 + $0xdf] sm:$0xff]
      %v727 = vld [vmem:[#allocation2 + $0xe7] sm:$0xff]
      %v728 = vld [vmem:[#allocation2 + $0xef] sm:$0xff]
      %v729 = vld [vmem:[#allocation2 + $0xf7] sm:$0xff]
      %v730 = vld [vmem:[#allocation2 + $0xff] sm:$0xff]
      %v731 = vpack.c.bf16 %v700, %v699
      %v732 = vpack.c.bf16 %v702, %v701
      %v733 = vpack.c.bf16 %v704, %v703
      %v734 = vpack.c.bf16 %v706, %v705
      %v735 = vpack.c.bf16 %v708, %v707
      %v736 = vpack.c.bf16 %v710, %v709
      %v737 = vpack.c.bf16 %v712, %v711
      %v738 = vpack.c.bf16 %v714, %v713
      %v739 = vpack.c.bf16 %v716, %v715
      %v740 = vpack.c.bf16 %v718, %v717
      %v741 = vpack.c.bf16 %v720, %v719
      %v742 = vpack.c.bf16 %v722, %v721
      %v743 = vpack.c.bf16 %v724, %v723
      %v744 = vpack.c.bf16 %v726, %v725
      %v745 = vpack.c.bf16 %v728, %v727
      %v746 = vpack.c.bf16 %v730, %v729
      %v747 = vld [vmem:[%s4] sm:$0x1]
      %v749 = vsel %vm651, %v731, 0
      %v752 = vsel %vm651, %v732, 0
      %v755 = vsel %vm651, %v733, 0
      %v758 = vsel %vm651, %v734, 0
      %v761 = vsel %vm651, %v735, 0
      %v764 = vsel %vm651, %v736, 0
      %v767 = vsel %vm651, %v737, 0
      %v770 = vsel %vm651, %v738, 0
      %v773 = vsel %vm651, %v739, 0
      %v776 = vsel %vm651, %v740, 0
      %v779 = vsel %vm651, %v741, 0
      %v782 = vsel %vm651, %v742, 0
      %v785 = vsel %vm651, %v743, 0
      %v788 = vsel %vm651, %v744, 0
      %v791 = vsel %vm651, %v745, 0
      %v794 = vsel %vm651, %v746, 0
      %vm796 = vcmask 1040384
      %v798 = vsel %vm796, %v747, 0
      %800 = vmatprep.subr.bf16.mxu0 0
      %801 = vmatpush1.bf16.msra.mxu0 %v798
      %802 = vmatprep.subr.bf16.mxu0 0
      %803 = vmatpush1.bf16.msra.mxu0 0
      %804 = vmatprep.subr.bf16.mxu0 0
      %805 = vmatpush1.bf16.msra.mxu0 0
      %806 = vmatprep.subr.bf16.mxu0 0
      %807 = vmatpush1.bf16.msra.mxu0 0
      %808 = vmatprep.subr.bf16.mxu0 0
      %809 = vmatpush1.bf16.msra.mxu0 0
      %810 = vmatprep.subr.bf16.mxu0 0
      %811 = vmatpush1.bf16.msra.mxu0 0
      %812 = vmatprep.subr.bf16.mxu0 0
      %813 = vmatpush1.bf16.msra.mxu0 0
      %814 = vmatprep.subr.bf16.mxu0 0
      %815 = vmatpush1.bf16.msra.mxu0 0
      %816 = vmatprep.subr.bf16.mxu0 0
      %817 = vmatpush1.bf16.msra.mxu0 0
      %818 = vmatprep.subr.bf16.mxu0 0
      %819 = vmatpush1.bf16.msra.mxu0 0
      %820 = vmatprep.subr.bf16.mxu0 0
      %821 = vmatpush1.bf16.msra.mxu0 0
      %822 = vmatprep.subr.bf16.mxu0 0
      %823 = vmatpush1.bf16.msra.mxu0 0
      %824 = vmatprep.subr.bf16.mxu0 0
      %825 = vmatpush1.bf16.msra.mxu0 0
      %826 = vmatprep.subr.bf16.mxu0 0
      %827 = vmatpush1.bf16.msra.mxu0 0
      %828 = vmatprep.subr.bf16.mxu0 0
      %829 = vmatpush1.bf16.msra.mxu0 0
      %830 = vmatprep.subr.bf16.mxu0 0
      %831 = vmatpush1.bf16.msra.mxu0 0
      %832 = vmatprep.mubr.bf16.mxu0 0
      %833 = vmatmul.mubr.bf16.gmra.mrb[0].mxu0 %v749
      %v834 = vpop.f32.mrb[0].mxu0
      %v835 = vadd.f32 0.0, %v834
      %v836 = vpop.f32.mrb[0].mxu0
      %v837 = vpop.f32.mrb[0].mxu0
      %v838 = vadd.f32 0.0, %v837
      %v839 = vpop.f32.mrb[0].mxu0
      %840 = vmatprep.mubr.bf16.mxu0 0
      %841 = vmatmul.mubr.bf16.gmra.mrb[0].mxu0 %v752
      %v842 = vpop.f32.mrb[0].mxu0
      %v843 = vadd.f32 0.0, %v842
      %v844 = vpop.f32.mrb[0].mxu0
      %v845 = vpop.f32.mrb[0].mxu0
      %v846 = vadd.f32 0.0, %v845
      %v847 = vpop.f32.mrb[0].mxu0
      %848 = vmatprep.mubr.bf16.mxu0 0
      %849 = vmatmul.mubr.bf16.gmra.mrb[0].mxu0 %v755
      %v850 = vpop.f32.mrb[0].mxu0
      %v851 = vadd.f32 0.0, %v850
      %v852 = vpop.f32.mrb[0].mxu0
      %v853 = vpop.f32.mrb[0].mxu0
      %v854 = vadd.f32 0.0, %v853
      %v855 = vpop.f32.mrb[0].mxu0
      %856 = vmatprep.mubr.bf16.mxu0 0
      %857 = vmatmul.mubr.bf16.gmra.mrb[0].mxu0 %v758
      %v858 = vpop.f32.mrb[0].mxu0
      %v859 = vadd.f32 0.0, %v858
      %v860 = vpop.f32.mrb[0].mxu0
      %v861 = vpop.f32.mrb[0].mxu0
      %v862 = vadd.f32 0.0, %v861
      %v863 = vpop.f32.mrb[0].mxu0
      %864 = vmatprep.mubr.bf16.mxu0 0
      %865 = vmatmul.mubr.bf16.gmra.mrb[0].mxu0 %v761
      %v866 = vpop.f32.mrb[0].mxu0
      %v867 = vadd.f32 0.0, %v866
      %v868 = vpop.f32.mrb[0].mxu0
      %v869 = vpop.f32.mrb[0].mxu0
      %v870 = vadd.f32 0.0, %v869
      %v871 = vpop.f32.mrb[0].mxu0
      %872 = vmatprep.mubr.bf16.mxu0 0
      %873 = vmatmul.mubr.bf16.gmra.mrb[0].mxu0 %v764
      %v874 = vpop.f32.mrb[0].mxu0
      %v875 = vadd.f32 0.0, %v874
      %v876 = vpop.f32.mrb[0].mxu0
      %v877 = vpop.f32.mrb[0].mxu0
      %v878 = vadd.f32 0.0, %v877
      %v879 = vpop.f32.mrb[0].mxu0
      %880 = vmatprep.mubr.bf16.mxu0 0
      %881 = vmatmul.mubr.bf16.gmra.mrb[0].mxu0 %v767
      %v882 = vpop.f32.mrb[0].mxu0
      %v883 = vadd.f32 0.0, %v882
      %v884 = vpop.f32.mrb[0].mxu0
      %v885 = vpop.f32.mrb[0].mxu0
      %v886 = vadd.f32 0.0, %v885
      %v887 = vpop.f32.mrb[0].mxu0
      %888 = vmatprep.mubr.bf16.mxu0 0
      %889 = vmatmul.mubr.bf16.gmra.mrb[0].mxu0 %v770
      %v890 = vpop.f32.mrb[0].mxu0
      %v891 = vadd.f32 0.0, %v890
      %v892 = vpop.f32.mrb[0].mxu0
      %v893 = vpop.f32.mrb[0].mxu0
      %v894 = vadd.f32 0.0, %v893
      %v895 = vpop.f32.mrb[0].mxu0
      %896 = vmatprep.mubr.bf16.mxu0 0
      %897 = vmatmul.mubr.bf16.gmra.mrb[0].mxu0 %v773
      %v898 = vpop.f32.mrb[0].mxu0
      %v899 = vadd.f32 0.0, %v898
      %v900 = vpop.f32.mrb[0].mxu0
      %v901 = vpop.f32.mrb[0].mxu0
      %v902 = vadd.f32 0.0, %v901
      %v903 = vpop.f32.mrb[0].mxu0
      %904 = vmatprep.mubr.bf16.mxu0 0
      %905 = vmatmul.mubr.bf16.gmra.mrb[0].mxu0 %v776
      %v906 = vpop.f32.mrb[0].mxu0
      %v907 = vadd.f32 0.0, %v906
      %v908 = vpop.f32.mrb[0].mxu0
      %v909 = vpop.f32.mrb[0].mxu0
      %v910 = vadd.f32 0.0, %v909
      %v911 = vpop.f32.mrb[0].mxu0
      %912 = vmatprep.mubr.bf16.mxu0 0
      %913 = vmatmul.mubr.bf16.gmra.mrb[0].mxu0 %v779
      %v914 = vpop.f32.mrb[0].mxu0
      %v915 = vadd.f32 0.0, %v914
      %v916 = vpop.f32.mrb[0].mxu0
      %v917 = vpop.f32.mrb[0].mxu0
      %v918 = vadd.f32 0.0, %v917
      %v919 = vpop.f32.mrb[0].mxu0
      %920 = vmatprep.mubr.bf16.mxu0 0
      %921 = vmatmul.mubr.bf16.gmra.mrb[0].mxu0 %v782
      %v922 = vpop.f32.mrb[0].mxu0
      %v923 = vadd.f32 0.0, %v922
      %v924 = vpop.f32.mrb[0].mxu0
      %v925 = vpop.f32.mrb[0].mxu0
      %v926 = vadd.f32 0.0, %v925
      %v927 = vpop.f32.mrb[0].mxu0
      %928 = vmatprep.mubr.bf16.mxu0 0
      %929 = vmatmul.mubr.bf16.gmra.mrb[0].mxu0 %v785
      %v930 = vpop.f32.mrb[0].mxu0
      %v931 = vadd.f32 0.0, %v930
      %v932 = vpop.f32.mrb[0].mxu0
      %v933 = vpop.f32.mrb[0].mxu0
      %v934 = vadd.f32 0.0, %v933
      %v935 = vpop.f32.mrb[0].mxu0
      %936 = vmatprep.mubr.bf16.mxu0 0
      %937 = vmatmul.mubr.bf16.gmra.mrb[0].mxu0 %v788
      %v938 = vpop.f32.mrb[0].mxu0
      %v939 = vadd.f32 0.0, %v938
      %v940 = vpop.f32.mrb[0].mxu0
      %v941 = vpop.f32.mrb[0].mxu0
      %v942 = vadd.f32 0.0, %v941
      %v943 = vpop.f32.mrb[0].mxu0
      %944 = vmatprep.mubr.bf16.mxu0 0
      %945 = vmatmul.mubr.bf16.gmra.mrb[0].mxu0 %v791
      %v946 = vpop.f32.mrb[0].mxu0
      %v947 = vadd.f32 0.0, %v946
      %v948 = vpop.f32.mrb[0].mxu0
      %v949 = vpop.f32.mrb[0].mxu0
      %v950 = vadd.f32 0.0, %v949
      %v951 = vpop.f32.mrb[0].mxu0
      %952 = vmatprep.mubr.bf16.mxu0 0
      %953 = vmatmul.mubr.bf16.gmra.mrb[0].mxu0 %v794
      %v954 = vpop.f32.mrb[0].mxu0
      %v955 = vadd.f32 0.0, %v954
      %v956 = vpop.f32.mrb[0].mxu0
      %v957 = vpop.f32.mrb[0].mxu0
      %v958 = vadd.f32 0.0, %v957
      %v959 = vpop.f32.mrb[0].mxu0
      %960 = vdwg.mxu0
      %962 = vset.pattern.permute.xlu0 0
      %963 = vperm.xlu0 %962, %v285
      %v964 = vpop.permute.xlu0 %963
      %967 = vset.pattern.permute.xlu0 0
      %968 = vperm.xlu0 %967, %v286
      %v969 = vpop.permute.xlu0 %968
      %972 = vset.pattern.permute.xlu0 0
      %973 = vperm.xlu0 %972, %v287
      %v974 = vpop.permute.xlu0 %973
      %977 = vset.pattern.permute.xlu0 0
      %978 = vperm.xlu0 %977, %v288
      %v979 = vpop.permute.xlu0 %978
      %982 = vset.pattern.permute.xlu0 0
      %983 = vperm.xlu0 %982, %v289
      %v984 = vpop.permute.xlu0 %983
      %987 = vset.pattern.permute.xlu0 0
      %988 = vperm.xlu0 %987, %v290
      %v989 = vpop.permute.xlu0 %988
      %992 = vset.pattern.permute.xlu0 0
      %993 = vperm.xlu0 %992, %v291
      %v994 = vpop.permute.xlu0 %993
      %997 = vset.pattern.permute.xlu0 0
      %998 = vperm.xlu0 %997, %v292
      %v999 = vpop.permute.xlu0 %998
      %1002 = vset.pattern.permute.xlu0 0
      %1003 = vperm.xlu0 %1002, %v293
      %v1004 = vpop.permute.xlu0 %1003
      %1007 = vset.pattern.permute.xlu0 0
      %1008 = vperm.xlu0 %1007, %v294
      %v1009 = vpop.permute.xlu0 %1008
      %1012 = vset.pattern.permute.xlu0 0
      %1013 = vperm.xlu0 %1012, %v295
      %v1014 = vpop.permute.xlu0 %1013
      %1017 = vset.pattern.permute.xlu0 0
      %1018 = vperm.xlu0 %1017, %v296
      %v1019 = vpop.permute.xlu0 %1018
      %1022 = vset.pattern.permute.xlu0 0
      %1023 = vperm.xlu0 %1022, %v297
      %v1024 = vpop.permute.xlu0 %1023
      %1027 = vset.pattern.permute.xlu0 0
      %1028 = vperm.xlu0 %1027, %v298
      %v1029 = vpop.permute.xlu0 %1028
      %1032 = vset.pattern.permute.xlu0 0
      %1033 = vperm.xlu0 %1032, %v299
      %v1034 = vpop.permute.xlu0 %1033
      %1037 = vset.pattern.permute.xlu0 0
      %1038 = vperm.xlu0 %1037, %v300
      %v1039 = vpop.permute.xlu0 %1038
      %1042 = vset.pattern.permute.xlu0 0
      %1043 = vperm.xlu0 %1042, %v301
      %v1044 = vpop.permute.xlu0 %1043
      %1047 = vset.pattern.permute.xlu0 0
      %1048 = vperm.xlu0 %1047, %v302
      %v1049 = vpop.permute.xlu0 %1048
      %1052 = vset.pattern.permute.xlu0 0
      %1053 = vperm.xlu0 %1052, %v303
      %v1054 = vpop.permute.xlu0 %1053
      %1057 = vset.pattern.permute.xlu0 0
      %1058 = vperm.xlu0 %1057, %v304
      %v1059 = vpop.permute.xlu0 %1058
      %1062 = vset.pattern.permute.xlu0 0
      %1063 = vperm.xlu0 %1062, %v305
      %v1064 = vpop.permute.xlu0 %1063
      %1067 = vset.pattern.permute.xlu0 0
      %1068 = vperm.xlu0 %1067, %v306
      %v1069 = vpop.permute.xlu0 %1068
      %1072 = vset.pattern.permute.xlu0 0
      %1073 = vperm.xlu0 %1072, %v307
      %v1074 = vpop.permute.xlu0 %1073
      %1077 = vset.pattern.permute.xlu0 0
      %1078 = vperm.xlu0 %1077, %v308
      %v1079 = vpop.permute.xlu0 %1078
      %1082 = vset.pattern.permute.xlu0 0
      %1083 = vperm.xlu0 %1082, %v309
      %v1084 = vpop.permute.xlu0 %1083
      %1087 = vset.pattern.permute.xlu0 0
      %1088 = vperm.xlu0 %1087, %v310
      %v1089 = vpop.permute.xlu0 %1088
      %1092 = vset.pattern.permute.xlu0 0
      %1093 = vperm.xlu0 %1092, %v311
      %v1094 = vpop.permute.xlu0 %1093
      %1097 = vset.pattern.permute.xlu0 0
      %1098 = vperm.xlu0 %1097, %v312
      %v1099 = vpop.permute.xlu0 %1098
      %1102 = vset.pattern.permute.xlu0 0
      %1103 = vperm.xlu0 %1102, %v313
      %v1104 = vpop.permute.xlu0 %1103
      %1107 = vset.pattern.permute.xlu0 0
      %1108 = vperm.xlu0 %1107, %v314
      %v1109 = vpop.permute.xlu0 %1108
      %1112 = vset.pattern.permute.xlu0 0
      %1113 = vperm.xlu0 %1112, %v315
      %v1114 = vpop.permute.xlu0 %1113
      %1117 = vset.pattern.permute.xlu0 0
      %1118 = vperm.xlu0 %1117, %v316
      %v1119 = vpop.permute.xlu0 %1118
      %v1121 = vmul.f32 %v835, %v964
      %v1122 = vmul.f32 %v838, %v969
      %v1123 = vmul.f32 %v843, %v974
      %v1124 = vmul.f32 %v846, %v979
      %v1125 = vmul.f32 %v851, %v984
      %v1126 = vmul.f32 %v854, %v989
      %v1127 = vmul.f32 %v859, %v994
      %v1128 = vmul.f32 %v862, %v999
      %v1129 = vmul.f32 %v867, %v1004
      %v1130 = vmul.f32 %v870, %v1009
      %v1131 = vmul.f32 %v875, %v1014
      %v1132 = vmul.f32 %v878, %v1019
      %v1133 = vmul.f32 %v883, %v1024
      %v1134 = vmul.f32 %v886, %v1029
      %v1135 = vmul.f32 %v891, %v1034
      %v1136 = vmul.f32 %v894, %v1039
      %v1137 = vmul.f32 %v899, %v1044
      %v1138 = vmul.f32 %v902, %v1049
      %v1139 = vmul.f32 %v907, %v1054
      %v1140 = vmul.f32 %v910, %v1059
      %v1141 = vmul.f32 %v915, %v1064
      %v1142 = vmul.f32 %v918, %v1069
      %v1143 = vmul.f32 %v923, %v1074
      %v1144 = vmul.f32 %v926, %v1079
      %v1145 = vmul.f32 %v931, %v1084
      %v1146 = vmul.f32 %v934, %v1089
      %v1147 = vmul.f32 %v939, %v1094
      %v1148 = vmul.f32 %v942, %v1099
      %v1149 = vmul.f32 %v947, %v1104
      %v1150 = vmul.f32 %v950, %v1109
      %v1151 = vmul.f32 %v955, %v1114
      %v1152 = vmul.f32 %v958, %v1119
      %v1153 = vadd.f32 %v698, %v1121
      %v1154 = vadd.f32 %v698, %v1122
      %v1155 = vadd.f32 %v698, %v1123
      %v1156 = vadd.f32 %v698, %v1124
      %v1157 = vadd.f32 %v698, %v1125
      %v1158 = vadd.f32 %v698, %v1126
      %v1159 = vadd.f32 %v698, %v1127
      %v1160 = vadd.f32 %v698, %v1128
      %v1161 = vadd.f32 %v698, %v1129
      %v1162 = vadd.f32 %v698, %v1130
      %v1163 = vadd.f32 %v698, %v1131
      %v1164 = vadd.f32 %v698, %v1132
      %v1165 = vadd.f32 %v698, %v1133
      %v1166 = vadd.f32 %v698, %v1134
      %v1167 = vadd.f32 %v698, %v1135
      %v1168 = vadd.f32 %v698, %v1136
      %v1169 = vadd.f32 %v698, %v1137
      %v1170 = vadd.f32 %v698, %v1138
      %v1171 = vadd.f32 %v698, %v1139
      %v1172 = vadd.f32 %v698, %v1140
      %v1173 = vadd.f32 %v698, %v1141
      %v1174 = vadd.f32 %v698, %v1142
      %v1175 = vadd.f32 %v698, %v1143
      %v1176 = vadd.f32 %v698, %v1144
      %v1177 = vadd.f32 %v698, %v1145
      %v1178 = vadd.f32 %v698, %v1146
      %v1179 = vadd.f32 %v698, %v1147
      %v1180 = vadd.f32 %v698, %v1148
      %v1181 = vadd.f32 %v698, %v1149
      %v1182 = vadd.f32 %v698, %v1150
      %v1183 = vadd.f32 %v698, %v1151
      %v1184 = vadd.f32 %v698, %v1152
      %v1185 = vld [vmem:[#allocation2 + $0x8] sm:$0xff]
      %v1186 = vld [vmem:[#allocation2 + $0x10] sm:$0xff]
      %v1187 = vld [vmem:[#allocation2 + $0x18] sm:$0xff]
      %v1188 = vld [vmem:[#allocation2 + $0x20] sm:$0xff]
      %v1189 = vld [vmem:[#allocation2 + $0x28] sm:$0xff]
      %v1190 = vld [vmem:[#allocation2 + $0x30] sm:$0xff]
      %v1191 = vld [vmem:[#allocation2 + $0x38] sm:$0xff]
      %v1192 = vld [vmem:[#allocation2 + $0x40] sm:$0xff]
      %v1193 = vld [vmem:[#allocation2 + $0x48] sm:$0xff]
      %v1194 = vld [vmem:[#allocation2 + $0x50] sm:$0xff]
      %v1195 = vld [vmem:[#allocation2 + $0x58] sm:$0xff]
      %v1196 = vld [vmem:[#allocation2 + $0x60] sm:$0xff]
      %v1197 = vld [vmem:[#allocation2 + $0x68] sm:$0xff]
      %v1198 = vld [vmem:[#allocation2 + $0x70] sm:$0xff]
      %v1199 = vld [vmem:[#allocation2 + $0x78] sm:$0xff]
      %v1200 = vld [vmem:[#allocation2 + $0x80] sm:$0xff]
      %v1201 = vld [vmem:[#allocation2 + $0x88] sm:$0xff]
      %v1202 = vld [vmem:[#allocation2 + $0x90] sm:$0xff]
      %v1203 = vld [vmem:[#allocation2 + $0x98] sm:$0xff]
      %v1204 = vld [vmem:[#allocation2 + $0xa0] sm:$0xff]
      %v1205 = vld [vmem:[#allocation2 + $0xa8] sm:$0xff]
      %v1206 = vld [vmem:[#allocation2 + $0xb0] sm:$0xff]
      %v1207 = vld [vmem:[#allocation2 + $0xb8] sm:$0xff]
      %v1208 = vld [vmem:[#allocation2 + $0xc0] sm:$0xff]
      %v1209 = vld [vmem:[#allocation2 + $0xc8] sm:$0xff]
      %v1210 = vld [vmem:[#allocation2 + $0xd0] sm:$0xff]
      %v1211 = vld [vmem:[#allocation2 + $0xd8] sm:$0xff]
      %v1212 = vld [vmem:[#allocation2 + $0xe0] sm:$0xff]
      %v1213 = vld [vmem:[#allocation2 + $0xe8] sm:$0xff]
      %v1214 = vld [vmem:[#allocation2 + $0xf0] sm:$0xff]
      %v1215 = vld [vmem:[#allocation2 + $0xf8] sm:$0xff]
      %v1216 = vld [vmem:[#allocation2 + $0x100] sm:$0xff]
      %v1217 = vpack.c.bf16 %v1186, %v1185
      %v1218 = vpack.c.bf16 %v1188, %v1187
      %v1219 = vpack.c.bf16 %v1190, %v1189
      %v1220 = vpack.c.bf16 %v1192, %v1191
      %v1221 = vpack.c.bf16 %v1194, %v1193
      %v1222 = vpack.c.bf16 %v1196, %v1195
      %v1223 = vpack.c.bf16 %v1198, %v1197
      %v1224 = vpack.c.bf16 %v1200, %v1199
      %v1225 = vpack.c.bf16 %v1202, %v1201
      %v1226 = vpack.c.bf16 %v1204, %v1203
      %v1227 = vpack.c.bf16 %v1206, %v1205
      %v1228 = vpack.c.bf16 %v1208, %v1207
      %v1229 = vpack.c.bf16 %v1210, %v1209
      %v1230 = vpack.c.bf16 %v1212, %v1211
      %v1231 = vpack.c.bf16 %v1214, %v1213
      %v1232 = vpack.c.bf16 %v1216, %v1215
      %s1233 = scalar_lea.vmem %s4, 1
      %v1234 = vld [vmem:[%s1233] sm:$0x1]
      %v1236 = vsel %vm651, %v1217, 0
      %v1239 = vsel %vm651, %v1218, 0
      %v1242 = vsel %vm651, %v1219, 0
      %v1245 = vsel %vm651, %v1220, 0
      %v1248 = vsel %vm651, %v1221, 0
      %v1251 = vsel %vm651, %v1222, 0
      %v1254 = vsel %vm651, %v1223, 0
      %v1257 = vsel %vm651, %v1224, 0
      %v1260 = vsel %vm651, %v1225, 0
      %v1263 = vsel %vm651, %v1226, 0
      %v1266 = vsel %vm651, %v1227, 0
      %v1269 = vsel %vm651, %v1228, 0
      %v1272 = vsel %vm651, %v1229, 0
      %v1275 = vsel %vm651, %v1230, 0
      %v1278 = vsel %vm651, %v1231, 0
      %v1281 = vsel %vm651, %v1232, 0
      %v1284 = vsel %vm796, %v1234, 0
      %1286 = vmatprep.subr.bf16.mxu0 0
      %1287 = vmatpush1.bf16.msra.mxu0 %v1284
      %1288 = vmatprep.subr.bf16.mxu0 0
      %1289 = vmatpush1.bf16.msra.mxu0 0
      %1290 = vmatprep.subr.bf16.mxu0 0
      %1291 = vmatpush1.bf16.msra.mxu0 0
      %1292 = vmatprep.subr.bf16.mxu0 0
      %1293 = vmatpush1.bf16.msra.mxu0 0
      %1294 = vmatprep.subr.bf16.mxu0 0
      %1295 = vmatpush1.bf16.msra.mxu0 0
      %1296 = vmatprep.subr.bf16.mxu0 0
      %1297 = vmatpush1.bf16.msra.mxu0 0
      %1298 = vmatprep.subr.bf16.mxu0 0
      %1299 = vmatpush1.bf16.msra.mxu0 0
      %1300 = vmatprep.subr.bf16.mxu0 0
      %1301 = vmatpush1.bf16.msra.mxu0 0
      %1302 = vmatprep.subr.bf16.mxu0 0
      %1303 = vmatpush1.bf16.msra.mxu0 0
      %1304 = vmatprep.subr.bf16.mxu0 0
      %1305 = vmatpush1.bf16.msra.mxu0 0
      %1306 = vmatprep.subr.bf16.mxu0 0
      %1307 = vmatpush1.bf16.msra.mxu0 0
      %1308 = vmatprep.subr.bf16.mxu0 0
      %1309 = vmatpush1.bf16.msra.mxu0 0
      %1310 = vmatprep.subr.bf16.mxu0 0
      %1311 = vmatpush1.bf16.msra.mxu0 0
      %1312 = vmatprep.subr.bf16.mxu0 0
      %1313 = vmatpush1.bf16.msra.mxu0 0
      %1314 = vmatprep.subr.bf16.mxu0 0
      %1315 = vmatpush1.bf16.msra.mxu0 0
      %1316 = vmatprep.subr.bf16.mxu0 0
      %1317 = vmatpush1.bf16.msra.mxu0 0
      %1318 = vmatprep.mubr.bf16.mxu0 0
      %1319 = vmatmul.mubr.bf16.gmra.mrb[0].mxu0 %v1236
      %v1320 = vpop.f32.mrb[0].mxu0
      %v1321 = vadd.f32 0.0, %v1320
      %v1322 = vpop.f32.mrb[0].mxu0
      %v1323 = vpop.f32.mrb[0].mxu0
      %v1324 = vadd.f32 0.0, %v1323
      %v1325 = vpop.f32.mrb[0].mxu0
      %1326 = vmatprep.mubr.bf16.mxu0 0
      %1327 = vmatmul.mubr.bf16.gmra.mrb[0].mxu0 %v1239
      %v1328 = vpop.f32.mrb[0].mxu0
      %v1329 = vadd.f32 0.0, %v1328
      %v1330 = vpop.f32.mrb[0].mxu0
      %v1331 = vpop.f32.mrb[0].mxu0
      %v1332 = vadd.f32 0.0, %v1331
      %v1333 = vpop.f32.mrb[0].mxu0
      %1334 = vmatprep.mubr.bf16.mxu0 0
      %1335 = vmatmul.mubr.bf16.gmra.mrb[0].mxu0 %v1242
      %v1336 = vpop.f32.mrb[0].mxu0
      %v1337 = vadd.f32 0.0, %v1336
      %v1338 = vpop.f32.mrb[0].mxu0
      %v1339 = vpop.f32.mrb[0].mxu0
      %v1340 = vadd.f32 0.0, %v1339
      %v1341 = vpop.f32.mrb[0].mxu0
      %1342 = vmatprep.mubr.bf16.mxu0 0
      %1343 = vmatmul.mubr.bf16.gmra.mrb[0].mxu0 %v1245
      %v1344 = vpop.f32.mrb[0].mxu0
      %v1345 = vadd.f32 0.0, %v1344
      %v1346 = vpop.f32.mrb[0].mxu0
      %v1347 = vpop.f32.mrb[0].mxu0
      %v1348 = vadd.f32 0.0, %v1347
      %v1349 = vpop.f32.mrb[0].mxu0
      %1350 = vmatprep.mubr.bf16.mxu0 0
      %1351 = vmatmul.mubr.bf16.gmra.mrb[0].mxu0 %v1248
      %v1352 = vpop.f32.mrb[0].mxu0
      %v1353 = vadd.f32 0.0, %v1352
      %v1354 = vpop.f32.mrb[0].mxu0
      %v1355 = vpop.f32.mrb[0].mxu0
      %v1356 = vadd.f32 0.0, %v1355
      %v1357 = vpop.f32.mrb[0].mxu0
      %1358 = vmatprep.mubr.bf16.mxu0 0
      %1359 = vmatmul.mubr.bf16.gmra.mrb[0].mxu0 %v1251
      %v1360 = vpop.f32.mrb[0].mxu0
      %v1361 = vadd.f32 0.0, %v1360
      %v1362 = vpop.f32.mrb[0].mxu0
      %v1363 = vpop.f32.mrb[0].mxu0
      %v1364 = vadd.f32 0.0, %v1363
      %v1365 = vpop.f32.mrb[0].mxu0
      %1366 = vmatprep.mubr.bf16.mxu0 0
      %1367 = vmatmul.mubr.bf16.gmra.mrb[0].mxu0 %v1254
      %v1368 = vpop.f32.mrb[0].mxu0
      %v1369 = vadd.f32 0.0, %v1368
      %v1370 = vpop.f32.mrb[0].mxu0
      %v1371 = vpop.f32.mrb[0].mxu0
      %v1372 = vadd.f32 0.0, %v1371
      %v1373 = vpop.f32.mrb[0].mxu0
      %1374 = vmatprep.mubr.bf16.mxu0 0
      %1375 = vmatmul.mubr.bf16.gmra.mrb[0].mxu0 %v1257
      %v1376 = vpop.f32.mrb[0].mxu0
      %v1377 = vadd.f32 0.0, %v1376
      %v1378 = vpop.f32.mrb[0].mxu0
      %v1379 = vpop.f32.mrb[0].mxu0
      %v1380 = vadd.f32 0.0, %v1379
      %v1381 = vpop.f32.mrb[0].mxu0
      %1382 = vmatprep.mubr.bf16.mxu0 0
      %1383 = vmatmul.mubr.bf16.gmra.mrb[0].mxu0 %v1260
      %v1384 = vpop.f32.mrb[0].mxu0
      %v1385 = vadd.f32 0.0, %v1384
      %v1386 = vpop.f32.mrb[0].mxu0
      %v1387 = vpop.f32.mrb[0].mxu0
      %v1388 = vadd.f32 0.0, %v1387
      %v1389 = vpop.f32.mrb[0].mxu0
      %1390 = vmatprep.mubr.bf16.mxu0 0
      %1391 = vmatmul.mubr.bf16.gmra.mrb[0].mxu0 %v1263
      %v1392 = vpop.f32.mrb[0].mxu0
      %v1393 = vadd.f32 0.0, %v1392
      %v1394 = vpop.f32.mrb[0].mxu0
      %v1395 = vpop.f32.mrb[0].mxu0
      %v1396 = vadd.f32 0.0, %v1395
      %v1397 = vpop.f32.mrb[0].mxu0
      %1398 = vmatprep.mubr.bf16.mxu0 0
      %1399 = vmatmul.mubr.bf16.gmra.mrb[0].mxu0 %v1266
      %v1400 = vpop.f32.mrb[0].mxu0
      %v1401 = vadd.f32 0.0, %v1400
      %v1402 = vpop.f32.mrb[0].mxu0
      %v1403 = vpop.f32.mrb[0].mxu0
      %v1404 = vadd.f32 0.0, %v1403
      %v1405 = vpop.f32.mrb[0].mxu0
      %1406 = vmatprep.mubr.bf16.mxu0 0
      %1407 = vmatmul.mubr.bf16.gmra.mrb[0].mxu0 %v1269
      %v1408 = vpop.f32.mrb[0].mxu0
      %v1409 = vadd.f32 0.0, %v1408
      %v1410 = vpop.f32.mrb[0].mxu0
      %v1411 = vpop.f32.mrb[0].mxu0
      %v1412 = vadd.f32 0.0, %v1411
      %v1413 = vpop.f32.mrb[0].mxu0
      %1414 = vmatprep.mubr.bf16.mxu0 0
      %1415 = vmatmul.mubr.bf16.gmra.mrb[0].mxu0 %v1272
      %v1416 = vpop.f32.mrb[0].mxu0
      %v1417 = vadd.f32 0.0, %v1416
      %v1418 = vpop.f32.mrb[0].mxu0
      %v1419 = vpop.f32.mrb[0].mxu0
      %v1420 = vadd.f32 0.0, %v1419
      %v1421 = vpop.f32.mrb[0].mxu0
      %1422 = vmatprep.mubr.bf16.mxu0 0
      %1423 = vmatmul.mubr.bf16.gmra.mrb[0].mxu0 %v1275
      %v1424 = vpop.f32.mrb[0].mxu0
      %v1425 = vadd.f32 0.0, %v1424
      %v1426 = vpop.f32.mrb[0].mxu0
      %v1427 = vpop.f32.mrb[0].mxu0
      %v1428 = vadd.f32 0.0, %v1427
      %v1429 = vpop.f32.mrb[0].mxu0
      %1430 = vmatprep.mubr.bf16.mxu0 0
      %1431 = vmatmul.mubr.bf16.gmra.mrb[0].mxu0 %v1278
      %v1432 = vpop.f32.mrb[0].mxu0
      %v1433 = vadd.f32 0.0, %v1432
      %v1434 = vpop.f32.mrb[0].mxu0
      %v1435 = vpop.f32.mrb[0].mxu0
      %v1436 = vadd.f32 0.0, %v1435
      %v1437 = vpop.f32.mrb[0].mxu0
      %1438 = vmatprep.mubr.bf16.mxu0 0
      %1439 = vmatmul.mubr.bf16.gmra.mrb[0].mxu0 %v1281
      %v1440 = vpop.f32.mrb[0].mxu0
      %v1441 = vadd.f32 0.0, %v1440
      %v1442 = vpop.f32.mrb[0].mxu0
      %v1443 = vpop.f32.mrb[0].mxu0
      %v1444 = vadd.f32 0.0, %v1443
      %v1445 = vpop.f32.mrb[0].mxu0
      %1446 = vdwg.mxu0
      %v1447 = vadd.f32 %v1153, %v1321
      %v1448 = vadd.f32 %v1154, %v1324
      %v1449 = vadd.f32 %v1155, %v1329
      %v1450 = vadd.f32 %v1156, %v1332
      %v1451 = vadd.f32 %v1157, %v1337
      %v1452 = vadd.f32 %v1158, %v1340
      %v1453 = vadd.f32 %v1159, %v1345
      %v1454 = vadd.f32 %v1160, %v1348
      %v1455 = vadd.f32 %v1161, %v1353
      %v1456 = vadd.f32 %v1162, %v1356
      %v1457 = vadd.f32 %v1163, %v1361
      %v1458 = vadd.f32 %v1164, %v1364
      %v1459 = vadd.f32 %v1165, %v1369
      %v1460 = vadd.f32 %v1166, %v1372
      %v1461 = vadd.f32 %v1167, %v1377
      %v1462 = vadd.f32 %v1168, %v1380
      %v1463 = vadd.f32 %v1169, %v1385
      %v1464 = vadd.f32 %v1170, %v1388
      %v1465 = vadd.f32 %v1171, %v1393
      %v1466 = vadd.f32 %v1172, %v1396
      %v1467 = vadd.f32 %v1173, %v1401
      %v1468 = vadd.f32 %v1174, %v1404
      %v1469 = vadd.f32 %v1175, %v1409
      %v1470 = vadd.f32 %v1176, %v1412
      %v1471 = vadd.f32 %v1177, %v1417
      %v1472 = vadd.f32 %v1178, %v1420
      %v1473 = vadd.f32 %v1179, %v1425
      %v1474 = vadd.f32 %v1180, %v1428
      %v1475 = vadd.f32 %v1181, %v1433
      %v1476 = vadd.f32 %v1182, %v1436
      %v1477 = vadd.f32 %v1183, %v1441
      %v1478 = vadd.f32 %v1184, %v1444
      %v1479 = vld [vmem:[#allocation2 + $0x9] sm:$0xff]
      %v1480 = vld [vmem:[#allocation2 + $0x11] sm:$0xff]
      %v1481 = vld [vmem:[#allocation2 + $0x19] sm:$0xff]
      %v1482 = vld [vmem:[#allocation2 + $0x21] sm:$0xff]
      %v1483 = vld [vmem:[#allocation2 + $0x29] sm:$0xff]
      %v1484 = vld [vmem:[#allocation2 + $0x31] sm:$0xff]
      %v1485 = vld [vmem:[#allocation2 + $0x39] sm:$0xff]
      %v1486 = vld [vmem:[#allocation2 + $0x41] sm:$0xff]
      %v1487 = vld [vmem:[#allocation2 + $0x49] sm:$0xff]
      %v1488 = vld [vmem:[#allocation2 + $0x51] sm:$0xff]
      %v1489 = vld [vmem:[#allocation2 + $0x59] sm:$0xff]
      %v1490 = vld [vmem:[#allocation2 + $0x61] sm:$0xff]
      %v1491 = vld [vmem:[#allocation2 + $0x69] sm:$0xff]
      %v1492 = vld [vmem:[#allocation2 + $0x71] sm:$0xff]
      %v1493 = vld [vmem:[#allocation2 + $0x79] sm:$0xff]
      %v1494 = vld [vmem:[#allocation2 + $0x81] sm:$0xff]
      %v1495 = vld [vmem:[#allocation2 + $0x89] sm:$0xff]
      %v1496 = vld [vmem:[#allocation2 + $0x91] sm:$0xff]
      %v1497 = vld [vmem:[#allocation2 + $0x99] sm:$0xff]
      %v1498 = vld [vmem:[#allocation2 + $0xa1] sm:$0xff]
      %v1499 = vld [vmem:[#allocation2 + $0xa9] sm:$0xff]
      %v1500 = vld [vmem:[#allocation2 + $0xb1] sm:$0xff]
      %v1501 = vld [vmem:[#allocation2 + $0xb9] sm:$0xff]
      %v1502 = vld [vmem:[#allocation2 + $0xc1] sm:$0xff]
      %v1503 = vld [vmem:[#allocation2 + $0xc9] sm:$0xff]
      %v1504 = vld [vmem:[#allocation2 + $0xd1] sm:$0xff]
      %v1505 = vld [vmem:[#allocation2 + $0xd9] sm:$0xff]
      %v1506 = vld [vmem:[#allocation2 + $0xe1] sm:$0xff]
      %v1507 = vld [vmem:[#allocation2 + $0xe9] sm:$0xff]
      %v1508 = vld [vmem:[#allocation2 + $0xf1] sm:$0xff]
      %v1509 = vld [vmem:[#allocation2 + $0xf9] sm:$0xff]
      %v1510 = vld [vmem:[#allocation2 + $0x101] sm:$0xff]
      %v1511 = vpack.c.bf16 %v1480, %v1479
      %v1512 = vpack.c.bf16 %v1482, %v1481
      %v1513 = vpack.c.bf16 %v1484, %v1483
      %v1514 = vpack.c.bf16 %v1486, %v1485
      %v1515 = vpack.c.bf16 %v1488, %v1487
      %v1516 = vpack.c.bf16 %v1490, %v1489
      %v1517 = vpack.c.bf16 %v1492, %v1491
      %v1518 = vpack.c.bf16 %v1494, %v1493
      %v1519 = vpack.c.bf16 %v1496, %v1495
      %v1520 = vpack.c.bf16 %v1498, %v1497
      %v1521 = vpack.c.bf16 %v1500, %v1499
      %v1522 = vpack.c.bf16 %v1502, %v1501
      %v1523 = vpack.c.bf16 %v1504, %v1503
      %v1524 = vpack.c.bf16 %v1506, %v1505
      %v1525 = vpack.c.bf16 %v1508, %v1507
      %v1526 = vpack.c.bf16 %v1510, %v1509
      %s1527 = scalar_lea.vmem %s4, 2
      %v1528 = vld [vmem:[%s1527] sm:$0x1]
      %v1530 = vsel %vm651, %v1511, 0
      %v1533 = vsel %vm651, %v1512, 0
      %v1536 = vsel %vm651, %v1513, 0
      %v1539 = vsel %vm651, %v1514, 0
      %v1542 = vsel %vm651, %v1515, 0
      %v1545 = vsel %vm651, %v1516, 0
      %v1548 = vsel %vm651, %v1517, 0
      %v1551 = vsel %vm651, %v1518, 0
      %v1554 = vsel %vm651, %v1519, 0
      %v1557 = vsel %vm651, %v1520, 0
      %v1560 = vsel %vm651, %v1521, 0
      %v1563 = vsel %vm651, %v1522, 0
      %v1566 = vsel %vm651, %v1523, 0
      %v1569 = vsel %vm651, %v1524, 0
      %v1572 = vsel %vm651, %v1525, 0
      %v1575 = vsel %vm651, %v1526, 0
      %v1578 = vsel %vm796, %v1528, 0
      %1580 = vmatprep.subr.bf16.mxu0 0
      %1581 = vmatpush1.bf16.msra.mxu0 %v1578
      %1582 = vmatprep.subr.bf16.mxu0 0
      %1583 = vmatpush1.bf16.msra.mxu0 0
      %1584 = vmatprep.subr.bf16.mxu0 0
      %1585 = vmatpush1.bf16.msra.mxu0 0
      %1586 = vmatprep.subr.bf16.mxu0 0
      %1587 = vmatpush1.bf16.msra.mxu0 0
      %1588 = vmatprep.subr.bf16.mxu0 0
      %1589 = vmatpush1.bf16.msra.mxu0 0
      %1590 = vmatprep.subr.bf16.mxu0 0
      %1591 = vmatpush1.bf16.msra.mxu0 0
      %1592 = vmatprep.subr.bf16.mxu0 0
      %1593 = vmatpush1.bf16.msra.mxu0 0
      %1594 = vmatprep.subr.bf16.mxu0 0
      %1595 = vmatpush1.bf16.msra.mxu0 0
      %1596 = vmatprep.subr.bf16.mxu0 0
      %1597 = vmatpush1.bf16.msra.mxu0 0
      %1598 = vmatprep.subr.bf16.mxu0 0
      %1599 = vmatpush1.bf16.msra.mxu0 0
      %1600 = vmatprep.subr.bf16.mxu0 0
      %1601 = vmatpush1.bf16.msra.mxu0 0
      %1602 = vmatprep.subr.bf16.mxu0 0
      %1603 = vmatpush1.bf16.msra.mxu0 0
      %1604 = vmatprep.subr.bf16.mxu0 0
      %1605 = vmatpush1.bf16.msra.mxu0 0
      %1606 = vmatprep.subr.bf16.mxu0 0
      %1607 = vmatpush1.bf16.msra.mxu0 0
      %1608 = vmatprep.subr.bf16.mxu0 0
      %1609 = vmatpush1.bf16.msra.mxu0 0
      %1610 = vmatprep.subr.bf16.mxu0 0
      %1611 = vmatpush1.bf16.msra.mxu0 0
      %1612 = vmatprep.mubr.bf16.mxu0 0
      %1613 = vmatmul.mubr.bf16.gmra.mrb[0].mxu0 %v1530
      %v1614 = vpop.f32.mrb[0].mxu0
      %v1615 = vadd.f32 0.0, %v1614
      %v1616 = vpop.f32.mrb[0].mxu0
      %v1617 = vpop.f32.mrb[0].mxu0
      %v1618 = vadd.f32 0.0, %v1617
      %v1619 = vpop.f32.mrb[0].mxu0
      %1620 = vmatprep.mubr.bf16.mxu0 0
      %1621 = vmatmul.mubr.bf16.gmra.mrb[0].mxu0 %v1533
      %v1622 = vpop.f32.mrb[0].mxu0
      %v1623 = vadd.f32 0.0, %v1622
      %v1624 = vpop.f32.mrb[0].mxu0
      %v1625 = vpop.f32.mrb[0].mxu0
      %v1626 = vadd.f32 0.0, %v1625
      %v1627 = vpop.f32.mrb[0].mxu0
      %1628 = vmatprep.mubr.bf16.mxu0 0
      %1629 = vmatmul.mubr.bf16.gmra.mrb[0].mxu0 %v1536
      %v1630 = vpop.f32.mrb[0].mxu0
      %v1631 = vadd.f32 0.0, %v1630
      %v1632 = vpop.f32.mrb[0].mxu0
      %v1633 = vpop.f32.mrb[0].mxu0
      %v1634 = vadd.f32 0.0, %v1633
      %v1635 = vpop.f32.mrb[0].mxu0
      %1636 = vmatprep.mubr.bf16.mxu0 0
      %1637 = vmatmul.mubr.bf16.gmra.mrb[0].mxu0 %v1539
      %v1638 = vpop.f32.mrb[0].mxu0
      %v1639 = vadd.f32 0.0, %v1638
      %v1640 = vpop.f32.mrb[0].mxu0
      %v1641 = vpop.f32.mrb[0].mxu0
      %v1642 = vadd.f32 0.0, %v1641
      %v1643 = vpop.f32.mrb[0].mxu0
      %1644 = vmatprep.mubr.bf16.mxu0 0
      %1645 = vmatmul.mubr.bf16.gmra.mrb[0].mxu0 %v1542
      %v1646 = vpop.f32.mrb[0].mxu0
      %v1647 = vadd.f32 0.0, %v1646
      %v1648 = vpop.f32.mrb[0].mxu0
      %v1649 = vpop.f32.mrb[0].mxu0
      %v1650 = vadd.f32 0.0, %v1649
      %v1651 = vpop.f32.mrb[0].mxu0
      %1652 = vmatprep.mubr.bf16.mxu0 0
      %1653 = vmatmul.mubr.bf16.gmra.mrb[0].mxu0 %v1545
      %v1654 = vpop.f32.mrb[0].mxu0
      %v1655 = vadd.f32 0.0, %v1654
      %v1656 = vpop.f32.mrb[0].mxu0
      %v1657 = vpop.f32.mrb[0].mxu0
      %v1658 = vadd.f32 0.0, %v1657
      %v1659 = vpop.f32.mrb[0].mxu0
      %1660 = vmatprep.mubr.bf16.mxu0 0
      %1661 = vmatmul.mubr.bf16.gmra.mrb[0].mxu0 %v1548
      %v1662 = vpop.f32.mrb[0].mxu0
      %v1663 = vadd.f32 0.0, %v1662
      %v1664 = vpop.f32.mrb[0].mxu0
      %v1665 = vpop.f32.mrb[0].mxu0
      %v1666 = vadd.f32 0.0, %v1665
      %v1667 = vpop.f32.mrb[0].mxu0
      %1668 = vmatprep.mubr.bf16.mxu0 0
      %1669 = vmatmul.mubr.bf16.gmra.mrb[0].mxu0 %v1551
      %v1670 = vpop.f32.mrb[0].mxu0
      %v1671 = vadd.f32 0.0, %v1670
      %v1672 = vpop.f32.mrb[0].mxu0
      %v1673 = vpop.f32.mrb[0].mxu0
      %v1674 = vadd.f32 0.0, %v1673
      %v1675 = vpop.f32.mrb[0].mxu0
      %1676 = vmatprep.mubr.bf16.mxu0 0
      %1677 = vmatmul.mubr.bf16.gmra.mrb[0].mxu0 %v1554
      %v1678 = vpop.f32.mrb[0].mxu0
      %v1679 = vadd.f32 0.0, %v1678
      %v1680 = vpop.f32.mrb[0].mxu0
      %v1681 = vpop.f32.mrb[0].mxu0
      %v1682 = vadd.f32 0.0, %v1681
      %v1683 = vpop.f32.mrb[0].mxu0
      %1684 = vmatprep.mubr.bf16.mxu0 0
      %1685 = vmatmul.mubr.bf16.gmra.mrb[0].mxu0 %v1557
      %v1686 = vpop.f32.mrb[0].mxu0
      %v1687 = vadd.f32 0.0, %v1686
      %v1688 = vpop.f32.mrb[0].mxu0
      %v1689 = vpop.f32.mrb[0].mxu0
      %v1690 = vadd.f32 0.0, %v1689
      %v1691 = vpop.f32.mrb[0].mxu0
      %1692 = vmatprep.mubr.bf16.mxu0 0
      %1693 = vmatmul.mubr.bf16.gmra.mrb[0].mxu0 %v1560
      %v1694 = vpop.f32.mrb[0].mxu0
      %v1695 = vadd.f32 0.0, %v1694
      %v1696 = vpop.f32.mrb[0].mxu0
      %v1697 = vpop.f32.mrb[0].mxu0
      %v1698 = vadd.f32 0.0, %v1697
      %v1699 = vpop.f32.mrb[0].mxu0
      %1700 = vmatprep.mubr.bf16.mxu0 0
      %1701 = vmatmul.mubr.bf16.gmra.mrb[0].mxu0 %v1563
      %v1702 = vpop.f32.mrb[0].mxu0
      %v1703 = vadd.f32 0.0, %v1702
      %v1704 = vpop.f32.mrb[0].mxu0
      %v1705 = vpop.f32.mrb[0].mxu0
      %v1706 = vadd.f32 0.0, %v1705
      %v1707 = vpop.f32.mrb[0].mxu0
      %1708 = vmatprep.mubr.bf16.mxu0 0
      %1709 = vmatmul.mubr.bf16.gmra.mrb[0].mxu0 %v1566
      %v1710 = vpop.f32.mrb[0].mxu0
      %v1711 = vadd.f32 0.0, %v1710
      %v1712 = vpop.f32.mrb[0].mxu0
      %v1713 = vpop.f32.mrb[0].mxu0
      %v1714 = vadd.f32 0.0, %v1713
      %v1715 = vpop.f32.mrb[0].mxu0
      %1716 = vmatprep.mubr.bf16.mxu0 0
      %1717 = vmatmul.mubr.bf16.gmra.mrb[0].mxu0 %v1569
      %v1718 = vpop.f32.mrb[0].mxu0
      %v1719 = vadd.f32 0.0, %v1718
      %v1720 = vpop.f32.mrb[0].mxu0
      %v1721 = vpop.f32.mrb[0].mxu0
      %v1722 = vadd.f32 0.0, %v1721
      %v1723 = vpop.f32.mrb[0].mxu0
      %1724 = vmatprep.mubr.bf16.mxu0 0
      %1725 = vmatmul.mubr.bf16.gmra.mrb[0].mxu0 %v1572
      %v1726 = vpop.f32.mrb[0].mxu0
      %v1727 = vadd.f32 0.0, %v1726
      %v1728 = vpop.f32.mrb[0].mxu0
      %v1729 = vpop.f32.mrb[0].mxu0
      %v1730 = vadd.f32 0.0, %v1729
      %v1731 = vpop.f32.mrb[0].mxu0
      %1732 = vmatprep.mubr.bf16.mxu0 0
      %1733 = vmatmul.mubr.bf16.gmra.mrb[0].mxu0 %v1575
      %v1734 = vpop.f32.mrb[0].mxu0
      %v1735 = vadd.f32 0.0, %v1734
      %v1736 = vpop.f32.mrb[0].mxu0
      %v1737 = vpop.f32.mrb[0].mxu0
      %v1738 = vadd.f32 0.0, %v1737
      %v1739 = vpop.f32.mrb[0].mxu0
      %1740 = vdwg.mxu0
      %1741 = vset.pattern.permute.xlu0 1
      %1742 = vperm.xlu0 %1741, %v285
      %v1743 = vpop.permute.xlu0 %1742
      %1745 = vset.pattern.permute.xlu0 1
      %1746 = vperm.xlu0 %1745, %v286
      %v1747 = vpop.permute.xlu0 %1746
      %1749 = vset.pattern.permute.xlu0 1
      %1750 = vperm.xlu0 %1749, %v287
      %v1751 = vpop.permute.xlu0 %1750
      %1753 = vset.pattern.permute.xlu0 1
      %1754 = vperm.xlu0 %1753, %v288
      %v1755 = vpop.permute.xlu0 %1754
      %1757 = vset.pattern.permute.xlu0 1
      %1758 = vperm.xlu0 %1757, %v289
      %v1759 = vpop.permute.xlu0 %1758
      %1761 = vset.pattern.permute.xlu0 1
      %1762 = vperm.xlu0 %1761, %v290
      %v1763 = vpop.permute.xlu0 %1762
      %1765 = vset.pattern.permute.xlu0 1
      %1766 = vperm.xlu0 %1765, %v291
      %v1767 = vpop.permute.xlu0 %1766
      %1769 = vset.pattern.permute.xlu0 1
      %1770 = vperm.xlu0 %1769, %v292
      %v1771 = vpop.permute.xlu0 %1770
      %1773 = vset.pattern.permute.xlu0 1
      %1774 = vperm.xlu0 %1773, %v293
      %v1775 = vpop.permute.xlu0 %1774
      %1777 = vset.pattern.permute.xlu0 1
      %1778 = vperm.xlu0 %1777, %v294
      %v1779 = vpop.permute.xlu0 %1778
      %1781 = vset.pattern.permute.xlu0 1
      %1782 = vperm.xlu0 %1781, %v295
      %v1783 = vpop.permute.xlu0 %1782
      %1785 = vset.pattern.permute.xlu0 1
      %1786 = vperm.xlu0 %1785, %v296
      %v1787 = vpop.permute.xlu0 %1786
      %1789 = vset.pattern.permute.xlu0 1
      %1790 = vperm.xlu0 %1789, %v297
      %v1791 = vpop.permute.xlu0 %1790
      %1793 = vset.pattern.permute.xlu0 1
      %1794 = vperm.xlu0 %1793, %v298
      %v1795 = vpop.permute.xlu0 %1794
      %1797 = vset.pattern.permute.xlu0 1
      %1798 = vperm.xlu0 %1797, %v299
      %v1799 = vpop.permute.xlu0 %1798
      %1801 = vset.pattern.permute.xlu0 1
      %1802 = vperm.xlu0 %1801, %v300
      %v1803 = vpop.permute.xlu0 %1802
      %1805 = vset.pattern.permute.xlu0 1
      %1806 = vperm.xlu0 %1805, %v301
      %v1807 = vpop.permute.xlu0 %1806
      %1809 = vset.pattern.permute.xlu0 1
      %1810 = vperm.xlu0 %1809, %v302
      %v1811 = vpop.permute.xlu0 %1810
      %1813 = vset.pattern.permute.xlu0 1
      %1814 = vperm.xlu0 %1813, %v303
      %v1815 = vpop.permute.xlu0 %1814
      %1817 = vset.pattern.permute.xlu0 1
      %1818 = vperm.xlu0 %1817, %v304
      %v1819 = vpop.permute.xlu0 %1818
      %1821 = vset.pattern.permute.xlu0 1
      %1822 = vperm.xlu0 %1821, %v305
      %v1823 = vpop.permute.xlu0 %1822
      %1825 = vset.pattern.permute.xlu0 1
      %1826 = vperm.xlu0 %1825, %v306
      %v1827 = vpop.permute.xlu0 %1826
      %1829 = vset.pattern.permute.xlu0 1
      %1830 = vperm.xlu0 %1829, %v307
      %v1831 = vpop.permute.xlu0 %1830
      %1833 = vset.pattern.permute.xlu0 1
      %1834 = vperm.xlu0 %1833, %v308
      %v1835 = vpop.permute.xlu0 %1834
      %1837 = vset.pattern.permute.xlu0 1
      %1838 = vperm.xlu0 %1837, %v309
      %v1839 = vpop.permute.xlu0 %1838
      %1841 = vset.pattern.permute.xlu0 1
      %1842 = vperm.xlu0 %1841, %v310
      %v1843 = vpop.permute.xlu0 %1842
      %1845 = vset.pattern.permute.xlu0 1
      %1846 = vperm.xlu0 %1845, %v311
      %v1847 = vpop.permute.xlu0 %1846
      %1849 = vset.pattern.permute.xlu0 1
      %1850 = vperm.xlu0 %1849, %v312
      %v1851 = vpop.permute.xlu0 %1850
      %1853 = vset.pattern.permute.xlu0 1
      %1854 = vperm.xlu0 %1853, %v313
      %v1855 = vpop.permute.xlu0 %1854
      %1857 = vset.pattern.permute.xlu0 1
      %1858 = vperm.xlu0 %1857, %v314
      %v1859 = vpop.permute.xlu0 %1858
      %1861 = vset.pattern.permute.xlu0 1
      %1862 = vperm.xlu0 %1861, %v315
      %v1863 = vpop.permute.xlu0 %1862
      %1865 = vset.pattern.permute.xlu0 1
      %1866 = vperm.xlu0 %1865, %v316
      %v1867 = vpop.permute.xlu0 %1866
      %v1869 = vmul.f32 %v1615, %v1743
      %v1870 = vmul.f32 %v1618, %v1747
      %v1871 = vmul.f32 %v1623, %v1751
      %v1872 = vmul.f32 %v1626, %v1755
      %v1873 = vmul.f32 %v1631, %v1759
      %v1874 = vmul.f32 %v1634, %v1763
      %v1875 = vmul.f32 %v1639, %v1767
      %v1876 = vmul.f32 %v1642, %v1771
      %v1877 = vmul.f32 %v1647, %v1775
      %v1878 = vmul.f32 %v1650, %v1779
      %v1879 = vmul.f32 %v1655, %v1783
      %v1880 = vmul.f32 %v1658, %v1787
      %v1881 = vmul.f32 %v1663, %v1791
      %v1882 = vmul.f32 %v1666, %v1795
      %v1883 = vmul.f32 %v1671, %v1799
      %v1884 = vmul.f32 %v1674, %v1803
      %v1885 = vmul.f32 %v1679, %v1807
      %v1886 = vmul.f32 %v1682, %v1811
      %v1887 = vmul.f32 %v1687, %v1815
      %v1888 = vmul.f32 %v1690, %v1819
      %v1889 = vmul.f32 %v1695, %v1823
      %v1890 = vmul.f32 %v1698, %v1827
      %v1891 = vmul.f32 %v1703, %v1831
      %v1892 = vmul.f32 %v1706, %v1835
      %v1893 = vmul.f32 %v1711, %v1839
      %v1894 = vmul.f32 %v1714, %v1843
      %v1895 = vmul.f32 %v1719, %v1847
      %v1896 = vmul.f32 %v1722, %v1851
      %v1897 = vmul.f32 %v1727, %v1855
      %v1898 = vmul.f32 %v1730, %v1859
      %v1899 = vmul.f32 %v1735, %v1863
      %v1900 = vmul.f32 %v1738, %v1867
      %v1901 = vadd.f32 %v1447, %v1869
      %v1902 = vadd.f32 %v1448, %v1870
      %v1903 = vadd.f32 %v1449, %v1871
      %v1904 = vadd.f32 %v1450, %v1872
      %v1905 = vadd.f32 %v1451, %v1873
      %v1906 = vadd.f32 %v1452, %v1874
      %v1907 = vadd.f32 %v1453, %v1875
      %v1908 = vadd.f32 %v1454, %v1876
      %v1909 = vadd.f32 %v1455, %v1877
      %v1910 = vadd.f32 %v1456, %v1878
      %v1911 = vadd.f32 %v1457, %v1879
      %v1912 = vadd.f32 %v1458, %v1880
      %v1913 = vadd.f32 %v1459, %v1881
      %v1914 = vadd.f32 %v1460, %v1882
      %v1915 = vadd.f32 %v1461, %v1883
      %v1916 = vadd.f32 %v1462, %v1884
      %v1917 = vadd.f32 %v1463, %v1885
      %v1918 = vadd.f32 %v1464, %v1886
      %v1919 = vadd.f32 %v1465, %v1887
      %v1920 = vadd.f32 %v1466, %v1888
      %v1921 = vadd.f32 %v1467, %v1889
      %v1922 = vadd.f32 %v1468, %v1890
      %v1923 = vadd.f32 %v1469, %v1891
      %v1924 = vadd.f32 %v1470, %v1892
      %v1925 = vadd.f32 %v1471, %v1893
      %v1926 = vadd.f32 %v1472, %v1894
      %v1927 = vadd.f32 %v1473, %v1895
      %v1928 = vadd.f32 %v1474, %v1896
      %v1929 = vadd.f32 %v1475, %v1897
      %v1930 = vadd.f32 %v1476, %v1898
      %v1931 = vadd.f32 %v1477, %v1899
      %v1932 = vadd.f32 %v1478, %v1900
      %v1933 = vld [vmem:[#allocation2 + $0x17] sm:$0xff]
      %v1934 = vld [vmem:[#allocation2 + $0x1f] sm:$0xff]
      %v1935 = vld [vmem:[#allocation2 + $0x27] sm:$0xff]
      %v1936 = vld [vmem:[#allocation2 + $0x2f] sm:$0xff]
      %v1937 = vld [vmem:[#allocation2 + $0x37] sm:$0xff]
      %v1938 = vld [vmem:[#allocation2 + $0x3f] sm:$0xff]
      %v1939 = vld [vmem:[#allocation2 + $0x47] sm:$0xff]
      %v1940 = vld [vmem:[#allocation2 + $0x4f] sm:$0xff]
      %v1941 = vld [vmem:[#allocation2 + $0x57] sm:$0xff]
      %v1942 = vld [vmem:[#allocation2 + $0x5f] sm:$0xff]
      %v1943 = vld [vmem:[#allocation2 + $0x67] sm:$0xff]
      %v1944 = vld [vmem:[#allocation2 + $0x6f] sm:$0xff]
      %v1945 = vld [vmem:[#allocation2 + $0x77] sm:$0xff]
      %v1946 = vld [vmem:[#allocation2 + $0x7f] sm:$0xff]
      %v1947 = vld [vmem:[#allocation2 + $0x87] sm:$0xff]
      %v1948 = vld [vmem:[#allocation2 + $0x8f] sm:$0xff]
      %v1949 = vld [vmem:[#allocation2 + $0x97] sm:$0xff]
      %v1950 = vld [vmem:[#allocation2 + $0x9f] sm:$0xff]
      %v1951 = vld [vmem:[#allocation2 + $0xa7] sm:$0xff]
      %v1952 = vld [vmem:[#allocation2 + $0xaf] sm:$0xff]
      %v1953 = vld [vmem:[#allocation2 + $0xb7] sm:$0xff]
      %v1954 = vld [vmem:[#allocation2 + $0xbf] sm:$0xff]
      %v1955 = vld [vmem:[#allocation2 + $0xc7] sm:$0xff]
      %v1956 = vld [vmem:[#allocation2 + $0xcf] sm:$0xff]
      %v1957 = vld [vmem:[#allocation2 + $0xd7] sm:$0xff]
      %v1958 = vld [vmem:[#allocation2 + $0xdf] sm:$0xff]
      %v1959 = vld [vmem:[#allocation2 + $0xe7] sm:$0xff]
      %v1960 = vld [vmem:[#allocation2 + $0xef] sm:$0xff]
      %v1961 = vld [vmem:[#allocation2 + $0xf7] sm:$0xff]
      %v1962 = vld [vmem:[#allocation2 + $0xff] sm:$0xff]
      %v1963 = vld [vmem:[#allocation2 + $0x107] sm:$0xff]
      %v1964 = vld [vmem:[#allocation2 + $0x10f] sm:$0xff]
      %v1965 = vpack.c.bf16 %v1934, %v1933
      %v1966 = vpack.c.bf16 %v1936, %v1935
      %v1967 = vpack.c.bf16 %v1938, %v1937
      %v1968 = vpack.c.bf16 %v1940, %v1939
      %v1969 = vpack.c.bf16 %v1942, %v1941
      %v1970 = vpack.c.bf16 %v1944, %v1943
      %v1971 = vpack.c.bf16 %v1946, %v1945
      %v1972 = vpack.c.bf16 %v1948, %v1947
      %v1973 = vpack.c.bf16 %v1950, %v1949
      %v1974 = vpack.c.bf16 %v1952, %v1951
      %v1975 = vpack.c.bf16 %v1954, %v1953
      %v1976 = vpack.c.bf16 %v1956, %v1955
      %v1977 = vpack.c.bf16 %v1958, %v1957
      %v1978 = vpack.c.bf16 %v1960, %v1959
      %v1979 = vpack.c.bf16 %v1962, %v1961
      %v1980 = vpack.c.bf16 %v1964, %v1963
      %s1981 = scalar_lea.vmem %s4, 3
      %v1982 = vld [vmem:[%s1981] sm:$0x1]
      %v1984 = vsel %vm651, %v1965, 0
      %v1987 = vsel %vm651, %v1966, 0
      %v1990 = vsel %vm651, %v1967, 0
      %v1993 = vsel %vm651, %v1968, 0
      %v1996 = vsel %vm651, %v1969, 0
      %v1999 = vsel %vm651, %v1970, 0
      %v2002 = vsel %vm651, %v1971, 0
      %v2005 = vsel %vm651, %v1972, 0
      %v2008 = vsel %vm651, %v1973, 0
      %v2011 = vsel %vm651, %v1974, 0
      %v2014 = vsel %vm651, %v1975, 0
      %v2017 = vsel %vm651, %v1976, 0
      %v2020 = vsel %vm651, %v1977, 0
      %v2023 = vsel %vm651, %v1978, 0
      %v2026 = vsel %vm651, %v1979, 0
      %v2029 = vsel %vm651, %v1980, 0
      %v2032 = vsel %vm796, %v1982, 0
      %2034 = vmatprep.subr.bf16.mxu0 0
      %2035 = vmatpush1.bf16.msra.mxu0 %v2032
      %2036 = vmatprep.subr.bf16.mxu0 0
      %2037 = vmatpush1.bf16.msra.mxu0 0
      %2038 = vmatprep.subr.bf16.mxu0 0
      %2039 = vmatpush1.bf16.msra.mxu0 0
      %2040 = vmatprep.subr.bf16.mxu0 0
      %2041 = vmatpush1.bf16.msra.mxu0 0
      %2042 = vmatprep.subr.bf16.mxu0 0
      %2043 = vmatpush1.bf16.msra.mxu0 0
      %2044 = vmatprep.subr.bf16.mxu0 0
      %2045 = vmatpush1.bf16.msra.mxu0 0
      %2046 = vmatprep.subr.bf16.mxu0 0
      %2047 = vmatpush1.bf16.msra.mxu0 0
      %2048 = vmatprep.subr.bf16.mxu0 0
      %2049 = vmatpush1.bf16.msra.mxu0 0
      %2050 = vmatprep.subr.bf16.mxu0 0
      %2051 = vmatpush1.bf16.msra.mxu0 0
      %2052 = vmatprep.subr.bf16.mxu0 0
      %2053 = vmatpush1.bf16.msra.mxu0 0
      %2054 = vmatprep.subr.bf16.mxu0 0
      %2055 = vmatpush1.bf16.msra.mxu0 0
      %2056 = vmatprep.subr.bf16.mxu0 0
      %2057 = vmatpush1.bf16.msra.mxu0 0
      %2058 = vmatprep.subr.bf16.mxu0 0
      %2059 = vmatpush1.bf16.msra.mxu0 0
      %2060 = vmatprep.subr.bf16.mxu0 0
      %2061 = vmatpush1.bf16.msra.mxu0 0
      %2062 = vmatprep.subr.bf16.mxu0 0
      %2063 = vmatpush1.bf16.msra.mxu0 0
      %2064 = vmatprep.subr.bf16.mxu0 0
      %2065 = vmatpush1.bf16.msra.mxu0 0
      %2066 = vmatprep.mubr.bf16.mxu0 0
      %2067 = vmatmul.mubr.bf16.gmra.mrb[0].mxu0 %v1984
      %v2068 = vpop.f32.mrb[0].mxu0
      %v2069 = vadd.f32 0.0, %v2068
      %v2070 = vpop.f32.mrb[0].mxu0
      %v2071 = vpop.f32.mrb[0].mxu0
      %v2072 = vadd.f32 0.0, %v2071
      %v2073 = vpop.f32.mrb[0].mxu0
      %2074 = vmatprep.mubr.bf16.mxu0 0
      %2075 = vmatmul.mubr.bf16.gmra.mrb[0].mxu0 %v1987
      %v2076 = vpop.f32.mrb[0].mxu0
      %v2077 = vadd.f32 0.0, %v2076
      %v2078 = vpop.f32.mrb[0].mxu0
      %v2079 = vpop.f32.mrb[0].mxu0
      %v2080 = vadd.f32 0.0, %v2079
      %v2081 = vpop.f32.mrb[0].mxu0
      %2082 = vmatprep.mubr.bf16.mxu0 0
      %2083 = vmatmul.mubr.bf16.gmra.mrb[0].mxu0 %v1990
      %v2084 = vpop.f32.mrb[0].mxu0
      %v2085 = vadd.f32 0.0, %v2084
      %v2086 = vpop.f32.mrb[0].mxu0
      %v2087 = vpop.f32.mrb[0].mxu0
      %v2088 = vadd.f32 0.0, %v2087
      %v2089 = vpop.f32.mrb[0].mxu0
      %2090 = vmatprep.mubr.bf16.mxu0 0
      %2091 = vmatmul.mubr.bf16.gmra.mrb[0].mxu0 %v1993
      %v2092 = vpop.f32.mrb[0].mxu0
      %v2093 = vadd.f32 0.0, %v2092
      %v2094 = vpop.f32.mrb[0].mxu0
      %v2095 = vpop.f32.mrb[0].mxu0
      %v2096 = vadd.f32 0.0, %v2095
      %v2097 = vpop.f32.mrb[0].mxu0
      %2098 = vmatprep.mubr.bf16.mxu0 0
      %2099 = vmatmul.mubr.bf16.gmra.mrb[0].mxu0 %v1996
      %v2100 = vpop.f32.mrb[0].mxu0
      %v2101 = vadd.f32 0.0, %v2100
      %v2102 = vpop.f32.mrb[0].mxu0
      %v2103 = vpop.f32.mrb[0].mxu0
      %v2104 = vadd.f32 0.0, %v2103
      %v2105 = vpop.f32.mrb[0].mxu0
      %2106 = vmatprep.mubr.bf16.mxu0 0
      %2107 = vmatmul.mubr.bf16.gmra.mrb[0].mxu0 %v1999
      %v2108 = vpop.f32.mrb[0].mxu0
      %v2109 = vadd.f32 0.0, %v2108
      %v2110 = vpop.f32.mrb[0].mxu0
      %v2111 = vpop.f32.mrb[0].mxu0
      %v2112 = vadd.f32 0.0, %v2111
      %v2113 = vpop.f32.mrb[0].mxu0
      %2114 = vmatprep.mubr.bf16.mxu0 0
      %2115 = vmatmul.mubr.bf16.gmra.mrb[0].mxu0 %v2002
      %v2116 = vpop.f32.mrb[0].mxu0
      %v2117 = vadd.f32 0.0, %v2116
      %v2118 = vpop.f32.mrb[0].mxu0
      %v2119 = vpop.f32.mrb[0].mxu0
      %v2120 = vadd.f32 0.0, %v2119
      %v2121 = vpop.f32.mrb[0].mxu0
      %2122 = vmatprep.mubr.bf16.mxu0 0
      %2123 = vmatmul.mubr.bf16.gmra.mrb[0].mxu0 %v2005
      %v2124 = vpop.f32.mrb[0].mxu0
      %v2125 = vadd.f32 0.0, %v2124
      %v2126 = vpop.f32.mrb[0].mxu0
      %v2127 = vpop.f32.mrb[0].mxu0
      %v2128 = vadd.f32 0.0, %v2127
      %v2129 = vpop.f32.mrb[0].mxu0
      %2130 = vmatprep.mubr.bf16.mxu0 0
      %2131 = vmatmul.mubr.bf16.gmra.mrb[0].mxu0 %v2008
      %v2132 = vpop.f32.mrb[0].mxu0
      %v2133 = vadd.f32 0.0, %v2132
      %v2134 = vpop.f32.mrb[0].mxu0
      %v2135 = vpop.f32.mrb[0].mxu0
      %v2136 = vadd.f32 0.0, %v2135
      %v2137 = vpop.f32.mrb[0].mxu0
      %2138 = vmatprep.mubr.bf16.mxu0 0
      %2139 = vmatmul.mubr.bf16.gmra.mrb[0].mxu0 %v2011
      %v2140 = vpop.f32.mrb[0].mxu0
      %v2141 = vadd.f32 0.0, %v2140
      %v2142 = vpop.f32.mrb[0].mxu0
      %v2143 = vpop.f32.mrb[0].mxu0
      %v2144 = vadd.f32 0.0, %v2143
      %v2145 = vpop.f32.mrb[0].mxu0
      %2146 = vmatprep.mubr.bf16.mxu0 0
      %2147 = vmatmul.mubr.bf16.gmra.mrb[0].mxu0 %v2014
      %v2148 = vpop.f32.mrb[0].mxu0
      %v2149 = vadd.f32 0.0, %v2148
      %v2150 = vpop.f32.mrb[0].mxu0
      %v2151 = vpop.f32.mrb[0].mxu0
      %v2152 = vadd.f32 0.0, %v2151
      %v2153 = vpop.f32.mrb[0].mxu0
      %2154 = vmatprep.mubr.bf16.mxu0 0
      %2155 = vmatmul.mubr.bf16.gmra.mrb[0].mxu0 %v2017
      %v2156 = vpop.f32.mrb[0].mxu0
      %v2157 = vadd.f32 0.0, %v2156
      %v2158 = vpop.f32.mrb[0].mxu0
      %v2159 = vpop.f32.mrb[0].mxu0
      %v2160 = vadd.f32 0.0, %v2159
      %v2161 = vpop.f32.mrb[0].mxu0
      %2162 = vmatprep.mubr.bf16.mxu0 0
      %2163 = vmatmul.mubr.bf16.gmra.mrb[0].mxu0 %v2020
      %v2164 = vpop.f32.mrb[0].mxu0
      %v2165 = vadd.f32 0.0, %v2164
      %v2166 = vpop.f32.mrb[0].mxu0
      %v2167 = vpop.f32.mrb[0].mxu0
      %v2168 = vadd.f32 0.0, %v2167
      %v2169 = vpop.f32.mrb[0].mxu0
      %2170 = vmatprep.mubr.bf16.mxu0 0
      %2171 = vmatmul.mubr.bf16.gmra.mrb[0].mxu0 %v2023
      %v2172 = vpop.f32.mrb[0].mxu0
      %v2173 = vadd.f32 0.0, %v2172
      %v2174 = vpop.f32.mrb[0].mxu0
      %v2175 = vpop.f32.mrb[0].mxu0
      %v2176 = vadd.f32 0.0, %v2175
      %v2177 = vpop.f32.mrb[0].mxu0
      %2178 = vmatprep.mubr.bf16.mxu0 0
      %2179 = vmatmul.mubr.bf16.gmra.mrb[0].mxu0 %v2026
      %v2180 = vpop.f32.mrb[0].mxu0
      %v2181 = vadd.f32 0.0, %v2180
      %v2182 = vpop.f32.mrb[0].mxu0
      %v2183 = vpop.f32.mrb[0].mxu0
      %v2184 = vadd.f32 0.0, %v2183
      %v2185 = vpop.f32.mrb[0].mxu0
      %2186 = vmatprep.mubr.bf16.mxu0 0
      %2187 = vmatmul.mubr.bf16.gmra.mrb[0].mxu0 %v2029
      %v2188 = vpop.f32.mrb[0].mxu0
      %v2189 = vadd.f32 0.0, %v2188
      %v2190 = vpop.f32.mrb[0].mxu0
      %v2191 = vpop.f32.mrb[0].mxu0
      %v2192 = vadd.f32 0.0, %v2191
      %v2193 = vpop.f32.mrb[0].mxu0
      %2194 = vdwg.mxu0
      %v2195 = vmul.f32 %v2069, %v964
      %v2196 = vmul.f32 %v2072, %v969
      %v2197 = vmul.f32 %v2077, %v974
      %v2198 = vmul.f32 %v2080, %v979
      %v2199 = vmul.f32 %v2085, %v984
      %v2200 = vmul.f32 %v2088, %v989
      %v2201 = vmul.f32 %v2093, %v994
      %v2202 = vmul.f32 %v2096, %v999
      %v2203 = vmul.f32 %v2101, %v1004
      %v2204 = vmul.f32 %v2104, %v1009
      %v2205 = vmul.f32 %v2109, %v1014
      %v2206 = vmul.f32 %v2112, %v1019
      %v2207 = vmul.f32 %v2117, %v1024
      %v2208 = vmul.f32 %v2120, %v1029
      %v2209 = vmul.f32 %v2125, %v1034
      %v2210 = vmul.f32 %v2128, %v1039
      %v2211 = vmul.f32 %v2133, %v1044
      %v2212 = vmul.f32 %v2136, %v1049
      %v2213 = vmul.f32 %v2141, %v1054
      %v2214 = vmul.f32 %v2144, %v1059
      %v2215 = vmul.f32 %v2149, %v1064
      %v2216 = vmul.f32 %v2152, %v1069
      %v2217 = vmul.f32 %v2157, %v1074
      %v2218 = vmul.f32 %v2160, %v1079
      %v2219 = vmul.f32 %v2165, %v1084
      %v2220 = vmul.f32 %v2168, %v1089
      %v2221 = vmul.f32 %v2173, %v1094
      %v2222 = vmul.f32 %v2176, %v1099
      %v2223 = vmul.f32 %v2181, %v1104
      %v2224 = vmul.f32 %v2184, %v1109
      %v2225 = vmul.f32 %v2189, %v1114
      %v2226 = vmul.f32 %v2192, %v1119
      %v2227 = vadd.f32 %v1901, %v2195
      %v2228 = vadd.f32 %v1902, %v2196
      %v2229 = vadd.f32 %v1903, %v2197
      %v2230 = vadd.f32 %v1904, %v2198
      %v2231 = vadd.f32 %v1905, %v2199
      %v2232 = vadd.f32 %v1906, %v2200
      %v2233 = vadd.f32 %v1907, %v2201
      %v2234 = vadd.f32 %v1908, %v2202
      %v2235 = vadd.f32 %v1909, %v2203
      %v2236 = vadd.f32 %v1910, %v2204
      %v2237 = vadd.f32 %v1911, %v2205
      %v2238 = vadd.f32 %v1912, %v2206
      %v2239 = vadd.f32 %v1913, %v2207
      %v2240 = vadd.f32 %v1914, %v2208
      %v2241 = vadd.f32 %v1915, %v2209
      %v2242 = vadd.f32 %v1916, %v2210
      %v2243 = vadd.f32 %v1917, %v2211
      %v2244 = vadd.f32 %v1918, %v2212
      %v2245 = vadd.f32 %v1919, %v2213
      %v2246 = vadd.f32 %v1920, %v2214
      %v2247 = vadd.f32 %v1921, %v2215
      %v2248 = vadd.f32 %v1922, %v2216
      %v2249 = vadd.f32 %v1923, %v2217
      %v2250 = vadd.f32 %v1924, %v2218
      %v2251 = vadd.f32 %v1925, %v2219
      %v2252 = vadd.f32 %v1926, %v2220
      %v2253 = vadd.f32 %v1927, %v2221
      %v2254 = vadd.f32 %v1928, %v2222
      %v2255 = vadd.f32 %v1929, %v2223
      %v2256 = vadd.f32 %v1930, %v2224
      %v2257 = vadd.f32 %v1931, %v2225
      %v2258 = vadd.f32 %v1932, %v2226
      %v2259 = vld [vmem:[#allocation2 + $0x18] sm:$0xff]
      %v2260 = vld [vmem:[#allocation2 + $0x20] sm:$0xff]
      %v2261 = vld [vmem:[#allocation2 + $0x28] sm:$0xff]
      %v2262 = vld [vmem:[#allocation2 + $0x30] sm:$0xff]
      %v2263 = vld [vmem:[#allocation2 + $0x38] sm:$0xff]
      %v2264 = vld [vmem:[#allocation2 + $0x40] sm:$0xff]
      %v2265 = vld [vmem:[#allocation2 + $0x48] sm:$0xff]
      %v2266 = vld [vmem:[#allocation2 + $0x50] sm:$0xff]
      %v2267 = vld [vmem:[#allocation2 + $0x58] sm:$0xff]
      %v2268 = vld [vmem:[#allocation2 + $0x60] sm:$0xff]
      %v2269 = vld [vmem:[#allocation2 + $0x68] sm:$0xff]
      %v2270 = vld [vmem:[#allocation2 + $0x70] sm:$0xff]
      %v2271 = vld [vmem:[#allocation2 + $0x78] sm:$0xff]
      %v2272 = vld [vmem:[#allocation2 + $0x80] sm:$0xff]
      %v2273 = vld [vmem:[#allocation2 + $0x88] sm:$0xff]
      %v2274 = vld [vmem:[#allocation2 + $0x90] sm:$0xff]
      %v2275 = vld [vmem:[#allocation2 + $0x98] sm:$0xff]
      %v2276 = vld [vmem:[#allocation2 + $0xa0] sm:$0xff]
      %v2277 = vld [vmem:[#allocation2 + $0xa8] sm:$0xff]
      %v2278 = vld [vmem:[#allocation2 + $0xb0] sm:$0xff]
      %v2279 = vld [vmem:[#allocation2 + $0xb8] sm:$0xff]
      %v2280 = vld [vmem:[#allocation2 + $0xc0] sm:$0xff]
      %v2281 = vld [vmem:[#allocation2 + $0xc8] sm:$0xff]
      %v2282 = vld [vmem:[#allocation2 + $0xd0] sm:$0xff]
      %v2283 = vld [vmem:[#allocation2 + $0xd8] sm:$0xff]
      %v2284 = vld [vmem:[#allocation2 + $0xe0] sm:$0xff]
      %v2285 = vld [vmem:[#allocation2 + $0xe8] sm:$0xff]
      %v2286 = vld [vmem:[#allocation2 + $0xf0] sm:$0xff]
      %v2287 = vld [vmem:[#allocation2 + $0xf8] sm:$0xff]
      %v2288 = vld [vmem:[#allocation2 + $0x100] sm:$0xff]
      %v2289 = vld [vmem:[#allocation2 + $0x108] sm:$0xff]
      %v2290 = vld [vmem:[#allocation2 + $0x110] sm:$0xff]
      %v2291 = vpack.c.bf16 %v2260, %v2259
      %v2292 = vpack.c.bf16 %v2262, %v2261
      %v2293 = vpack.c.bf16 %v2264, %v2263
      %v2294 = vpack.c.bf16 %v2266, %v2265
      %v2295 = vpack.c.bf16 %v2268, %v2267
      %v2296 = vpack.c.bf16 %v2270, %v2269
      %v2297 = vpack.c.bf16 %v2272, %v2271
      %v2298 = vpack.c.bf16 %v2274, %v2273
      %v2299 = vpack.c.bf16 %v2276, %v2275
      %v2300 = vpack.c.bf16 %v2278, %v2277
      %v2301 = vpack.c.bf16 %v2280, %v2279
      %v2302 = vpack.c.bf16 %v2282, %v2281
      %v2303 = vpack.c.bf16 %v2284, %v2283
      %v2304 = vpack.c.bf16 %v2286, %v2285
      %v2305 = vpack.c.bf16 %v2288, %v2287
      %v2306 = vpack.c.bf16 %v2290, %v2289
      %s2307 = scalar_lea.vmem %s4, 4
      %v2308 = vld [vmem:[%s2307] sm:$0x1]
      %v2310 = vsel %vm651, %v2291, 0
      %v2313 = vsel %vm651, %v2292, 0
      %v2316 = vsel %vm651, %v2293, 0
      %v2319 = vsel %vm651, %v2294, 0
      %v2322 = vsel %vm651, %v2295, 0
      %v2325 = vsel %vm651, %v2296, 0
      %v2328 = vsel %vm651, %v2297, 0
      %v2331 = vsel %vm651, %v2298, 0
      %v2334 = vsel %vm651, %v2299, 0
      %v2337 = vsel %vm651, %v2300, 0
      %v2340 = vsel %vm651, %v2301, 0
      %v2343 = vsel %vm651, %v2302, 0
      %v2346 = vsel %vm651, %v2303, 0
      %v2349 = vsel %vm651, %v2304, 0
      %v2352 = vsel %vm651, %v2305, 0
      %v2355 = vsel %vm651, %v2306, 0
      %v2358 = vsel %vm796, %v2308, 0
      %2360 = vmatprep.subr.bf16.mxu0 0
      %2361 = vmatpush1.bf16.msra.mxu0 %v2358
      %2362 = vmatprep.subr.bf16.mxu0 0
      %2363 = vmatpush1.bf16.msra.mxu0 0
      %2364 = vmatprep.subr.bf16.mxu0 0
      %2365 = vmatpush1.bf16.msra.mxu0 0
      %2366 = vmatprep.subr.bf16.mxu0 0
      %2367 = vmatpush1.bf16.msra.mxu0 0
      %2368 = vmatprep.subr.bf16.mxu0 0
      %2369 = vmatpush1.bf16.msra.mxu0 0
      %2370 = vmatprep.subr.bf16.mxu0 0
      %2371 = vmatpush1.bf16.msra.mxu0 0
      %2372 = vmatprep.subr.bf16.mxu0 0
      %2373 = vmatpush1.bf16.msra.mxu0 0
      %2374 = vmatprep.subr.bf16.mxu0 0
      %2375 = vmatpush1.bf16.msra.mxu0 0
      %2376 = vmatprep.subr.bf16.mxu0 0
      %2377 = vmatpush1.bf16.msra.mxu0 0
      %2378 = vmatprep.subr.bf16.mxu0 0
      %2379 = vmatpush1.bf16.msra.mxu0 0
      %2380 = vmatprep.subr.bf16.mxu0 0
      %2381 = vmatpush1.bf16.msra.mxu0 0
      %2382 = vmatprep.subr.bf16.mxu0 0
      %2383 = vmatpush1.bf16.msra.mxu0 0
      %2384 = vmatprep.subr.bf16.mxu0 0
      %2385 = vmatpush1.bf16.msra.mxu0 0
      %2386 = vmatprep.subr.bf16.mxu0 0
      %2387 = vmatpush1.bf16.msra.mxu0 0
      %2388 = vmatprep.subr.bf16.mxu0 0
      %2389 = vmatpush1.bf16.msra.mxu0 0
      %2390 = vmatprep.subr.bf16.mxu0 0
      %2391 = vmatpush1.bf16.msra.mxu0 0
      %2392 = vmatprep.mubr.bf16.mxu0 0
      %2393 = vmatmul.mubr.bf16.gmra.mrb[0].mxu0 %v2310
      %v2394 = vpop.f32.mrb[0].mxu0
      %v2395 = vadd.f32 0.0, %v2394
      %v2396 = vpop.f32.mrb[0].mxu0
      %v2397 = vpop.f32.mrb[0].mxu0
      %v2398 = vadd.f32 0.0, %v2397
      %v2399 = vpop.f32.mrb[0].mxu0
      %2400 = vmatprep.mubr.bf16.mxu0 0
      %2401 = vmatmul.mubr.bf16.gmra.mrb[0].mxu0 %v2313
      %v2402 = vpop.f32.mrb[0].mxu0
      %v2403 = vadd.f32 0.0, %v2402
      %v2404 = vpop.f32.mrb[0].mxu0
      %v2405 = vpop.f32.mrb[0].mxu0
      %v2406 = vadd.f32 0.0, %v2405
      %v2407 = vpop.f32.mrb[0].mxu0
      %2408 = vmatprep.mubr.bf16.mxu0 0
      %2409 = vmatmul.mubr.bf16.gmra.mrb[0].mxu0 %v2316
      %v2410 = vpop.f32.mrb[0].mxu0
      %v2411 = vadd.f32 0.0, %v2410
      %v2412 = vpop.f32.mrb[0].mxu0
      %v2413 = vpop.f32.mrb[0].mxu0
      %v2414 = vadd.f32 0.0, %v2413
      %v2415 = vpop.f32.mrb[0].mxu0
      %2416 = vmatprep.mubr.bf16.mxu0 0
      %2417 = vmatmul.mubr.bf16.gmra.mrb[0].mxu0 %v2319
      %v2418 = vpop.f32.mrb[0].mxu0
      %v2419 = vadd.f32 0.0, %v2418
      %v2420 = vpop.f32.mrb[0].mxu0
      %v2421 = vpop.f32.mrb[0].mxu0
      %v2422 = vadd.f32 0.0, %v2421
      %v2423 = vpop.f32.mrb[0].mxu0
      %2424 = vmatprep.mubr.bf16.mxu0 0
      %2425 = vmatmul.mubr.bf16.gmra.mrb[0].mxu0 %v2322
      %v2426 = vpop.f32.mrb[0].mxu0
      %v2427 = vadd.f32 0.0, %v2426
      %v2428 = vpop.f32.mrb[0].mxu0
      %v2429 = vpop.f32.mrb[0].mxu0
      %v2430 = vadd.f32 0.0, %v2429
      %v2431 = vpop.f32.mrb[0].mxu0
      %2432 = vmatprep.mubr.bf16.mxu0 0
      %2433 = vmatmul.mubr.bf16.gmra.mrb[0].mxu0 %v2325
      %v2434 = vpop.f32.mrb[0].mxu0
      %v2435 = vadd.f32 0.0, %v2434
      %v2436 = vpop.f32.mrb[0].mxu0
      %v2437 = vpop.f32.mrb[0].mxu0
      %v2438 = vadd.f32 0.0, %v2437
      %v2439 = vpop.f32.mrb[0].mxu0
      %2440 = vmatprep.mubr.bf16.mxu0 0
      %2441 = vmatmul.mubr.bf16.gmra.mrb[0].mxu0 %v2328
      %v2442 = vpop.f32.mrb[0].mxu0
      %v2443 = vadd.f32 0.0, %v2442
      %v2444 = vpop.f32.mrb[0].mxu0
      %v2445 = vpop.f32.mrb[0].mxu0
      %v2446 = vadd.f32 0.0, %v2445
      %v2447 = vpop.f32.mrb[0].mxu0
      %2448 = vmatprep.mubr.bf16.mxu0 0
      %2449 = vmatmul.mubr.bf16.gmra.mrb[0].mxu0 %v2331
      %v2450 = vpop.f32.mrb[0].mxu0
      %v2451 = vadd.f32 0.0, %v2450
      %v2452 = vpop.f32.mrb[0].mxu0
      %v2453 = vpop.f32.mrb[0].mxu0
      %v2454 = vadd.f32 0.0, %v2453
      %v2455 = vpop.f32.mrb[0].mxu0
      %2456 = vmatprep.mubr.bf16.mxu0 0
      %2457 = vmatmul.mubr.bf16.gmra.mrb[0].mxu0 %v2334
      %v2458 = vpop.f32.mrb[0].mxu0
      %v2459 = vadd.f32 0.0, %v2458
      %v2460 = vpop.f32.mrb[0].mxu0
      %v2461 = vpop.f32.mrb[0].mxu0
      %v2462 = vadd.f32 0.0, %v2461
      %v2463 = vpop.f32.mrb[0].mxu0
      %2464 = vmatprep.mubr.bf16.mxu0 0
      %2465 = vmatmul.mubr.bf16.gmra.mrb[0].mxu0 %v2337
      %v2466 = vpop.f32.mrb[0].mxu0
      %v2467 = vadd.f32 0.0, %v2466
      %v2468 = vpop.f32.mrb[0].mxu0
      %v2469 = vpop.f32.mrb[0].mxu0
      %v2470 = vadd.f32 0.0, %v2469
      %v2471 = vpop.f32.mrb[0].mxu0
      %2472 = vmatprep.mubr.bf16.mxu0 0
      %2473 = vmatmul.mubr.bf16.gmra.mrb[0].mxu0 %v2340
      %v2474 = vpop.f32.mrb[0].mxu0
      %v2475 = vadd.f32 0.0, %v2474
      %v2476 = vpop.f32.mrb[0].mxu0
      %v2477 = vpop.f32.mrb[0].mxu0
      %v2478 = vadd.f32 0.0, %v2477
      %v2479 = vpop.f32.mrb[0].mxu0
      %2480 = vmatprep.mubr.bf16.mxu0 0
      %2481 = vmatmul.mubr.bf16.gmra.mrb[0].mxu0 %v2343
      %v2482 = vpop.f32.mrb[0].mxu0
      %v2483 = vadd.f32 0.0, %v2482
      %v2484 = vpop.f32.mrb[0].mxu0
      %v2485 = vpop.f32.mrb[0].mxu0
      %v2486 = vadd.f32 0.0, %v2485
      %v2487 = vpop.f32.mrb[0].mxu0
      %2488 = vmatprep.mubr.bf16.mxu0 0
      %2489 = vmatmul.mubr.bf16.gmra.mrb[0].mxu0 %v2346
      %v2490 = vpop.f32.mrb[0].mxu0
      %v2491 = vadd.f32 0.0, %v2490
      %v2492 = vpop.f32.mrb[0].mxu0
      %v2493 = vpop.f32.mrb[0].mxu0
      %v2494 = vadd.f32 0.0, %v2493
      %v2495 = vpop.f32.mrb[0].mxu0
      %2496 = vmatprep.mubr.bf16.mxu0 0
      %2497 = vmatmul.mubr.bf16.gmra.mrb[0].mxu0 %v2349
      %v2498 = vpop.f32.mrb[0].mxu0
      %v2499 = vadd.f32 0.0, %v2498
      %v2500 = vpop.f32.mrb[0].mxu0
      %v2501 = vpop.f32.mrb[0].mxu0
      %v2502 = vadd.f32 0.0, %v2501
      %v2503 = vpop.f32.mrb[0].mxu0
      %2504 = vmatprep.mubr.bf16.mxu0 0
      %2505 = vmatmul.mubr.bf16.gmra.mrb[0].mxu0 %v2352
      %v2506 = vpop.f32.mrb[0].mxu0
      %v2507 = vadd.f32 0.0, %v2506
      %v2508 = vpop.f32.mrb[0].mxu0
      %v2509 = vpop.f32.mrb[0].mxu0
      %v2510 = vadd.f32 0.0, %v2509
      %v2511 = vpop.f32.mrb[0].mxu0
      %2512 = vmatprep.mubr.bf16.mxu0 0
      %2513 = vmatmul.mubr.bf16.gmra.mrb[0].mxu0 %v2355
      %v2514 = vpop.f32.mrb[0].mxu0
      %v2515 = vadd.f32 0.0, %v2514
      %v2516 = vpop.f32.mrb[0].mxu0
      %v2517 = vpop.f32.mrb[0].mxu0
      %v2518 = vadd.f32 0.0, %v2517
      %v2519 = vpop.f32.mrb[0].mxu0
      %2520 = vdwg.mxu0
      %v2521 = vadd.f32 %v2227, %v2395
      %v2522 = vadd.f32 %v2228, %v2398
      %v2523 = vadd.f32 %v2229, %v2403
      %v2524 = vadd.f32 %v2230, %v2406
      %v2525 = vadd.f32 %v2231, %v2411
      %v2526 = vadd.f32 %v2232, %v2414
      %v2527 = vadd.f32 %v2233, %v2419
      %v2528 = vadd.f32 %v2234, %v2422
      %v2529 = vadd.f32 %v2235, %v2427
      %v2530 = vadd.f32 %v2236, %v2430
      %v2531 = vadd.f32 %v2237, %v2435
      %v2532 = vadd.f32 %v2238, %v2438
      %v2533 = vadd.f32 %v2239, %v2443
      %v2534 = vadd.f32 %v2240, %v2446
      %v2535 = vadd.f32 %v2241, %v2451
      %v2536 = vadd.f32 %v2242, %v2454
      %v2537 = vadd.f32 %v2243, %v2459
      %v2538 = vadd.f32 %v2244, %v2462
      %v2539 = vadd.f32 %v2245, %v2467
      %v2540 = vadd.f32 %v2246, %v2470
      %v2541 = vadd.f32 %v2247, %v2475
      %v2542 = vadd.f32 %v2248, %v2478
      %v2543 = vadd.f32 %v2249, %v2483
      %v2544 = vadd.f32 %v2250, %v2486
      %v2545 = vadd.f32 %v2251, %v2491
      %v2546 = vadd.f32 %v2252, %v2494
      %v2547 = vadd.f32 %v2253, %v2499
      %v2548 = vadd.f32 %v2254, %v2502
      %v2549 = vadd.f32 %v2255, %v2507
      %v2550 = vadd.f32 %v2256, %v2510
      %v2551 = vadd.f32 %v2257, %v2515
      %v2552 = vadd.f32 %v2258, %v2518
      %v2553 = vld [vmem:[#allocation2 + $0x19] sm:$0xff]
      %v2554 = vld [vmem:[#allocation2 + $0x21] sm:$0xff]
      %v2555 = vld [vmem:[#allocation2 + $0x29] sm:$0xff]
      %v2556 = vld [vmem:[#allocation2 + $0x31] sm:$0xff]
      %v2557 = vld [vmem:[#allocation2 + $0x39] sm:$0xff]
      %v2558 = vld [vmem:[#allocation2 + $0x41] sm:$0xff]
      %v2559 = vld [vmem:[#allocation2 + $0x49] sm:$0xff]
      %v2560 = vld [vmem:[#allocation2 + $0x51] sm:$0xff]
      %v2561 = vld [vmem:[#allocation2 + $0x59] sm:$0xff]
      %v2562 = vld [vmem:[#allocation2 + $0x61] sm:$0xff]
      %v2563 = vld [vmem:[#allocation2 + $0x69] sm:$0xff]
      %v2564 = vld [vmem:[#allocation2 + $0x71] sm:$0xff]
      %v2565 = vld [vmem:[#allocation2 + $0x79] sm:$0xff]
      %v2566 = vld [vmem:[#allocation2 + $0x81] sm:$0xff]
      %v2567 = vld [vmem:[#allocation2 + $0x89] sm:$0xff]
      %v2568 = vld [vmem:[#allocation2 + $0x91] sm:$0xff]
      %v2569 = vld [vmem:[#allocation2 + $0x99] sm:$0xff]
      %v2570 = vld [vmem:[#allocation2 + $0xa1] sm:$0xff]
      %v2571 = vld [vmem:[#allocation2 + $0xa9] sm:$0xff]
      %v2572 = vld [vmem:[#allocation2 + $0xb1] sm:$0xff]
      %v2573 = vld [vmem:[#allocation2 + $0xb9] sm:$0xff]
      %v2574 = vld [vmem:[#allocation2 + $0xc1] sm:$0xff]
      %v2575 = vld [vmem:[#allocation2 + $0xc9] sm:$0xff]
      %v2576 = vld [vmem:[#allocation2 + $0xd1] sm:$0xff]
      %v2577 = vld [vmem:[#allocation2 + $0xd9] sm:$0xff]
      %v2578 = vld [vmem:[#allocation2 + $0xe1] sm:$0xff]
      %v2579 = vld [vmem:[#allocation2 + $0xe9] sm:$0xff]
      %v2580 = vld [vmem:[#allocation2 + $0xf1] sm:$0xff]
      %v2581 = vld [vmem:[#allocation2 + $0xf9] sm:$0xff]
      %v2582 = vld [vmem:[#allocation2 + $0x101] sm:$0xff]
      %v2583 = vld [vmem:[#allocation2 + $0x109] sm:$0xff]
      %v2584 = vld [vmem:[#allocation2 + $0x111] sm:$0xff]
      %v2585 = vpack.c.bf16 %v2554, %v2553
      %v2586 = vpack.c.bf16 %v2556, %v2555
      %v2587 = vpack.c.bf16 %v2558, %v2557
      %v2588 = vpack.c.bf16 %v2560, %v2559
      %v2589 = vpack.c.bf16 %v2562, %v2561
      %v2590 = vpack.c.bf16 %v2564, %v2563
      %v2591 = vpack.c.bf16 %v2566, %v2565
      %v2592 = vpack.c.bf16 %v2568, %v2567
      %v2593 = vpack.c.bf16 %v2570, %v2569
      %v2594 = vpack.c.bf16 %v2572, %v2571
      %v2595 = vpack.c.bf16 %v2574, %v2573
      %v2596 = vpack.c.bf16 %v2576, %v2575
      %v2597 = vpack.c.bf16 %v2578, %v2577
      %v2598 = vpack.c.bf16 %v2580, %v2579
      %v2599 = vpack.c.bf16 %v2582, %v2581
      %v2600 = vpack.c.bf16 %v2584, %v2583
      %s2601 = scalar_lea.vmem %s4, 5
      %v2602 = vld [vmem:[%s2601] sm:$0x1]
      %v2604 = vsel %vm651, %v2585, 0
      %v2607 = vsel %vm651, %v2586, 0
      %v2610 = vsel %vm651, %v2587, 0
      %v2613 = vsel %vm651, %v2588, 0
      %v2616 = vsel %vm651, %v2589, 0
      %v2619 = vsel %vm651, %v2590, 0
      %v2622 = vsel %vm651, %v2591, 0
      %v2625 = vsel %vm651, %v2592, 0
      %v2628 = vsel %vm651, %v2593, 0
      %v2631 = vsel %vm651, %v2594, 0
      %v2634 = vsel %vm651, %v2595, 0
      %v2637 = vsel %vm651, %v2596, 0
      %v2640 = vsel %vm651, %v2597, 0
      %v2643 = vsel %vm651, %v2598, 0
      %v2646 = vsel %vm651, %v2599, 0
      %v2649 = vsel %vm651, %v2600, 0
      %v2652 = vsel %vm796, %v2602, 0
      %2654 = vmatprep.subr.bf16.mxu0 0
      %2655 = vmatpush1.bf16.msra.mxu0 %v2652
      %2656 = vmatprep.subr.bf16.mxu0 0
      %2657 = vmatpush1.bf16.msra.mxu0 0
      %2658 = vmatprep.subr.bf16.mxu0 0
      %2659 = vmatpush1.bf16.msra.mxu0 0
      %2660 = vmatprep.subr.bf16.mxu0 0
      %2661 = vmatpush1.bf16.msra.mxu0 0
      %2662 = vmatprep.subr.bf16.mxu0 0
      %2663 = vmatpush1.bf16.msra.mxu0 0
      %2664 = vmatprep.subr.bf16.mxu0 0
      %2665 = vmatpush1.bf16.msra.mxu0 0
      %2666 = vmatprep.subr.bf16.mxu0 0
      %2667 = vmatpush1.bf16.msra.mxu0 0
      %2668 = vmatprep.subr.bf16.mxu0 0
      %2669 = vmatpush1.bf16.msra.mxu0 0
      %2670 = vmatprep.subr.bf16.mxu0 0
      %2671 = vmatpush1.bf16.msra.mxu0 0
      %2672 = vmatprep.subr.bf16.mxu0 0
      %2673 = vmatpush1.bf16.msra.mxu0 0
      %2674 = vmatprep.subr.bf16.mxu0 0
      %2675 = vmatpush1.bf16.msra.mxu0 0
      %2676 = vmatprep.subr.bf16.mxu0 0
      %2677 = vmatpush1.bf16.msra.mxu0 0
      %2678 = vmatprep.subr.bf16.mxu0 0
      %2679 = vmatpush1.bf16.msra.mxu0 0
      %2680 = vmatprep.subr.bf16.mxu0 0
      %2681 = vmatpush1.bf16.msra.mxu0 0
      %2682 = vmatprep.subr.bf16.mxu0 0
      %2683 = vmatpush1.bf16.msra.mxu0 0
      %2684 = vmatprep.subr.bf16.mxu0 0
      %2685 = vmatpush1.bf16.msra.mxu0 0
      %2686 = vmatprep.mubr.bf16.mxu0 0
      %2687 = vmatmul.mubr.bf16.gmra.mrb[0].mxu0 %v2604
      %v2688 = vpop.f32.mrb[0].mxu0
      %v2689 = vadd.f32 0.0, %v2688
      %v2690 = vpop.f32.mrb[0].mxu0
      %v2691 = vpop.f32.mrb[0].mxu0
      %v2692 = vadd.f32 0.0, %v2691
      %v2693 = vpop.f32.mrb[0].mxu0
      %2694 = vmatprep.mubr.bf16.mxu0 0
      %2695 = vmatmul.mubr.bf16.gmra.mrb[0].mxu0 %v2607
      %v2696 = vpop.f32.mrb[0].mxu0
      %v2697 = vadd.f32 0.0, %v2696
      %v2698 = vpop.f32.mrb[0].mxu0
      %v2699 = vpop.f32.mrb[0].mxu0
      %v2700 = vadd.f32 0.0, %v2699
      %v2701 = vpop.f32.mrb[0].mxu0
      %2702 = vmatprep.mubr.bf16.mxu0 0
      %2703 = vmatmul.mubr.bf16.gmra.mrb[0].mxu0 %v2610
      %v2704 = vpop.f32.mrb[0].mxu0
      %v2705 = vadd.f32 0.0, %v2704
      %v2706 = vpop.f32.mrb[0].mxu0
      %v2707 = vpop.f32.mrb[0].mxu0
      %v2708 = vadd.f32 0.0, %v2707
      %v2709 = vpop.f32.mrb[0].mxu0
      %2710 = vmatprep.mubr.bf16.mxu0 0
      %2711 = vmatmul.mubr.bf16.gmra.mrb[0].mxu0 %v2613
      %v2712 = vpop.f32.mrb[0].mxu0
      %v2713 = vadd.f32 0.0, %v2712
      %v2714 = vpop.f32.mrb[0].mxu0
      %v2715 = vpop.f32.mrb[0].mxu0
      %v2716 = vadd.f32 0.0, %v2715
      %v2717 = vpop.f32.mrb[0].mxu0
      %2718 = vmatprep.mubr.bf16.mxu0 0
      %2719 = vmatmul.mubr.bf16.gmra.mrb[0].mxu0 %v2616
      %v2720 = vpop.f32.mrb[0].mxu0
      %v2721 = vadd.f32 0.0, %v2720
      %v2722 = vpop.f32.mrb[0].mxu0
      %v2723 = vpop.f32.mrb[0].mxu0
      %v2724 = vadd.f32 0.0, %v2723
      %v2725 = vpop.f32.mrb[0].mxu0
      %2726 = vmatprep.mubr.bf16.mxu0 0
      %2727 = vmatmul.mubr.bf16.gmra.mrb[0].mxu0 %v2619
      %v2728 = vpop.f32.mrb[0].mxu0
      %v2729 = vadd.f32 0.0, %v2728
      %v2730 = vpop.f32.mrb[0].mxu0
      %v2731 = vpop.f32.mrb[0].mxu0
      %v2732 = vadd.f32 0.0, %v2731
      %v2733 = vpop.f32.mrb[0].mxu0
      %2734 = vmatprep.mubr.bf16.mxu0 0
      %2735 = vmatmul.mubr.bf16.gmra.mrb[0].mxu0 %v2622
      %v2736 = vpop.f32.mrb[0].mxu0
      %v2737 = vadd.f32 0.0, %v2736
      %v2738 = vpop.f32.mrb[0].mxu0
      %v2739 = vpop.f32.mrb[0].mxu0
      %v2740 = vadd.f32 0.0, %v2739
      %v2741 = vpop.f32.mrb[0].mxu0
      %2742 = vmatprep.mubr.bf16.mxu0 0
      %2743 = vmatmul.mubr.bf16.gmra.mrb[0].mxu0 %v2625
      %v2744 = vpop.f32.mrb[0].mxu0
      %v2745 = vadd.f32 0.0, %v2744
      %v2746 = vpop.f32.mrb[0].mxu0
      %v2747 = vpop.f32.mrb[0].mxu0
      %v2748 = vadd.f32 0.0, %v2747
      %v2749 = vpop.f32.mrb[0].mxu0
      %2750 = vmatprep.mubr.bf16.mxu0 0
      %2751 = vmatmul.mubr.bf16.gmra.mrb[0].mxu0 %v2628
      %v2752 = vpop.f32.mrb[0].mxu0
      %v2753 = vadd.f32 0.0, %v2752
      %v2754 = vpop.f32.mrb[0].mxu0
      %v2755 = vpop.f32.mrb[0].mxu0
      %v2756 = vadd.f32 0.0, %v2755
      %v2757 = vpop.f32.mrb[0].mxu0
      %2758 = vmatprep.mubr.bf16.mxu0 0
      %2759 = vmatmul.mubr.bf16.gmra.mrb[0].mxu0 %v2631
      %v2760 = vpop.f32.mrb[0].mxu0
      %v2761 = vadd.f32 0.0, %v2760
      %v2762 = vpop.f32.mrb[0].mxu0
      %v2763 = vpop.f32.mrb[0].mxu0
      %v2764 = vadd.f32 0.0, %v2763
      %v2765 = vpop.f32.mrb[0].mxu0
      %2766 = vmatprep.mubr.bf16.mxu0 0
      %2767 = vmatmul.mubr.bf16.gmra.mrb[0].mxu0 %v2634
      %v2768 = vpop.f32.mrb[0].mxu0
      %v2769 = vadd.f32 0.0, %v2768
      %v2770 = vpop.f32.mrb[0].mxu0
      %v2771 = vpop.f32.mrb[0].mxu0
      %v2772 = vadd.f32 0.0, %v2771
      %v2773 = vpop.f32.mrb[0].mxu0
      %2774 = vmatprep.mubr.bf16.mxu0 0
      %2775 = vmatmul.mubr.bf16.gmra.mrb[0].mxu0 %v2637
      %v2776 = vpop.f32.mrb[0].mxu0
      %v2777 = vadd.f32 0.0, %v2776
      %v2778 = vpop.f32.mrb[0].mxu0
      %v2779 = vpop.f32.mrb[0].mxu0
      %v2780 = vadd.f32 0.0, %v2779
      %v2781 = vpop.f32.mrb[0].mxu0
      %2782 = vmatprep.mubr.bf16.mxu0 0
      %2783 = vmatmul.mubr.bf16.gmra.mrb[0].mxu0 %v2640
      %v2784 = vpop.f32.mrb[0].mxu0
      %v2785 = vadd.f32 0.0, %v2784
      %v2786 = vpop.f32.mrb[0].mxu0
      %v2787 = vpop.f32.mrb[0].mxu0
      %v2788 = vadd.f32 0.0, %v2787
      %v2789 = vpop.f32.mrb[0].mxu0
      %2790 = vmatprep.mubr.bf16.mxu0 0
      %2791 = vmatmul.mubr.bf16.gmra.mrb[0].mxu0 %v2643
      %v2792 = vpop.f32.mrb[0].mxu0
      %v2793 = vadd.f32 0.0, %v2792
      %v2794 = vpop.f32.mrb[0].mxu0
      %v2795 = vpop.f32.mrb[0].mxu0
      %v2796 = vadd.f32 0.0, %v2795
      %v2797 = vpop.f32.mrb[0].mxu0
      %2798 = vmatprep.mubr.bf16.mxu0 0
      %2799 = vmatmul.mubr.bf16.gmra.mrb[0].mxu0 %v2646
      %v2800 = vpop.f32.mrb[0].mxu0
      %v2801 = vadd.f32 0.0, %v2800
      %v2802 = vpop.f32.mrb[0].mxu0
      %v2803 = vpop.f32.mrb[0].mxu0
      %v2804 = vadd.f32 0.0, %v2803
      %v2805 = vpop.f32.mrb[0].mxu0
      %2806 = vmatprep.mubr.bf16.mxu0 0
      %2807 = vmatmul.mubr.bf16.gmra.mrb[0].mxu0 %v2649
      %v2808 = vpop.f32.mrb[0].mxu0
      %v2809 = vadd.f32 0.0, %v2808
      %v2810 = vpop.f32.mrb[0].mxu0
      %v2811 = vpop.f32.mrb[0].mxu0
      %v2812 = vadd.f32 0.0, %v2811
      %v2813 = vpop.f32.mrb[0].mxu0
      %2814 = vdwg.mxu0
      %v2815 = vmul.f32 %v2689, %v1743
      %v2816 = vmul.f32 %v2692, %v1747
      %v2817 = vmul.f32 %v2697, %v1751
      %v2818 = vmul.f32 %v2700, %v1755
      %v2819 = vmul.f32 %v2705, %v1759
      %v2820 = vmul.f32 %v2708, %v1763
      %v2821 = vmul.f32 %v2713, %v1767
      %v2822 = vmul.f32 %v2716, %v1771
      %v2823 = vmul.f32 %v2721, %v1775
      %v2824 = vmul.f32 %v2724, %v1779
      %v2825 = vmul.f32 %v2729, %v1783
      %v2826 = vmul.f32 %v2732, %v1787
      %v2827 = vmul.f32 %v2737, %v1791
      %v2828 = vmul.f32 %v2740, %v1795
      %v2829 = vmul.f32 %v2745, %v1799
      %v2830 = vmul.f32 %v2748, %v1803
      %v2831 = vmul.f32 %v2753, %v1807
      %v2832 = vmul.f32 %v2756, %v1811
      %v2833 = vmul.f32 %v2761, %v1815
      %v2834 = vmul.f32 %v2764, %v1819
      %v2835 = vmul.f32 %v2769, %v1823
      %v2836 = vmul.f32 %v2772, %v1827
      %v2837 = vmul.f32 %v2777, %v1831
      %v2838 = vmul.f32 %v2780, %v1835
      %v2839 = vmul.f32 %v2785, %v1839
      %v2840 = vmul.f32 %v2788, %v1843
      %v2841 = vmul.f32 %v2793, %v1847
      %v2842 = vmul.f32 %v2796, %v1851
      %v2843 = vmul.f32 %v2801, %v1855
      %v2844 = vmul.f32 %v2804, %v1859
      %v2845 = vmul.f32 %v2809, %v1863
      %v2846 = vmul.f32 %v2812, %v1867
      %v2847 = vadd.f32 %v2521, %v2815
      %v2848 = vadd.f32 %v2522, %v2816
      %v2849 = vadd.f32 %v2523, %v2817
      %v2850 = vadd.f32 %v2524, %v2818
      %v2851 = vadd.f32 %v2525, %v2819
      %v2852 = vadd.f32 %v2526, %v2820
      %v2853 = vadd.f32 %v2527, %v2821
      %v2854 = vadd.f32 %v2528, %v2822
      %v2855 = vadd.f32 %v2529, %v2823
      %v2856 = vadd.f32 %v2530, %v2824
      %v2857 = vadd.f32 %v2531, %v2825
      %v2858 = vadd.f32 %v2532, %v2826
      %v2859 = vadd.f32 %v2533, %v2827
      %v2860 = vadd.f32 %v2534, %v2828
      %v2861 = vadd.f32 %v2535, %v2829
      %v2862 = vadd.f32 %v2536, %v2830
      %v2863 = vadd.f32 %v2537, %v2831
      %v2864 = vadd.f32 %v2538, %v2832
      %v2865 = vadd.f32 %v2539, %v2833
      %v2866 = vadd.f32 %v2540, %v2834
      %v2867 = vadd.f32 %v2541, %v2835
      %v2868 = vadd.f32 %v2542, %v2836
      %v2869 = vadd.f32 %v2543, %v2837
      %v2870 = vadd.f32 %v2544, %v2838
      %v2871 = vadd.f32 %v2545, %v2839
      %v2872 = vadd.f32 %v2546, %v2840
      %v2873 = vadd.f32 %v2547, %v2841
      %v2874 = vadd.f32 %v2548, %v2842
      %v2875 = vadd.f32 %v2549, %v2843
      %v2876 = vadd.f32 %v2550, %v2844
      %v2877 = vadd.f32 %v2551, %v2845
      %v2878 = vadd.f32 %v2552, %v2846
      %v2879 = vld [vmem:[#allocation2 + $0x27] sm:$0xff]
      %v2880 = vld [vmem:[#allocation2 + $0x2f] sm:$0xff]
      %v2881 = vld [vmem:[#allocation2 + $0x37] sm:$0xff]
      %v2882 = vld [vmem:[#allocation2 + $0x3f] sm:$0xff]
      %v2883 = vld [vmem:[#allocation2 + $0x47] sm:$0xff]
      %v2884 = vld [vmem:[#allocation2 + $0x4f] sm:$0xff]
      %v2885 = vld [vmem:[#allocation2 + $0x57] sm:$0xff]
      %v2886 = vld [vmem:[#allocation2 + $0x5f] sm:$0xff]
      %v2887 = vld [vmem:[#allocation2 + $0x67] sm:$0xff]
      %v2888 = vld [vmem:[#allocation2 + $0x6f] sm:$0xff]
      %v2889 = vld [vmem:[#allocation2 + $0x77] sm:$0xff]
      %v2890 = vld [vmem:[#allocation2 + $0x7f] sm:$0xff]
      %v2891 = vld [vmem:[#allocation2 + $0x87] sm:$0xff]
      %v2892 = vld [vmem:[#allocation2 + $0x8f] sm:$0xff]
      %v2893 = vld [vmem:[#allocation2 + $0x97] sm:$0xff]
      %v2894 = vld [vmem:[#allocation2 + $0x9f] sm:$0xff]
      %v2895 = vld [vmem:[#allocation2 + $0xa7] sm:$0xff]
      %v2896 = vld [vmem:[#allocation2 + $0xaf] sm:$0xff]
      %v2897 = vld [vmem:[#allocation2 + $0xb7] sm:$0xff]
      %v2898 = vld [vmem:[#allocation2 + $0xbf] sm:$0xff]
      %v2899 = vld [vmem:[#allocation2 + $0xc7] sm:$0xff]
      %v2900 = vld [vmem:[#allocation2 + $0xcf] sm:$0xff]
      %v2901 = vld [vmem:[#allocation2 + $0xd7] sm:$0xff]
      %v2902 = vld [vmem:[#allocation2 + $0xdf] sm:$0xff]
      %v2903 = vld [vmem:[#allocation2 + $0xe7] sm:$0xff]
      %v2904 = vld [vmem:[#allocation2 + $0xef] sm:$0xff]
      %v2905 = vld [vmem:[#allocation2 + $0xf7] sm:$0xff]
      %v2906 = vld [vmem:[#allocation2 + $0xff] sm:$0xff]
      %v2907 = vld [vmem:[#allocation2 + $0x107] sm:$0xff]
      %v2908 = vld [vmem:[#allocation2 + $0x10f] sm:$0xff]
      %v2909 = vld [vmem:[#allocation2 + $0x117] sm:$0xff]
      %v2910 = vld [vmem:[#allocation2 + $0x11f] sm:$0xff]
      %v2911 = vpack.c.bf16 %v2880, %v2879
      %v2912 = vpack.c.bf16 %v2882, %v2881
      %v2913 = vpack.c.bf16 %v2884, %v2883
      %v2914 = vpack.c.bf16 %v2886, %v2885
      %v2915 = vpack.c.bf16 %v2888, %v2887
      %v2916 = vpack.c.bf16 %v2890, %v2889
      %v2917 = vpack.c.bf16 %v2892, %v2891
      %v2918 = vpack.c.bf16 %v2894, %v2893
      %v2919 = vpack.c.bf16 %v2896, %v2895
      %v2920 = vpack.c.bf16 %v2898, %v2897
      %v2921 = vpack.c.bf16 %v2900, %v2899
      %v2922 = vpack.c.bf16 %v2902, %v2901
      %v2923 = vpack.c.bf16 %v2904, %v2903
      %v2924 = vpack.c.bf16 %v2906, %v2905
      %v2925 = vpack.c.bf16 %v2908, %v2907
      %v2926 = vpack.c.bf16 %v2910, %v2909
      %s2927 = scalar_lea.vmem %s4, 6
      %v2928 = vld [vmem:[%s2927] sm:$0x1]
      %v2930 = vsel %vm651, %v2911, 0
      %v2933 = vsel %vm651, %v2912, 0
      %v2936 = vsel %vm651, %v2913, 0
      %v2939 = vsel %vm651, %v2914, 0
      %v2942 = vsel %vm651, %v2915, 0
      %v2945 = vsel %vm651, %v2916, 0
      %v2948 = vsel %vm651, %v2917, 0
      %v2951 = vsel %vm651, %v2918, 0
      %v2954 = vsel %vm651, %v2919, 0
      %v2957 = vsel %vm651, %v2920, 0
      %v2960 = vsel %vm651, %v2921, 0
      %v2963 = vsel %vm651, %v2922, 0
      %v2966 = vsel %vm651, %v2923, 0
      %v2969 = vsel %vm651, %v2924, 0
      %v2972 = vsel %vm651, %v2925, 0
      %v2975 = vsel %vm651, %v2926, 0
      %v2978 = vsel %vm796, %v2928, 0
      %2980 = vmatprep.subr.bf16.mxu0 0
      %2981 = vmatpush1.bf16.msra.mxu0 %v2978
      %2982 = vmatprep.subr.bf16.mxu0 0
      %2983 = vmatpush1.bf16.msra.mxu0 0
      %2984 = vmatprep.subr.bf16.mxu0 0
      %2985 = vmatpush1.bf16.msra.mxu0 0
      %2986 = vmatprep.subr.bf16.mxu0 0
      %2987 = vmatpush1.bf16.msra.mxu0 0
      %2988 = vmatprep.subr.bf16.mxu0 0
      %2989 = vmatpush1.bf16.msra.mxu0 0
      %2990 = vmatprep.subr.bf16.mxu0 0
      %2991 = vmatpush1.bf16.msra.mxu0 0
      %2992 = vmatprep.subr.bf16.mxu0 0
      %2993 = vmatpush1.bf16.msra.mxu0 0
      %2994 = vmatprep.subr.bf16.mxu0 0
      %2995 = vmatpush1.bf16.msra.mxu0 0
      %2996 = vmatprep.subr.bf16.mxu0 0
      %2997 = vmatpush1.bf16.msra.mxu0 0
      %2998 = vmatprep.subr.bf16.mxu0 0
      %2999 = vmatpush1.bf16.msra.mxu0 0
      %3000 = vmatprep.subr.bf16.mxu0 0
      %3001 = vmatpush1.bf16.msra.mxu0 0
      %3002 = vmatprep.subr.bf16.mxu0 0
      %3003 = vmatpush1.bf16.msra.mxu0 0
      %3004 = vmatprep.subr.bf16.mxu0 0
      %3005 = vmatpush1.bf16.msra.mxu0 0
      %3006 = vmatprep.subr.bf16.mxu0 0
      %3007 = vmatpush1.bf16.msra.mxu0 0
      %3008 = vmatprep.subr.bf16.mxu0 0
      %3009 = vmatpush1.bf16.msra.mxu0 0
      %3010 = vmatprep.subr.bf16.mxu0 0
      %3011 = vmatpush1.bf16.msra.mxu0 0
      %3012 = vmatprep.mubr.bf16.mxu0 0
      %3013 = vmatmul.mubr.bf16.gmra.mrb[0].mxu0 %v2930
      %v3014 = vpop.f32.mrb[0].mxu0
      %v3015 = vadd.f32 0.0, %v3014
      %v3016 = vpop.f32.mrb[0].mxu0
      %v3017 = vpop.f32.mrb[0].mxu0
      %v3018 = vadd.f32 0.0, %v3017
      %v3019 = vpop.f32.mrb[0].mxu0
      %3020 = vmatprep.mubr.bf16.mxu0 0
      %3021 = vmatmul.mubr.bf16.gmra.mrb[0].mxu0 %v2933
      %v3022 = vpop.f32.mrb[0].mxu0
      %v3023 = vadd.f32 0.0, %v3022
      %v3024 = vpop.f32.mrb[0].mxu0
      %v3025 = vpop.f32.mrb[0].mxu0
      %v3026 = vadd.f32 0.0, %v3025
      %v3027 = vpop.f32.mrb[0].mxu0
      %3028 = vmatprep.mubr.bf16.mxu0 0
      %3029 = vmatmul.mubr.bf16.gmra.mrb[0].mxu0 %v2936
      %v3030 = vpop.f32.mrb[0].mxu0
      %v3031 = vadd.f32 0.0, %v3030
      %v3032 = vpop.f32.mrb[0].mxu0
      %v3033 = vpop.f32.mrb[0].mxu0
      %v3034 = vadd.f32 0.0, %v3033
      %v3035 = vpop.f32.mrb[0].mxu0
      %3036 = vmatprep.mubr.bf16.mxu0 0
      %3037 = vmatmul.mubr.bf16.gmra.mrb[0].mxu0 %v2939
      %v3038 = vpop.f32.mrb[0].mxu0
      %v3039 = vadd.f32 0.0, %v3038
      %v3040 = vpop.f32.mrb[0].mxu0
      %v3041 = vpop.f32.mrb[0].mxu0
      %v3042 = vadd.f32 0.0, %v3041
      %v3043 = vpop.f32.mrb[0].mxu0
      %3044 = vmatprep.mubr.bf16.mxu0 0
      %3045 = vmatmul.mubr.bf16.gmra.mrb[0].mxu0 %v2942
      %v3046 = vpop.f32.mrb[0].mxu0
      %v3047 = vadd.f32 0.0, %v3046
      %v3048 = vpop.f32.mrb[0].mxu0
      %v3049 = vpop.f32.mrb[0].mxu0
      %v3050 = vadd.f32 0.0, %v3049
      %v3051 = vpop.f32.mrb[0].mxu0
      %3052 = vmatprep.mubr.bf16.mxu0 0
      %3053 = vmatmul.mubr.bf16.gmra.mrb[0].mxu0 %v2945
      %v3054 = vpop.f32.mrb[0].mxu0
      %v3055 = vadd.f32 0.0, %v3054
      %v3056 = vpop.f32.mrb[0].mxu0
      %v3057 = vpop.f32.mrb[0].mxu0
      %v3058 = vadd.f32 0.0, %v3057
      %v3059 = vpop.f32.mrb[0].mxu0
      %3060 = vmatprep.mubr.bf16.mxu0 0
      %3061 = vmatmul.mubr.bf16.gmra.mrb[0].mxu0 %v2948
      %v3062 = vpop.f32.mrb[0].mxu0
      %v3063 = vadd.f32 0.0, %v3062
      %v3064 = vpop.f32.mrb[0].mxu0
      %v3065 = vpop.f32.mrb[0].mxu0
      %v3066 = vadd.f32 0.0, %v3065
      %v3067 = vpop.f32.mrb[0].mxu0
      %3068 = vmatprep.mubr.bf16.mxu0 0
      %3069 = vmatmul.mubr.bf16.gmra.mrb[0].mxu0 %v2951
      %v3070 = vpop.f32.mrb[0].mxu0
      %v3071 = vadd.f32 0.0, %v3070
      %v3072 = vpop.f32.mrb[0].mxu0
      %v3073 = vpop.f32.mrb[0].mxu0
      %v3074 = vadd.f32 0.0, %v3073
      %v3075 = vpop.f32.mrb[0].mxu0
      %3076 = vmatprep.mubr.bf16.mxu0 0
      %3077 = vmatmul.mubr.bf16.gmra.mrb[0].mxu0 %v2954
      %v3078 = vpop.f32.mrb[0].mxu0
      %v3079 = vadd.f32 0.0, %v3078
      %v3080 = vpop.f32.mrb[0].mxu0
      %v3081 = vpop.f32.mrb[0].mxu0
      %v3082 = vadd.f32 0.0, %v3081
      %v3083 = vpop.f32.mrb[0].mxu0
      %3084 = vmatprep.mubr.bf16.mxu0 0
      %3085 = vmatmul.mubr.bf16.gmra.mrb[0].mxu0 %v2957
      %v3086 = vpop.f32.mrb[0].mxu0
      %v3087 = vadd.f32 0.0, %v3086
      %v3088 = vpop.f32.mrb[0].mxu0
      %v3089 = vpop.f32.mrb[0].mxu0
      %v3090 = vadd.f32 0.0, %v3089
      %v3091 = vpop.f32.mrb[0].mxu0
      %3092 = vmatprep.mubr.bf16.mxu0 0
      %3093 = vmatmul.mubr.bf16.gmra.mrb[0].mxu0 %v2960
      %v3094 = vpop.f32.mrb[0].mxu0
      %v3095 = vadd.f32 0.0, %v3094
      %v3096 = vpop.f32.mrb[0].mxu0
      %v3097 = vpop.f32.mrb[0].mxu0
      %v3098 = vadd.f32 0.0, %v3097
      %v3099 = vpop.f32.mrb[0].mxu0
      %3100 = vmatprep.mubr.bf16.mxu0 0
      %3101 = vmatmul.mubr.bf16.gmra.mrb[0].mxu0 %v2963
      %v3102 = vpop.f32.mrb[0].mxu0
      %v3103 = vadd.f32 0.0, %v3102
      %v3104 = vpop.f32.mrb[0].mxu0
      %v3105 = vpop.f32.mrb[0].mxu0
      %v3106 = vadd.f32 0.0, %v3105
      %v3107 = vpop.f32.mrb[0].mxu0
      %3108 = vmatprep.mubr.bf16.mxu0 0
      %3109 = vmatmul.mubr.bf16.gmra.mrb[0].mxu0 %v2966
      %v3110 = vpop.f32.mrb[0].mxu0
      %v3111 = vadd.f32 0.0, %v3110
      %v3112 = vpop.f32.mrb[0].mxu0
      %v3113 = vpop.f32.mrb[0].mxu0
      %v3114 = vadd.f32 0.0, %v3113
      %v3115 = vpop.f32.mrb[0].mxu0
      %3116 = vmatprep.mubr.bf16.mxu0 0
      %3117 = vmatmul.mubr.bf16.gmra.mrb[0].mxu0 %v2969
      %v3118 = vpop.f32.mrb[0].mxu0
      %v3119 = vadd.f32 0.0, %v3118
      %v3120 = vpop.f32.mrb[0].mxu0
      %v3121 = vpop.f32.mrb[0].mxu0
      %v3122 = vadd.f32 0.0, %v3121
      %v3123 = vpop.f32.mrb[0].mxu0
      %3124 = vmatprep.mubr.bf16.mxu0 0
      %3125 = vmatmul.mubr.bf16.gmra.mrb[0].mxu0 %v2972
      %v3126 = vpop.f32.mrb[0].mxu0
      %v3127 = vadd.f32 0.0, %v3126
      %v3128 = vpop.f32.mrb[0].mxu0
      %v3129 = vpop.f32.mrb[0].mxu0
      %v3130 = vadd.f32 0.0, %v3129
      %v3131 = vpop.f32.mrb[0].mxu0
      %3132 = vmatprep.mubr.bf16.mxu0 0
      %3133 = vmatmul.mubr.bf16.gmra.mrb[0].mxu0 %v2975
      %v3134 = vpop.f32.mrb[0].mxu0
      %v3135 = vadd.f32 0.0, %v3134
      %v3136 = vpop.f32.mrb[0].mxu0
      %v3137 = vpop.f32.mrb[0].mxu0
      %v3138 = vadd.f32 0.0, %v3137
      %v3139 = vpop.f32.mrb[0].mxu0
      %3140 = vdwg.mxu0
      %v3141 = vmul.f32 %v3015, %v964
      %v3142 = vmul.f32 %v3018, %v969
      %v3143 = vmul.f32 %v3023, %v974
      %v3144 = vmul.f32 %v3026, %v979
      %v3145 = vmul.f32 %v3031, %v984
      %v3146 = vmul.f32 %v3034, %v989
      %v3147 = vmul.f32 %v3039, %v994
      %v3148 = vmul.f32 %v3042, %v999
      %v3149 = vmul.f32 %v3047, %v1004
      %v3150 = vmul.f32 %v3050, %v1009
      %v3151 = vmul.f32 %v3055, %v1014
      %v3152 = vmul.f32 %v3058, %v1019
      %v3153 = vmul.f32 %v3063, %v1024
      %v3154 = vmul.f32 %v3066, %v1029
      %v3155 = vmul.f32 %v3071, %v1034
      %v3156 = vmul.f32 %v3074, %v1039
      %v3157 = vmul.f32 %v3079, %v1044
      %v3158 = vmul.f32 %v3082, %v1049
      %v3159 = vmul.f32 %v3087, %v1054
      %v3160 = vmul.f32 %v3090, %v1059
      %v3161 = vmul.f32 %v3095, %v1064
      %v3162 = vmul.f32 %v3098, %v1069
      %v3163 = vmul.f32 %v3103, %v1074
      %v3164 = vmul.f32 %v3106, %v1079
      %v3165 = vmul.f32 %v3111, %v1084
      %v3166 = vmul.f32 %v3114, %v1089
      %v3167 = vmul.f32 %v3119, %v1094
      %v3168 = vmul.f32 %v3122, %v1099
      %v3169 = vmul.f32 %v3127, %v1104
      %v3170 = vmul.f32 %v3130, %v1109
      %v3171 = vmul.f32 %v3135, %v1114
      %v3172 = vmul.f32 %v3138, %v1119
      %v3173 = vadd.f32 %v2847, %v3141
      %v3174 = vadd.f32 %v2848, %v3142
      %v3175 = vadd.f32 %v2849, %v3143
      %v3176 = vadd.f32 %v2850, %v3144
      %v3177 = vadd.f32 %v2851, %v3145
      %v3178 = vadd.f32 %v2852, %v3146
      %v3179 = vadd.f32 %v2853, %v3147
      %v3180 = vadd.f32 %v2854, %v3148
      %v3181 = vadd.f32 %v2855, %v3149
      %v3182 = vadd.f32 %v2856, %v3150
      %v3183 = vadd.f32 %v2857, %v3151
      %v3184 = vadd.f32 %v2858, %v3152
      %v3185 = vadd.f32 %v2859, %v3153
      %v3186 = vadd.f32 %v2860, %v3154
      %v3187 = vadd.f32 %v2861, %v3155
      %v3188 = vadd.f32 %v2862, %v3156
      %v3189 = vadd.f32 %v2863, %v3157
      %v3190 = vadd.f32 %v2864, %v3158
      %v3191 = vadd.f32 %v2865, %v3159
      %v3192 = vadd.f32 %v2866, %v3160
      %v3193 = vadd.f32 %v2867, %v3161
      %v3194 = vadd.f32 %v2868, %v3162
      %v3195 = vadd.f32 %v2869, %v3163
      %v3196 = vadd.f32 %v2870, %v3164
      %v3197 = vadd.f32 %v2871, %v3165
      %v3198 = vadd.f32 %v2872, %v3166
      %v3199 = vadd.f32 %v2873, %v3167
      %v3200 = vadd.f32 %v2874, %v3168
      %v3201 = vadd.f32 %v2875, %v3169
      %v3202 = vadd.f32 %v2876, %v3170
      %v3203 = vadd.f32 %v2877, %v3171
      %v3204 = vadd.f32 %v2878, %v3172
      %v3205 = vld [vmem:[#allocation2 + $0x28] sm:$0xff]
      %v3206 = vld [vmem:[#allocation2 + $0x30] sm:$0xff]
      %v3207 = vld [vmem:[#allocation2 + $0x38] sm:$0xff]
      %v3208 = vld [vmem:[#allocation2 + $0x40] sm:$0xff]
      %v3209 = vld [vmem:[#allocation2 + $0x48] sm:$0xff]
      %v3210 = vld [vmem:[#allocation2 + $0x50] sm:$0xff]
      %v3211 = vld [vmem:[#allocation2 + $0x58] sm:$0xff]
      %v3212 = vld [vmem:[#allocation2 + $0x60] sm:$0xff]
      %v3213 = vld [vmem:[#allocation2 + $0x68] sm:$0xff]
      %v3214 = vld [vmem:[#allocation2 + $0x70] sm:$0xff]
      %v3215 = vld [vmem:[#allocation2 + $0x78] sm:$0xff]
      %v3216 = vld [vmem:[#allocation2 + $0x80] sm:$0xff]
      %v3217 = vld [vmem:[#allocation2 + $0x88] sm:$0xff]
      %v3218 = vld [vmem:[#allocation2 + $0x90] sm:$0xff]
      %v3219 = vld [vmem:[#allocation2 + $0x98] sm:$0xff]
      %v3220 = vld [vmem:[#allocation2 + $0xa0] sm:$0xff]
      %v3221 = vld [vmem:[#allocation2 + $0xa8] sm:$0xff]
      %v3222 = vld [vmem:[#allocation2 + $0xb0] sm:$0xff]
      %v3223 = vld [vmem:[#allocation2 + $0xb8] sm:$0xff]
      %v3224 = vld [vmem:[#allocation2 + $0xc0] sm:$0xff]
      %v3225 = vld [vmem:[#allocation2 + $0xc8] sm:$0xff]
      %v3226 = vld [vmem:[#allocation2 + $0xd0] sm:$0xff]
      %v3227 = vld [vmem:[#allocation2 + $0xd8] sm:$0xff]
      %v3228 = vld [vmem:[#allocation2 + $0xe0] sm:$0xff]
      %v3229 = vld [vmem:[#allocation2 + $0xe8] sm:$0xff]
      %v3230 = vld [vmem:[#allocation2 + $0xf0] sm:$0xff]
      %v3231 = vld [vmem:[#allocation2 + $0xf8] sm:$0xff]
      %v3232 = vld [vmem:[#allocation2 + $0x100] sm:$0xff]
      %v3233 = vld [vmem:[#allocation2 + $0x108] sm:$0xff]
      %v3234 = vld [vmem:[#allocation2 + $0x110] sm:$0xff]
      %v3235 = vld [vmem:[#allocation2 + $0x118] sm:$0xff]
      %v3236 = vld [vmem:[#allocation2 + $0x120] sm:$0xff]
      %v3237 = vpack.c.bf16 %v3206, %v3205
      %v3238 = vpack.c.bf16 %v3208, %v3207
      %v3239 = vpack.c.bf16 %v3210, %v3209
      %v3240 = vpack.c.bf16 %v3212, %v3211
      %v3241 = vpack.c.bf16 %v3214, %v3213
      %v3242 = vpack.c.bf16 %v3216, %v3215
      %v3243 = vpack.c.bf16 %v3218, %v3217
      %v3244 = vpack.c.bf16 %v3220, %v3219
      %v3245 = vpack.c.bf16 %v3222, %v3221
      %v3246 = vpack.c.bf16 %v3224, %v3223
      %v3247 = vpack.c.bf16 %v3226, %v3225
      %v3248 = vpack.c.bf16 %v3228, %v3227
      %v3249 = vpack.c.bf16 %v3230, %v3229
      %v3250 = vpack.c.bf16 %v3232, %v3231
      %v3251 = vpack.c.bf16 %v3234, %v3233
      %v3252 = vpack.c.bf16 %v3236, %v3235
      %s3253 = scalar_lea.vmem %s4, 7
      %v3254 = vld [vmem:[%s3253] sm:$0x1]
      %v3256 = vsel %vm651, %v3237, 0
      %v3259 = vsel %vm651, %v3238, 0
      %v3262 = vsel %vm651, %v3239, 0
      %v3265 = vsel %vm651, %v3240, 0
      %v3268 = vsel %vm651, %v3241, 0
      %v3271 = vsel %vm651, %v3242, 0
      %v3274 = vsel %vm651, %v3243, 0
      %v3277 = vsel %vm651, %v3244, 0
      %v3280 = vsel %vm651, %v3245, 0
      %v3283 = vsel %vm651, %v3246, 0
      %v3286 = vsel %vm651, %v3247, 0
      %v3289 = vsel %vm651, %v3248, 0
      %v3292 = vsel %vm651, %v3249, 0
      %v3295 = vsel %vm651, %v3250, 0
      %v3298 = vsel %vm651, %v3251, 0
      %v3301 = vsel %vm651, %v3252, 0
      %v3304 = vsel %vm796, %v3254, 0
      %3306 = vmatprep.subr.bf16.mxu0 0
      %3307 = vmatpush1.bf16.msra.mxu0 %v3304
      %3308 = vmatprep.subr.bf16.mxu0 0
      %3309 = vmatpush1.bf16.msra.mxu0 0
      %3310 = vmatprep.subr.bf16.mxu0 0
      %3311 = vmatpush1.bf16.msra.mxu0 0
      %3312 = vmatprep.subr.bf16.mxu0 0
      %3313 = vmatpush1.bf16.msra.mxu0 0
      %3314 = vmatprep.subr.bf16.mxu0 0
      %3315 = vmatpush1.bf16.msra.mxu0 0
      %3316 = vmatprep.subr.bf16.mxu0 0
      %3317 = vmatpush1.bf16.msra.mxu0 0
      %3318 = vmatprep.subr.bf16.mxu0 0
      %3319 = vmatpush1.bf16.msra.mxu0 0
      %3320 = vmatprep.subr.bf16.mxu0 0
      %3321 = vmatpush1.bf16.msra.mxu0 0
      %3322 = vmatprep.subr.bf16.mxu0 0
      %3323 = vmatpush1.bf16.msra.mxu0 0
      %3324 = vmatprep.subr.bf16.mxu0 0
      %3325 = vmatpush1.bf16.msra.mxu0 0
      %3326 = vmatprep.subr.bf16.mxu0 0
      %3327 = vmatpush1.bf16.msra.mxu0 0
      %3328 = vmatprep.subr.bf16.mxu0 0
      %3329 = vmatpush1.bf16.msra.mxu0 0
      %3330 = vmatprep.subr.bf16.mxu0 0
      %3331 = vmatpush1.bf16.msra.mxu0 0
      %3332 = vmatprep.subr.bf16.mxu0 0
      %3333 = vmatpush1.bf16.msra.mxu0 0
      %3334 = vmatprep.subr.bf16.mxu0 0
      %3335 = vmatpush1.bf16.msra.mxu0 0
      %3336 = vmatprep.subr.bf16.mxu0 0
      %3337 = vmatpush1.bf16.msra.mxu0 0
      %3338 = vmatprep.mubr.bf16.mxu0 0
      %3339 = vmatmul.mubr.bf16.gmra.mrb[0].mxu0 %v3256
      %v3340 = vpop.f32.mrb[0].mxu0
      %v3341 = vadd.f32 0.0, %v3340
      %v3342 = vpop.f32.mrb[0].mxu0
      %v3343 = vpop.f32.mrb[0].mxu0
      %v3344 = vadd.f32 0.0, %v3343
      %v3345 = vpop.f32.mrb[0].mxu0
      %3346 = vmatprep.mubr.bf16.mxu0 0
      %3347 = vmatmul.mubr.bf16.gmra.mrb[0].mxu0 %v3259
      %v3348 = vpop.f32.mrb[0].mxu0
      %v3349 = vadd.f32 0.0, %v3348
      %v3350 = vpop.f32.mrb[0].mxu0
      %v3351 = vpop.f32.mrb[0].mxu0
      %v3352 = vadd.f32 0.0, %v3351
      %v3353 = vpop.f32.mrb[0].mxu0
      %3354 = vmatprep.mubr.bf16.mxu0 0
      %3355 = vmatmul.mubr.bf16.gmra.mrb[0].mxu0 %v3262
      %v3356 = vpop.f32.mrb[0].mxu0
      %v3357 = vadd.f32 0.0, %v3356
      %v3358 = vpop.f32.mrb[0].mxu0
      %v3359 = vpop.f32.mrb[0].mxu0
      %v3360 = vadd.f32 0.0, %v3359
      %v3361 = vpop.f32.mrb[0].mxu0
      %3362 = vmatprep.mubr.bf16.mxu0 0
      %3363 = vmatmul.mubr.bf16.gmra.mrb[0].mxu0 %v3265
      %v3364 = vpop.f32.mrb[0].mxu0
      %v3365 = vadd.f32 0.0, %v3364
      %v3366 = vpop.f32.mrb[0].mxu0
      %v3367 = vpop.f32.mrb[0].mxu0
      %v3368 = vadd.f32 0.0, %v3367
      %v3369 = vpop.f32.mrb[0].mxu0
      %3370 = vmatprep.mubr.bf16.mxu0 0
      %3371 = vmatmul.mubr.bf16.gmra.mrb[0].mxu0 %v3268
      %v3372 = vpop.f32.mrb[0].mxu0
      %v3373 = vadd.f32 0.0, %v3372
      %v3374 = vpop.f32.mrb[0].mxu0
      %v3375 = vpop.f32.mrb[0].mxu0
      %v3376 = vadd.f32 0.0, %v3375
      %v3377 = vpop.f32.mrb[0].mxu0
      %3378 = vmatprep.mubr.bf16.mxu0 0
      %3379 = vmatmul.mubr.bf16.gmra.mrb[0].mxu0 %v3271
      %v3380 = vpop.f32.mrb[0].mxu0
      %v3381 = vadd.f32 0.0, %v3380
      %v3382 = vpop.f32.mrb[0].mxu0
      %v3383 = vpop.f32.mrb[0].mxu0
      %v3384 = vadd.f32 0.0, %v3383
      %v3385 = vpop.f32.mrb[0].mxu0
      %3386 = vmatprep.mubr.bf16.mxu0 0
      %3387 = vmatmul.mubr.bf16.gmra.mrb[0].mxu0 %v3274
      %v3388 = vpop.f32.mrb[0].mxu0
      %v3389 = vadd.f32 0.0, %v3388
      %v3390 = vpop.f32.mrb[0].mxu0
      %v3391 = vpop.f32.mrb[0].mxu0
      %v3392 = vadd.f32 0.0, %v3391
      %v3393 = vpop.f32.mrb[0].mxu0
      %3394 = vmatprep.mubr.bf16.mxu0 0
      %3395 = vmatmul.mubr.bf16.gmra.mrb[0].mxu0 %v3277
      %v3396 = vpop.f32.mrb[0].mxu0
      %v3397 = vadd.f32 0.0, %v3396
      %v3398 = vpop.f32.mrb[0].mxu0
      %v3399 = vpop.f32.mrb[0].mxu0
      %v3400 = vadd.f32 0.0, %v3399
      %v3401 = vpop.f32.mrb[0].mxu0
      %3402 = vmatprep.mubr.bf16.mxu0 0
      %3403 = vmatmul.mubr.bf16.gmra.mrb[0].mxu0 %v3280
      %v3404 = vpop.f32.mrb[0].mxu0
      %v3405 = vadd.f32 0.0, %v3404
      %v3406 = vpop.f32.mrb[0].mxu0
      %v3407 = vpop.f32.mrb[0].mxu0
      %v3408 = vadd.f32 0.0, %v3407
      %v3409 = vpop.f32.mrb[0].mxu0
      %3410 = vmatprep.mubr.bf16.mxu0 0
      %3411 = vmatmul.mubr.bf16.gmra.mrb[0].mxu0 %v3283
      %v3412 = vpop.f32.mrb[0].mxu0
      %v3413 = vadd.f32 0.0, %v3412
      %v3414 = vpop.f32.mrb[0].mxu0
      %v3415 = vpop.f32.mrb[0].mxu0
      %v3416 = vadd.f32 0.0, %v3415
      %v3417 = vpop.f32.mrb[0].mxu0
      %3418 = vmatprep.mubr.bf16.mxu0 0
      %3419 = vmatmul.mubr.bf16.gmra.mrb[0].mxu0 %v3286
      %v3420 = vpop.f32.mrb[0].mxu0
      %v3421 = vadd.f32 0.0, %v3420
      %v3422 = vpop.f32.mrb[0].mxu0
      %v3423 = vpop.f32.mrb[0].mxu0
      %v3424 = vadd.f32 0.0, %v3423
      %v3425 = vpop.f32.mrb[0].mxu0
      %3426 = vmatprep.mubr.bf16.mxu0 0
      %3427 = vmatmul.mubr.bf16.gmra.mrb[0].mxu0 %v3289
      %v3428 = vpop.f32.mrb[0].mxu0
      %v3429 = vadd.f32 0.0, %v3428
      %v3430 = vpop.f32.mrb[0].mxu0
      %v3431 = vpop.f32.mrb[0].mxu0
      %v3432 = vadd.f32 0.0, %v3431
      %v3433 = vpop.f32.mrb[0].mxu0
      %3434 = vmatprep.mubr.bf16.mxu0 0
      %3435 = vmatmul.mubr.bf16.gmra.mrb[0].mxu0 %v3292
      %v3436 = vpop.f32.mrb[0].mxu0
      %v3437 = vadd.f32 0.0, %v3436
      %v3438 = vpop.f32.mrb[0].mxu0
      %v3439 = vpop.f32.mrb[0].mxu0
      %v3440 = vadd.f32 0.0, %v3439
      %v3441 = vpop.f32.mrb[0].mxu0
      %3442 = vmatprep.mubr.bf16.mxu0 0
      %3443 = vmatmul.mubr.bf16.gmra.mrb[0].mxu0 %v3295
      %v3444 = vpop.f32.mrb[0].mxu0
      %v3445 = vadd.f32 0.0, %v3444
      %v3446 = vpop.f32.mrb[0].mxu0
      %v3447 = vpop.f32.mrb[0].mxu0
      %v3448 = vadd.f32 0.0, %v3447
      %v3449 = vpop.f32.mrb[0].mxu0
      %3450 = vmatprep.mubr.bf16.mxu0 0
      %3451 = vmatmul.mubr.bf16.gmra.mrb[0].mxu0 %v3298
      %v3452 = vpop.f32.mrb[0].mxu0
      %v3453 = vadd.f32 0.0, %v3452
      %v3454 = vpop.f32.mrb[0].mxu0
      %v3455 = vpop.f32.mrb[0].mxu0
      %v3456 = vadd.f32 0.0, %v3455
      %v3457 = vpop.f32.mrb[0].mxu0
      %3458 = vmatprep.mubr.bf16.mxu0 0
      %3459 = vmatmul.mubr.bf16.gmra.mrb[0].mxu0 %v3301
      %v3460 = vpop.f32.mrb[0].mxu0
      %v3461 = vadd.f32 0.0, %v3460
      %v3462 = vpop.f32.mrb[0].mxu0
      %v3463 = vpop.f32.mrb[0].mxu0
      %v3464 = vadd.f32 0.0, %v3463
      %v3465 = vpop.f32.mrb[0].mxu0
      %3466 = vdwg.mxu0
      %v3467 = vadd.f32 %v3173, %v3341
      %v3468 = vadd.f32 %v3174, %v3344
      %v3469 = vadd.f32 %v3175, %v3349
      %v3470 = vadd.f32 %v3176, %v3352
      %v3471 = vadd.f32 %v3177, %v3357
      %v3472 = vadd.f32 %v3178, %v3360
      %v3473 = vadd.f32 %v3179, %v3365
      %v3474 = vadd.f32 %v3180, %v3368
      %v3475 = vadd.f32 %v3181, %v3373
      %v3476 = vadd.f32 %v3182, %v3376
      %v3477 = vadd.f32 %v3183, %v3381
      %v3478 = vadd.f32 %v3184, %v3384
      %v3479 = vadd.f32 %v3185, %v3389
      %v3480 = vadd.f32 %v3186, %v3392
      %v3481 = vadd.f32 %v3187, %v3397
      %v3482 = vadd.f32 %v3188, %v3400
      %v3483 = vadd.f32 %v3189, %v3405
      %v3484 = vadd.f32 %v3190, %v3408
      %v3485 = vadd.f32 %v3191, %v3413
      %v3486 = vadd.f32 %v3192, %v3416
      %v3487 = vadd.f32 %v3193, %v3421
      %v3488 = vadd.f32 %v3194, %v3424
      %v3489 = vadd.f32 %v3195, %v3429
      %v3490 = vadd.f32 %v3196, %v3432
      %v3491 = vadd.f32 %v3197, %v3437
      %v3492 = vadd.f32 %v3198, %v3440
      %v3493 = vadd.f32 %v3199, %v3445
      %v3494 = vadd.f32 %v3200, %v3448
      %v3495 = vadd.f32 %v3201, %v3453
      %v3496 = vadd.f32 %v3202, %v3456
      %v3497 = vadd.f32 %v3203, %v3461
      %v3498 = vadd.f32 %v3204, %v3464
      %v3499 = vld [vmem:[#allocation2 + $0x29] sm:$0xff]
      %v3500 = vld [vmem:[#allocation2 + $0x31] sm:$0xff]
      %v3501 = vld [vmem:[#allocation2 + $0x39] sm:$0xff]
      %v3502 = vld [vmem:[#allocation2 + $0x41] sm:$0xff]
      %v3503 = vld [vmem:[#allocation2 + $0x49] sm:$0xff]
      %v3504 = vld [vmem:[#allocation2 + $0x51] sm:$0xff]
      %v3505 = vld [vmem:[#allocation2 + $0x59] sm:$0xff]
      %v3506 = vld [vmem:[#allocation2 + $0x61] sm:$0xff]
      %v3507 = vld [vmem:[#allocation2 + $0x69] sm:$0xff]
      %v3508 = vld [vmem:[#allocation2 + $0x71] sm:$0xff]
      %v3509 = vld [vmem:[#allocation2 + $0x79] sm:$0xff]
      %v3510 = vld [vmem:[#allocation2 + $0x81] sm:$0xff]
      %v3511 = vld [vmem:[#allocation2 + $0x89] sm:$0xff]
      %v3512 = vld [vmem:[#allocation2 + $0x91] sm:$0xff]
      %v3513 = vld [vmem:[#allocation2 + $0x99] sm:$0xff]
      %v3514 = vld [vmem:[#allocation2 + $0xa1] sm:$0xff]
      %v3515 = vld [vmem:[#allocation2 + $0xa9] sm:$0xff]
      %v3516 = vld [vmem:[#allocation2 + $0xb1] sm:$0xff]
      %v3517 = vld [vmem:[#allocation2 + $0xb9] sm:$0xff]
      %v3518 = vld [vmem:[#allocation2 + $0xc1] sm:$0xff]
      %v3519 = vld [vmem:[#allocation2 + $0xc9] sm:$0xff]
      %v3520 = vld [vmem:[#allocation2 + $0xd1] sm:$0xff]
      %v3521 = vld [vmem:[#allocation2 + $0xd9] sm:$0xff]
      %v3522 = vld [vmem:[#allocation2 + $0xe1] sm:$0xff]
      %v3523 = vld [vmem:[#allocation2 + $0xe9] sm:$0xff]
      %v3524 = vld [vmem:[#allocation2 + $0xf1] sm:$0xff]
      %v3525 = vld [vmem:[#allocation2 + $0xf9] sm:$0xff]
      %v3526 = vld [vmem:[#allocation2 + $0x101] sm:$0xff]
      %v3527 = vld [vmem:[#allocation2 + $0x109] sm:$0xff]
      %v3528 = vld [vmem:[#allocation2 + $0x111] sm:$0xff]
      %v3529 = vld [vmem:[#allocation2 + $0x119] sm:$0xff]
      %v3530 = vld [vmem:[#allocation2 + $0x121] sm:$0xff]
      %v3531 = vpack.c.bf16 %v3500, %v3499
      %v3532 = vpack.c.bf16 %v3502, %v3501
      %v3533 = vpack.c.bf16 %v3504, %v3503
      %v3534 = vpack.c.bf16 %v3506, %v3505
      %v3535 = vpack.c.bf16 %v3508, %v3507
      %v3536 = vpack.c.bf16 %v3510, %v3509
      %v3537 = vpack.c.bf16 %v3512, %v3511
      %v3538 = vpack.c.bf16 %v3514, %v3513
      %v3539 = vpack.c.bf16 %v3516, %v3515
      %v3540 = vpack.c.bf16 %v3518, %v3517
      %v3541 = vpack.c.bf16 %v3520, %v3519
      %v3542 = vpack.c.bf16 %v3522, %v3521
      %v3543 = vpack.c.bf16 %v3524, %v3523
      %v3544 = vpack.c.bf16 %v3526, %v3525
      %v3545 = vpack.c.bf16 %v3528, %v3527
      %v3546 = vpack.c.bf16 %v3530, %v3529
      %s3547 = scalar_lea.vmem %s4, 8
      %v3548 = vld [vmem:[%s3547] sm:$0x1]
      %v3550 = vsel %vm651, %v3531, 0
      %v3553 = vsel %vm651, %v3532, 0
      %v3556 = vsel %vm651, %v3533, 0
      %v3559 = vsel %vm651, %v3534, 0
      %v3562 = vsel %vm651, %v3535, 0
      %v3565 = vsel %vm651, %v3536, 0
      %v3568 = vsel %vm651, %v3537, 0
      %v3571 = vsel %vm651, %v3538, 0
      %v3574 = vsel %vm651, %v3539, 0
      %v3577 = vsel %vm651, %v3540, 0
      %v3580 = vsel %vm651, %v3541, 0
      %v3583 = vsel %vm651, %v3542, 0
      %v3586 = vsel %vm651, %v3543, 0
      %v3589 = vsel %vm651, %v3544, 0
      %v3592 = vsel %vm651, %v3545, 0
      %v3595 = vsel %vm651, %v3546, 0
      %v3598 = vsel %vm796, %v3548, 0
      %3600 = vmatprep.subr.bf16.mxu0 0
      %3601 = vmatpush1.bf16.msra.mxu0 %v3598
      %3602 = vmatprep.subr.bf16.mxu0 0
      %3603 = vmatpush1.bf16.msra.mxu0 0
      %3604 = vmatprep.subr.bf16.mxu0 0
      %3605 = vmatpush1.bf16.msra.mxu0 0
      %3606 = vmatprep.subr.bf16.mxu0 0
      %3607 = vmatpush1.bf16.msra.mxu0 0
      %3608 = vmatprep.subr.bf16.mxu0 0
      %3609 = vmatpush1.bf16.msra.mxu0 0
      %3610 = vmatprep.subr.bf16.mxu0 0
      %3611 = vmatpush1.bf16.msra.mxu0 0
      %3612 = vmatprep.subr.bf16.mxu0 0
      %3613 = vmatpush1.bf16.msra.mxu0 0
      %3614 = vmatprep.subr.bf16.mxu0 0
      %3615 = vmatpush1.bf16.msra.mxu0 0
      %3616 = vmatprep.subr.bf16.mxu0 0
      %3617 = vmatpush1.bf16.msra.mxu0 0
      %3618 = vmatprep.subr.bf16.mxu0 0
      %3619 = vmatpush1.bf16.msra.mxu0 0
      %3620 = vmatprep.subr.bf16.mxu0 0
      %3621 = vmatpush1.bf16.msra.mxu0 0
      %3622 = vmatprep.subr.bf16.mxu0 0
      %3623 = vmatpush1.bf16.msra.mxu0 0
      %3624 = vmatprep.subr.bf16.mxu0 0
      %3625 = vmatpush1.bf16.msra.mxu0 0
      %3626 = vmatprep.subr.bf16.mxu0 0
      %3627 = vmatpush1.bf16.msra.mxu0 0
      %3628 = vmatprep.subr.bf16.mxu0 0
      %3629 = vmatpush1.bf16.msra.mxu0 0
      %3630 = vmatprep.subr.bf16.mxu0 0
      %3631 = vmatpush1.bf16.msra.mxu0 0
      %3632 = vmatprep.mubr.bf16.mxu0 0
      %3633 = vmatmul.mubr.bf16.gmra.mrb[0].mxu0 %v3550
      %v3634 = vpop.f32.mrb[0].mxu0
      %v3635 = vadd.f32 0.0, %v3634
      %v3636 = vpop.f32.mrb[0].mxu0
      %v3637 = vpop.f32.mrb[0].mxu0
      %v3638 = vadd.f32 0.0, %v3637
      %v3639 = vpop.f32.mrb[0].mxu0
      %3640 = vmatprep.mubr.bf16.mxu0 0
      %3641 = vmatmul.mubr.bf16.gmra.mrb[0].mxu0 %v3553
      %v3642 = vpop.f32.mrb[0].mxu0
      %v3643 = vadd.f32 0.0, %v3642
      %v3644 = vpop.f32.mrb[0].mxu0
      %v3645 = vpop.f32.mrb[0].mxu0
      %v3646 = vadd.f32 0.0, %v3645
      %v3647 = vpop.f32.mrb[0].mxu0
      %3648 = vmatprep.mubr.bf16.mxu0 0
      %3649 = vmatmul.mubr.bf16.gmra.mrb[0].mxu0 %v3556
      %v3650 = vpop.f32.mrb[0].mxu0
      %v3651 = vadd.f32 0.0, %v3650
      %v3652 = vpop.f32.mrb[0].mxu0
      %v3653 = vpop.f32.mrb[0].mxu0
      %v3654 = vadd.f32 0.0, %v3653
      %v3655 = vpop.f32.mrb[0].mxu0
      %3656 = vmatprep.mubr.bf16.mxu0 0
      %3657 = vmatmul.mubr.bf16.gmra.mrb[0].mxu0 %v3559
      %v3658 = vpop.f32.mrb[0].mxu0
      %v3659 = vadd.f32 0.0, %v3658
      %v3660 = vpop.f32.mrb[0].mxu0
      %v3661 = vpop.f32.mrb[0].mxu0
      %v3662 = vadd.f32 0.0, %v3661
      %v3663 = vpop.f32.mrb[0].mxu0
      %3664 = vmatprep.mubr.bf16.mxu0 0
      %3665 = vmatmul.mubr.bf16.gmra.mrb[0].mxu0 %v3562
      %v3666 = vpop.f32.mrb[0].mxu0
      %v3667 = vadd.f32 0.0, %v3666
      %v3668 = vpop.f32.mrb[0].mxu0
      %v3669 = vpop.f32.mrb[0].mxu0
      %v3670 = vadd.f32 0.0, %v3669
      %v3671 = vpop.f32.mrb[0].mxu0
      %3672 = vmatprep.mubr.bf16.mxu0 0
      %3673 = vmatmul.mubr.bf16.gmra.mrb[0].mxu0 %v3565
      %v3674 = vpop.f32.mrb[0].mxu0
      %v3675 = vadd.f32 0.0, %v3674
      %v3676 = vpop.f32.mrb[0].mxu0
      %v3677 = vpop.f32.mrb[0].mxu0
      %v3678 = vadd.f32 0.0, %v3677
      %v3679 = vpop.f32.mrb[0].mxu0
      %3680 = vmatprep.mubr.bf16.mxu0 0
      %3681 = vmatmul.mubr.bf16.gmra.mrb[0].mxu0 %v3568
      %v3682 = vpop.f32.mrb[0].mxu0
      %v3683 = vadd.f32 0.0, %v3682
      %v3684 = vpop.f32.mrb[0].mxu0
      %v3685 = vpop.f32.mrb[0].mxu0
      %v3686 = vadd.f32 0.0, %v3685
      %v3687 = vpop.f32.mrb[0].mxu0
      %3688 = vmatprep.mubr.bf16.mxu0 0
      %3689 = vmatmul.mubr.bf16.gmra.mrb[0].mxu0 %v3571
      %v3690 = vpop.f32.mrb[0].mxu0
      %v3691 = vadd.f32 0.0, %v3690
      %v3692 = vpop.f32.mrb[0].mxu0
      %v3693 = vpop.f32.mrb[0].mxu0
      %v3694 = vadd.f32 0.0, %v3693
      %v3695 = vpop.f32.mrb[0].mxu0
      %3696 = vmatprep.mubr.bf16.mxu0 0
      %3697 = vmatmul.mubr.bf16.gmra.mrb[0].mxu0 %v3574
      %v3698 = vpop.f32.mrb[0].mxu0
      %v3699 = vadd.f32 0.0, %v3698
      %v3700 = vpop.f32.mrb[0].mxu0
      %v3701 = vpop.f32.mrb[0].mxu0
      %v3702 = vadd.f32 0.0, %v3701
      %v3703 = vpop.f32.mrb[0].mxu0
      %3704 = vmatprep.mubr.bf16.mxu0 0
      %3705 = vmatmul.mubr.bf16.gmra.mrb[0].mxu0 %v3577
      %v3706 = vpop.f32.mrb[0].mxu0
      %v3707 = vadd.f32 0.0, %v3706
      %v3708 = vpop.f32.mrb[0].mxu0
      %v3709 = vpop.f32.mrb[0].mxu0
      %v3710 = vadd.f32 0.0, %v3709
      %v3711 = vpop.f32.mrb[0].mxu0
      %3712 = vmatprep.mubr.bf16.mxu0 0
      %3713 = vmatmul.mubr.bf16.gmra.mrb[0].mxu0 %v3580
      %v3714 = vpop.f32.mrb[0].mxu0
      %v3715 = vadd.f32 0.0, %v3714
      %v3716 = vpop.f32.mrb[0].mxu0
      %v3717 = vpop.f32.mrb[0].mxu0
      %v3718 = vadd.f32 0.0, %v3717
      %v3719 = vpop.f32.mrb[0].mxu0
      %3720 = vmatprep.mubr.bf16.mxu0 0
      %3721 = vmatmul.mubr.bf16.gmra.mrb[0].mxu0 %v3583
      %v3722 = vpop.f32.mrb[0].mxu0
      %v3723 = vadd.f32 0.0, %v3722
      %v3724 = vpop.f32.mrb[0].mxu0
      %v3725 = vpop.f32.mrb[0].mxu0
      %v3726 = vadd.f32 0.0, %v3725
      %v3727 = vpop.f32.mrb[0].mxu0
      %3728 = vmatprep.mubr.bf16.mxu0 0
      %3729 = vmatmul.mubr.bf16.gmra.mrb[0].mxu0 %v3586
      %v3730 = vpop.f32.mrb[0].mxu0
      %v3731 = vadd.f32 0.0, %v3730
      %v3732 = vpop.f32.mrb[0].mxu0
      %v3733 = vpop.f32.mrb[0].mxu0
      %v3734 = vadd.f32 0.0, %v3733
      %v3735 = vpop.f32.mrb[0].mxu0
      %3736 = vmatprep.mubr.bf16.mxu0 0
      %3737 = vmatmul.mubr.bf16.gmra.mrb[0].mxu0 %v3589
      %v3738 = vpop.f32.mrb[0].mxu0
      %v3739 = vadd.f32 0.0, %v3738
      %v3740 = vpop.f32.mrb[0].mxu0
      %v3741 = vpop.f32.mrb[0].mxu0
      %v3742 = vadd.f32 0.0, %v3741
      %v3743 = vpop.f32.mrb[0].mxu0
      %3744 = vmatprep.mubr.bf16.mxu0 0
      %3745 = vmatmul.mubr.bf16.gmra.mrb[0].mxu0 %v3592
      %v3746 = vpop.f32.mrb[0].mxu0
      %v3747 = vadd.f32 0.0, %v3746
      %v3748 = vpop.f32.mrb[0].mxu0
      %v3749 = vpop.f32.mrb[0].mxu0
      %v3750 = vadd.f32 0.0, %v3749
      %v3751 = vpop.f32.mrb[0].mxu0
      %3752 = vmatprep.mubr.bf16.mxu0 0
      %3753 = vmatmul.mubr.bf16.gmra.mrb[0].mxu0 %v3595
      %v3754 = vpop.f32.mrb[0].mxu0
      %v3755 = vadd.f32 0.0, %v3754
      %v3756 = vpop.f32.mrb[0].mxu0
      %v3757 = vpop.f32.mrb[0].mxu0
      %v3758 = vadd.f32 0.0, %v3757
      %v3759 = vpop.f32.mrb[0].mxu0
      %3760 = vdwg.mxu0
      %v3761 = vmul.f32 %v3635, %v1743
      %v3762 = vmul.f32 %v3638, %v1747
      %v3763 = vmul.f32 %v3643, %v1751
      %v3764 = vmul.f32 %v3646, %v1755
      %v3765 = vmul.f32 %v3651, %v1759
      %v3766 = vmul.f32 %v3654, %v1763
      %v3767 = vmul.f32 %v3659, %v1767
      %v3768 = vmul.f32 %v3662, %v1771
      %v3769 = vmul.f32 %v3667, %v1775
      %v3770 = vmul.f32 %v3670, %v1779
      %v3771 = vmul.f32 %v3675, %v1783
      %v3772 = vmul.f32 %v3678, %v1787
      %v3773 = vmul.f32 %v3683, %v1791
      %v3774 = vmul.f32 %v3686, %v1795
      %v3775 = vmul.f32 %v3691, %v1799
      %v3776 = vmul.f32 %v3694, %v1803
      %v3777 = vmul.f32 %v3699, %v1807
      %v3778 = vmul.f32 %v3702, %v1811
      %v3779 = vmul.f32 %v3707, %v1815
      %v3780 = vmul.f32 %v3710, %v1819
      %v3781 = vmul.f32 %v3715, %v1823
      %v3782 = vmul.f32 %v3718, %v1827
      %v3783 = vmul.f32 %v3723, %v1831
      %v3784 = vmul.f32 %v3726, %v1835
      %v3785 = vmul.f32 %v3731, %v1839
      %v3786 = vmul.f32 %v3734, %v1843
      %v3787 = vmul.f32 %v3739, %v1847
      %v3788 = vmul.f32 %v3742, %v1851
      %v3789 = vmul.f32 %v3747, %v1855
      %v3790 = vmul.f32 %v3750, %v1859
      %v3791 = vmul.f32 %v3755, %v1863
      %v3792 = vmul.f32 %v3758, %v1867
      %v3793 = vadd.f32 %v3467, %v3761
      %v3794 = vadd.f32 %v3468, %v3762
      %v3795 = vadd.f32 %v3469, %v3763
      %v3796 = vadd.f32 %v3470, %v3764
      %v3797 = vadd.f32 %v3471, %v3765
      %v3798 = vadd.f32 %v3472, %v3766
      %v3799 = vadd.f32 %v3473, %v3767
      %v3800 = vadd.f32 %v3474, %v3768
      %v3801 = vadd.f32 %v3475, %v3769
      %v3802 = vadd.f32 %v3476, %v3770
      %v3803 = vadd.f32 %v3477, %v3771
      %v3804 = vadd.f32 %v3478, %v3772
      %v3805 = vadd.f32 %v3479, %v3773
      %v3806 = vadd.f32 %v3480, %v3774
      %v3807 = vadd.f32 %v3481, %v3775
      %v3808 = vadd.f32 %v3482, %v3776
      %v3809 = vadd.f32 %v3483, %v3777
      %v3810 = vadd.f32 %v3484, %v3778
      %v3811 = vadd.f32 %v3485, %v3779
      %v3812 = vadd.f32 %v3486, %v3780
      %v3813 = vadd.f32 %v3487, %v3781
      %v3814 = vadd.f32 %v3488, %v3782
      %v3815 = vadd.f32 %v3489, %v3783
      %v3816 = vadd.f32 %v3490, %v3784
      %v3817 = vadd.f32 %v3491, %v3785
      %v3818 = vadd.f32 %v3492, %v3786
      %v3819 = vadd.f32 %v3493, %v3787
      %v3820 = vadd.f32 %v3494, %v3788
      %v3821 = vadd.f32 %v3495, %v3789
      %v3822 = vadd.f32 %v3496, %v3790
      %v3823 = vadd.f32 %v3497, %v3791
      %v3824 = vadd.f32 %v3498, %v3792
      %v3825 = vmax.f32 %v3793, 0.0
      %v3826 = vmax.f32 %v3794, 0.0
      %v3827 = vmax.f32 %v3795, 0.0
      %v3828 = vmax.f32 %v3796, 0.0
      %v3829 = vmax.f32 %v3797, 0.0
      %v3830 = vmax.f32 %v3798, 0.0
      %v3831 = vmax.f32 %v3799, 0.0
      %v3832 = vmax.f32 %v3800, 0.0
      %v3833 = vmax.f32 %v3801, 0.0
      %v3834 = vmax.f32 %v3802, 0.0
      %v3835 = vmax.f32 %v3803, 0.0
      %v3836 = vmax.f32 %v3804, 0.0
      %v3837 = vmax.f32 %v3805, 0.0
      %v3838 = vmax.f32 %v3806, 0.0
      %v3839 = vmax.f32 %v3807, 0.0
      %v3840 = vmax.f32 %v3808, 0.0
      %v3841 = vmax.f32 %v3809, 0.0
      %v3842 = vmax.f32 %v3810, 0.0
      %v3843 = vmax.f32 %v3811, 0.0
      %v3844 = vmax.f32 %v3812, 0.0
      %v3845 = vmax.f32 %v3813, 0.0
      %v3846 = vmax.f32 %v3814, 0.0
      %v3847 = vmax.f32 %v3815, 0.0
      %v3848 = vmax.f32 %v3816, 0.0
      %v3849 = vmax.f32 %v3817, 0.0
      %v3850 = vmax.f32 %v3818, 0.0
      %v3851 = vmax.f32 %v3819, 0.0
      %v3852 = vmax.f32 %v3820, 0.0
      %v3853 = vmax.f32 %v3821, 0.0
      %v3854 = vmax.f32 %v3822, 0.0
      %v3855 = vmax.f32 %v3823, 0.0
      %v3856 = vmax.f32 %v3824, 0.0
      %v3857 = vpack.c.bf16 %v3826, %v3825
      %v3858 = vpack.c.bf16 %v3828, %v3827
      %v3859 = vpack.c.bf16 %v3830, %v3829
      %v3860 = vpack.c.bf16 %v3832, %v3831
      %v3861 = vpack.c.bf16 %v3834, %v3833
      %v3862 = vpack.c.bf16 %v3836, %v3835
      %v3863 = vpack.c.bf16 %v3838, %v3837
      %v3864 = vpack.c.bf16 %v3840, %v3839
      %v3865 = vpack.c.bf16 %v3842, %v3841
      %v3866 = vpack.c.bf16 %v3844, %v3843
      %v3867 = vpack.c.bf16 %v3846, %v3845
      %v3868 = vpack.c.bf16 %v3848, %v3847
      %v3869 = vpack.c.bf16 %v3850, %v3849
      %v3870 = vpack.c.bf16 %v3852, %v3851
      %v3871 = vpack.c.bf16 %v3854, %v3853
      %v3872 = vpack.c.bf16 %v3856, %v3855
      %v3889 = vunpack.c.l.b16 %v3857
      %v3890 = vunpack.c.h.b16 %v3857
      %v3891 = vunpack.c.l.b16 %v3858
      %v3892 = vunpack.c.h.b16 %v3858
      %v3893 = vunpack.c.l.b16 %v3859
      %v3894 = vunpack.c.h.b16 %v3859
      %v3895 = vunpack.c.l.b16 %v3860
      %v3896 = vunpack.c.h.b16 %v3860
      %v3897 = vunpack.c.l.b16 %v3861
      %v3898 = vunpack.c.h.b16 %v3861
      %v3899 = vunpack.c.l.b16 %v3862
      %v3900 = vunpack.c.h.b16 %v3862
      %v3901 = vunpack.c.l.b16 %v3863
      %v3902 = vunpack.c.h.b16 %v3863
      %v3903 = vunpack.c.l.b16 %v3864
      %v3904 = vunpack.c.h.b16 %v3864
      %v3905 = vunpack.c.l.b16 %v3865
      %v3906 = vunpack.c.h.b16 %v3865
      %v3907 = vunpack.c.l.b16 %v3866
      %v3908 = vunpack.c.h.b16 %v3866
      %v3909 = vunpack.c.l.b16 %v3867
      %v3910 = vunpack.c.h.b16 %v3867
      %v3911 = vunpack.c.l.b16 %v3868
      %v3912 = vunpack.c.h.b16 %v3868
      %v3913 = vunpack.c.l.b16 %v3869
      %v3914 = vunpack.c.h.b16 %v3869
      %v3915 = vunpack.c.l.b16 %v3870
      %v3916 = vunpack.c.h.b16 %v3870
      %v3917 = vunpack.c.l.b16 %v3871
      %v3918 = vunpack.c.h.b16 %v3871
      %v3919 = vunpack.c.l.b16 %v3872
      %v3920 = vunpack.c.h.b16 %v3872
      %v3921 = vpack.c.b16 %v3889, %v3889
      %v3922 = vpack.c.b16 %v3890, %v3890
      %v3923 = vpack.c.b16 %v3891, %v3891
      %v3924 = vpack.c.b16 %v3892, %v3892
      %v3925 = vpack.c.b16 %v3893, %v3893
      %v3926 = vpack.c.b16 %v3894, %v3894
      %v3927 = vpack.c.b16 %v3895, %v3895
      %v3928 = vpack.c.b16 %v3896, %v3896
      %v3929 = vpack.c.b16 %v3897, %v3897
      %v3930 = vpack.c.b16 %v3898, %v3898
      %v3931 = vpack.c.b16 %v3899, %v3899
      %v3932 = vpack.c.b16 %v3900, %v3900
      %v3933 = vpack.c.b16 %v3901, %v3901
      %v3934 = vpack.c.b16 %v3902, %v3902
      %v3935 = vpack.c.b16 %v3903, %v3903
      %v3936 = vpack.c.b16 %v3904, %v3904
      %v3937 = vpack.c.b16 %v3905, %v3905
      %v3938 = vpack.c.b16 %v3906, %v3906
      %v3939 = vpack.c.b16 %v3907, %v3907
      %v3940 = vpack.c.b16 %v3908, %v3908
      %v3941 = vpack.c.b16 %v3909, %v3909
      %v3942 = vpack.c.b16 %v3910, %v3910
      %v3943 = vpack.c.b16 %v3911, %v3911
      %v3944 = vpack.c.b16 %v3912, %v3912
      %v3945 = vpack.c.b16 %v3913, %v3913
      %v3946 = vpack.c.b16 %v3914, %v3914
      %v3947 = vpack.c.b16 %v3915, %v3915
      %v3948 = vpack.c.b16 %v3916, %v3916
      %v3949 = vpack.c.b16 %v3917, %v3917
      %v3950 = vpack.c.b16 %v3918, %v3918
      %v3951 = vpack.c.b16 %v3919, %v3919
      %v3952 = vpack.c.b16 %v3920, %v3920
      %vm3985 = vcmask 27648
      %3986 = vst.msk [vmem:[%s251] sm:$0xf] %vm3985, %v3921
      %3987 = vst.msk [vmem:[%s251 + $0x4] sm:$0xf] %vm3985, %v3922
      %3988 = vst.msk [vmem:[%s251 + $0x8] sm:$0xf] %vm3985, %v3923
      %3989 = vst.msk [vmem:[%s251 + $0xc] sm:$0xf] %vm3985, %v3924
      %3990 = vst.msk [vmem:[%s251 + $0x10] sm:$0xf] %vm3985, %v3925
      %3991 = vst.msk [vmem:[%s251 + $0x14] sm:$0xf] %vm3985, %v3926
      %3992 = vst.msk [vmem:[%s251 + $0x18] sm:$0xf] %vm3985, %v3927
      %3993 = vst.msk [vmem:[%s251 + $0x1c] sm:$0xf] %vm3985, %v3928
      %3994 = vst.msk [vmem:[%s251 + $0x20] sm:$0xf] %vm3985, %v3929
      %3995 = vst.msk [vmem:[%s251 + $0x24] sm:$0xf] %vm3985, %v3930
      %3996 = vst.msk [vmem:[%s251 + $0x28] sm:$0xf] %vm3985, %v3931
      %3997 = vst.msk [vmem:[%s251 + $0x2c] sm:$0xf] %vm3985, %v3932
      %3998 = vst.msk [vmem:[%s251 + $0x30] sm:$0xf] %vm3985, %v3933
      %3999 = vst.msk [vmem:[%s251 + $0x34] sm:$0xf] %vm3985, %v3934
      %4000 = vst.msk [vmem:[%s251 + $0x38] sm:$0xf] %vm3985, %v3935
      %4001 = vst.msk [vmem:[%s251 + $0x3c] sm:$0xf] %vm3985, %v3936
      %4002 = vst.msk [vmem:[%s251 + $0x40] sm:$0xf] %vm3985, %v3937
      %4003 = vst.msk [vmem:[%s251 + $0x44] sm:$0xf] %vm3985, %v3938
      %4004 = vst.msk [vmem:[%s251 + $0x48] sm:$0xf] %vm3985, %v3939
      %4005 = vst.msk [vmem:[%s251 + $0x4c] sm:$0xf] %vm3985, %v3940
      %4006 = vst.msk [vmem:[%s251 + $0x50] sm:$0xf] %vm3985, %v3941
      %4007 = vst.msk [vmem:[%s251 + $0x54] sm:$0xf] %vm3985, %v3942
      %4008 = vst.msk [vmem:[%s251 + $0x58] sm:$0xf] %vm3985, %v3943
      %4009 = vst.msk [vmem:[%s251 + $0x5c] sm:$0xf] %vm3985, %v3944
      %4010 = vst.msk [vmem:[%s251 + $0x60] sm:$0xf] %vm3985, %v3945
      %4011 = vst.msk [vmem:[%s251 + $0x64] sm:$0xf] %vm3985, %v3946
      %4012 = vst.msk [vmem:[%s251 + $0x68] sm:$0xf] %vm3985, %v3947
      %4013 = vst.msk [vmem:[%s251 + $0x6c] sm:$0xf] %vm3985, %v3948
      %4014 = vst.msk [vmem:[%s251 + $0x70] sm:$0xf] %vm3985, %v3949
      %4015 = vst.msk [vmem:[%s251 + $0x74] sm:$0xf] %vm3985, %v3950
      %4016 = vst.msk [vmem:[%s251 + $0x78] sm:$0xf] %vm3985, %v3951
      %4017 = vst.msk [vmem:[%s251 + $0x7c] sm:$0xf] %vm3985, %v3952
      %p4018 = scmp.lt.s32.totalorder %s17, 1
      %s4019 = scalar_select %p4018, %s17, 1
      %s4020 = smul.addr %s4019, 32
      %s4021 = smul.addr %s4020, 4
      %s4022 = scalar_lea.vmem %s6, %s4021
      // Predicated region
      $region45: #{bottleneck_cspb_forward.4} parent=43 // pred_check
        %p4023 = pneg %p166
      $region46: #{bottleneck_cspb_forward.4} parent=43 // pred_check_branch
        %4025 = sbr.rel (%p4023) target = $region48
      $region47: #{bottleneck_cspb_forward.4} parent=43 // pred_region
        _
      $region48: #{bottleneck_cspb_forward.4} parent=43 // pred_fallthru
        _
    $region44: #{bottleneck_cspb_forward.4} parent=5 // pred_fallthru
      _
    %p4026 = scmp.le.s32.totalorder 2, %s12
    // Predicated region
    $region49: #{bottleneck_cspb_forward.4} parent=5 // pred_check
      %p4027 = pneg %p4026
    $region50: #{bottleneck_cspb_forward.4} parent=5 // pred_check_branch
      %4029 = sbr.rel (%p4027) target = $region52
    $region51: #{bottleneck_cspb_forward.4} parent=5 // pred_region
      %s4030 = ssub.s32 %s12, 2
      // Predicated region
      $region53: #{bottleneck_cspb_forward.4} parent=51 // pred_check
        %p4031 = pneg %p172
      $region54: #{bottleneck_cspb_forward.4} parent=51 // pred_check_branch
        %4033 = sbr.rel (%p4031) target = $region56
      $region55: #{bottleneck_cspb_forward.4} parent=51 // pred_region
        %p4034 = scmp.lt.s32.totalorder %s18, 1
        %s4035 = scalar_select %p4034, %s18, 1
        %s4036 = smul.addr %s4035, 32
        %s4037 = smul.addr %s4036, 4
        %s4038 = scalar_lea.vmem %s6, %s4037
      $region56: #{bottleneck_cspb_forward.4} parent=51 // pred_fallthru
        _
    $region52: #{bottleneck_cspb_forward.4} parent=5 // pred_fallthru
      _
  $region6: #{bottleneck_cspb_forward.4} parent=0 // loop_footer
    %s16 = sadd.s32 1, %s12
  $region7: #{bottleneck_cspb_forward.4} parent=0 // loop_footer_branch
    %11 = sbr.rel target = $region3
  $region8: #{bottleneck_cspb_forward.4} parent=0 // loop_exit
    _

</llo_original>
